<compile_context>
chip_gen: v7x
topology: tpu7x:2x2x1
jax: 0.10.0
libtpu: 0.0.40
codegen_flags: <defaults>
</compile_context>

<pallas_src>
import jax
import jax.numpy as jnp
from jax.experimental import pallas as pl
from jax.experimental.pallas import tpu as pltpu


def _round_up(n, m):
    return ((n + m - 1) // m) * m


# ----------------------------- Pallas kernels ------------------------------ #

def _conv_pool_kernel(w_ref, b_ref, c_ref, o_ref):
    """Fused conv(+bias)+ReLU+MaxPool2d(2,2) on one column tile.

    w: (Cout, K) bf16; b: (Cout, 1) f32; c: (4, K, TN) bf16 (stacked 2x2 pool
    corners).  o: (Cout, TN) bf16 where TN indexes (b, hp, wp) of the POOLED
    output.  ReLU/bias commute with the max, so the pre-pool activation never
    exists outside vregs.
    """
    w = w_ref[...]
    s = jnp.dot(w, c_ref[0], preferred_element_type=jnp.float32)
    s = jnp.maximum(s, jnp.dot(w, c_ref[1], preferred_element_type=jnp.float32))
    s = jnp.maximum(s, jnp.dot(w, c_ref[2], preferred_element_type=jnp.float32))
    s = jnp.maximum(s, jnp.dot(w, c_ref[3], preferred_element_type=jnp.float32))
    s = jnp.maximum(s + b_ref[...], 0.0)          # bias + ReLU (after the max)
    o_ref[...] = s.astype(o_ref.dtype)


def _mlp3_kernel(x_ref, w3_ref, b3_ref, w4_ref, b4_ref, w5_ref, b5_ref, o_ref):
    """Fused 3-layer classifier on one batch tile; flatten folded into layer 1.

    x: (C2, TM, HW) bf16 -- conv2 output in CNHW order (no XLA transpose).
    w3: (C2, HW, 128) bf16 (row-permuted, zero-padded fc1 weight),
    w4/w5: (128, 128) bf16, biases (1, 128) f32.  o: (TM, 128) f32; the valid
    classes live in [:, :num_classes].
    """
    c2 = x_ref.shape[0]
    h = jnp.dot(x_ref[0], w3_ref[0], preferred_element_type=jnp.float32)
    for c in range(1, c2):                         # static loop over channels
        h = h + jnp.dot(x_ref[c], w3_ref[c], preferred_element_type=jnp.float32)
    h = jnp.maximum(h + b3_ref[...], 0.0)
    h = jnp.dot(h.astype(jnp.bfloat16), w4_ref[...],
                preferred_element_type=jnp.float32)
    h = jnp.maximum(h + b4_ref[...], 0.0)
    h = jnp.dot(h.astype(jnp.bfloat16), w5_ref[...],
                preferred_element_type=jnp.float32)
    o_ref[...] = (h + b5_ref[...]).astype(o_ref.dtype)


# ------------------------------ Pallas wrappers ---------------------------- #

_TN = 1024   # conv column tile upper bound (lane-dense, multiple of 128)
_TM = 512    # classifier batch tile


def _conv_pool_matmul(w_mat, b_col, cols):
    """(Cout, K) @ stacked (4, K, N) corners, running max, +bias, ReLU.

    Returns (Cout, N) bf16.  N is always padded to a multiple of 128 and, when
    possible, tiled into >= 2 tiles so the parallel axis spans both v7x cores.
    """
    Cout, K = w_mat.shape
    N = cols.shape[2]

    n128 = _round_up(N, 128)
    tn = min(_TN, max(128, (n128 // 2) // 128 * 128))   # >=2 tiles when N>=256
    Np = _round_up(N, tn)
    if Np != N:
        cols = jnp.pad(cols, ((0, 0), (0, 0), (0, Np - N)))
    grid_n = Np // tn

    out = pl.pallas_call(
        _conv_pool_kernel,
        grid=(grid_n,),
        in_specs=[
            pl.BlockSpec((Cout, K), lambda j: (0, 0)),      # W resident
            pl.BlockSpec((Cout, 1), lambda j: (0, 0)),      # bias resident
            pl.BlockSpec((4, K, tn), lambda j: (0, 0, j)),  # stacked corners
        ],
        out_specs=pl.BlockSpec((Cout, tn), lambda j: (0, j)),
        out_shape=jax.ShapeDtypeStruct((Cout, Np), jnp.bfloat16),
        compiler_params=pltpu.CompilerParams(
            dimension_semantics=("parallel",)),
    )(w_mat, b_col, cols)
    return out[:, :N] if Np != N else out


def mlp3(x3, w3, b3, w4, b4, w5, b5, num_classes):
    """Fused classifier.  x3: (C2, B, HW) bf16 -> (B, num_classes) f32."""
    C2, B, HW = x3.shape
    M = w5.shape[1]                                   # padded class dim (128)
    if B <= _TM:
        tm, Bp = B, B
    else:
        tm = _TM
        Bp = _round_up(B, _TM)
        if Bp != B:
            x3 = jnp.pad(x3, ((0, 0), (0, Bp - B), (0, 0)))
    grid_m = Bp // tm

    def full(arr):
        nd = arr.ndim
        return pl.BlockSpec(arr.shape, lambda i, _nd=nd: (0,) * _nd)

    out = pl.pallas_call(
        _mlp3_kernel,
        grid=(grid_m,),
        in_specs=[
            pl.BlockSpec((C2, tm, HW), lambda i: (0, i, 0)),
            full(w3), full(b3), full(w4), full(b4), full(w5), full(b5),
        ],
        out_specs=pl.BlockSpec((tm, M), lambda i: (i, 0)),
        out_shape=jax.ShapeDtypeStruct((Bp, M), jnp.float32),
        compiler_params=pltpu.CompilerParams(
            dimension_semantics=("parallel",)),
    )(x3, w3, b3, w4, b4, w5, b5)
    out = out[:, :num_classes]
    return out[:B] if Bp != B else out


# ------------------------------- JAX glue ---------------------------------- #

def _im2col_pooled_corners(x, k, pad, k_pad):
    """x: (C, B, H, W).  Returns stacked corner im2col (4, k_pad, B*Hp*Wp) bf16
    (zero rows appended up to k_pad) plus pooled (Hp, Wp).

    Row order is (c, i, j) to match weight.reshape(Cout, C*k*k); column order
    is (b, hp, wp); the 4 leading slots are the 2x2 pool-window corners.
    """
    if pad:
        x = jnp.pad(x, ((0, 0), (0, 0), (pad, pad), (pad, pad)))
    C, B, H, W = x.shape
    Ho, Wo = H - k + 1, W - k + 1
    Hp, Wp = Ho // 2, Wo // 2
    x = x.astype(jnp.bfloat16)
    corners = []
    for dh in range(2):
        for dw in range(2):
            patches = []
            for i in range(k):
                for j in range(k):
                    patches.append(
                        x[:, :,
                          dh + i: dh + i + 2 * Hp: 2,
                          dw + j: dw + j + 2 * Wp: 2])     # (C, B, Hp, Wp)
            p = jnp.stack(patches, axis=1)                  # (C, k*k, B, Hp, Wp)
            corners.append(p.reshape(C * k * k, B * Hp * Wp))
    cols = jnp.stack(corners, axis=0)                       # (4, K, N)
    K = C * k * k
    if k_pad > K:
        cols = jnp.pad(cols, ((0, 0), (0, k_pad - K), (0, 0)))
    return cols, Hp, Wp


def conv_relu_pool(x_cnhw, w_mat, b_col, *, k, padding):
    """Fused Conv2d(k, padding) + ReLU + MaxPool2d(2,2).

    x_cnhw: (C, B, H, W); w_mat: (Cout, K_pad) bf16; b_col: (Cout, 1) f32.
    Returns (Cout, B, Hp, Wp) bf16 (CNHW layout of the pooled activation).
    """
    B = x_cnhw.shape[1]
    Cout, K_pad = w_mat.shape
    cols, Hp, Wp = _im2col_pooled_corners(x_cnhw, k, padding, K_pad)
    out = _conv_pool_matmul(w_mat, b_col, cols)             # (Cout, B*Hp*Wp)
    return out.reshape(Cout, B, Hp, Wp)


# ------------------------------ LeNet params -------------------------------- #

def init_params(key, channel=3, num_classes=10):
    """PyTorch-style uniform(-1/sqrt(fan_in), 1/sqrt(fan_in)) init, f32, in the
    original nn.Module layouts."""
    def uni(key, shape, fan_in):
        bound = 1.0 / jnp.sqrt(fan_in)
        return jax.random.uniform(key, shape, jnp.float32, -bound, bound)

    ks = jax.random.split(key, 10)
    p = {}
    p["w1"] = uni(ks[0], (6, channel, 5, 5), channel * 25)
    p["b1"] = uni(ks[1], (6,), channel * 25)
    p["w2"] = uni(ks[2], (16, 6, 5, 5), 6 * 25)
    p["b2"] = uni(ks[3], (16,), 6 * 25)
    p["w3"] = uni(ks[4], (120, 16 * 6 * 6), 16 * 6 * 6)
    p["b3"] = uni(ks[5], (120,), 16 * 6 * 6)
    p["w4"] = uni(ks[6], (84, 120), 120)
    p["b4"] = uni(ks[7], (84,), 120)
    p["w5"] = uni(ks[8], (num_classes, 84), 84)
    p["b5"] = uni(ks[9], (84,), 84)[:0]  # placeholder, replaced below
    p["b5"] = uni(ks[9], (num_classes,), 84)
    return p


def prepare_params(p, channel=3, num_classes=10):
    """One-time (outside the jitted forward) conversion to kernel-friendly,
    alignment-padded layouts.  All zero-padding is numerically inert."""
    f32, bf16 = jnp.float32, jnp.bfloat16
    prep = {}

    # conv1: (6, C, 5, 5) -> (8, K1) with Cout 6->8 and K C*25 -> round_up(.,16)
    k1_raw = channel * 25
    k1 = _round_up(k1_raw, 16)
    w1 = p["w1"].reshape(6, k1_raw)
    prep["w1"] = jnp.pad(w1, ((0, 2), (0, k1 - k1_raw))).astype(bf16)   # (8, k1)
    prep["b1"] = jnp.pad(p["b1"], (0, 2)).reshape(-1, 1).astype(f32)    # (8, 1)

    # conv2: (16, 6, 5, 5) -> input channels padded to 8 (matches conv1 output),
    # K 200 -> 208.
    w2 = jnp.pad(p["w2"].reshape(16, 6, 25), ((0, 0), (0, 2), (0, 0)))
    w2 = w2.reshape(16, 200)
    k2 = _round_up(200, 16)
    prep["w2"] = jnp.pad(w2, ((0, 0), (0, k2 - 200))).astype(bf16)      # (16, 208)
    prep["b2"] = p["b2"].reshape(-1, 1).astype(f32)                     # (16, 1)

    # fc1: (120, 576) -> channel-major (16, 36, 128) matching conv2's CNHW output.
    w3 = p["w3"].reshape(120, 16, 36).transpose(1, 2, 0)                # (16, 36, 120)
    prep["w3"] = jnp.pad(w3, ((0, 0), (0, 0), (0, 8))).astype(bf16)     # (16, 36, 128)
    prep["b3"] = jnp.pad(p["b3"], (0, 8)).reshape(1, -1).astype(f32)    # (1, 128)

    # fc2: (84, 120) -> (128, 128); fc3: (C, 84) -> (128, ncp)
    ncp = _round_up(max(num_classes, 128), 128)
    prep["w4"] = jnp.pad(p["w4"].T, ((0, 8), (0, 44))).astype(bf16)     # (128, 128)
    prep["b4"] = jnp.pad(p["b4"], (0, 44)).reshape(1, -1).astype(f32)   # (1, 128)
    prep["w5"] = jnp.pad(p["w5"].T,
                         ((0, 44), (0, ncp - num_classes))).astype(bf16)  # (128, ncp)
    prep["b5"] = jnp.pad(p["b5"], (0, ncp - num_classes)).reshape(1, -1).astype(f32)
    return prep


# ------------------------------ LeNet forward ------------------------------ #

def lenet_forward(prep, x, num_classes=10):
    """x: (B, C, 32, 32) NCHW f32 (PyTorch convention) -> (B, num_classes) f32."""
    xc = jnp.transpose(x, (1, 0, 2, 3))                                # CNHW
    h = conv_relu_pool(xc, prep["w1"], prep["b1"], k=5, padding=2)     # (8, B, 16, 16)
    h = conv_relu_pool(h, prep["w2"], prep["b2"], k=5, padding=0)      # (16, B, 6, 6)
    C2, B, Hp, Wp = h.shape
    x3 = h.reshape(C2, B, Hp * Wp)        # pure reshape; flatten happens in-kernel
    return mlp3(x3, prep["w3"], prep["b3"], prep["w4"], prep["b4"],
                prep["w5"], prep["b5"], num_classes)                   # (B, C) f32


if __name__ == "__main__":
    key = jax.random.PRNGKey(0)
    k_param, k_x = jax.random.split(key)
    # LeNet's classifier expects 16*6*6 flattened features -> input must be 32x32.
    x = jax.random.normal(k_x, (2, 3, 32, 32), dtype=jnp.float32)
    params = init_params(k_param, channel=3, num_classes=10)
    prep = prepare_params(params, channel=3, num_classes=10)

    out = jax.jit(lenet_forward)(prep, x)
    out = jax.block_until_ready(out)
    assert out.shape == (2, 10) and out.dtype == jnp.float32
    print("KERNEL_OK")
</pallas_src>

<mosaic_0001>
module attributes {stable_mosaic.version = 11 : i64} {
  func.func @_conv_pool_kernel(%arg0: i32, %arg1: memref<8x80xbf16, #tpu.memory_space<vmem>>, %arg2: memref<8x1xf32, #tpu.memory_space<vmem>>, %arg3: memref<4x80x256xbf16, #tpu.memory_space<vmem>>, %arg4: memref<8x256xbf16, #tpu.memory_space<vmem>>) attributes {dimension_semantics = [#tpu.dimension_semantics<parallel>], iteration_bounds = array<i64: 2>, scalar_prefetch = 0 : i64, scratch_operands = 0 : i64, tpu.core_type = #tpu.core_type<tc>, window_params = [{pipeline_mode = #tpu.pipeline_mode<synchronous>, transform_indices = @transform_0, window_bounds = array<i64: 8, 80>}, {pipeline_mode = #tpu.pipeline_mode<synchronous>, transform_indices = @transform_1, window_bounds = array<i64: 8, 1>}, {transform_indices = @transform_2, window_bounds = array<i64: 4, 80, 256>}, {transform_indices = @transform_3, window_bounds = array<i64: 8, 256>}]} {
    %c0 = arith.constant 0 : index
    %c0_0 = arith.constant 0 : index
    %0 = vector.load %arg1[%c0, %c0_0] : memref<8x80xbf16, #tpu.memory_space<vmem>>, vector<8x80xbf16>
    %c0_1 = arith.constant 0 : index
    %c0_2 = arith.constant 0 : index
    %c0_3 = arith.constant 0 : index
    %1 = vector.load %arg3[%c0_1, %c0_2, %c0_3] : memref<4x80x256xbf16, #tpu.memory_space<vmem>>, vector<1x80x256xbf16>
    %2 = vector.shape_cast %1 : vector<1x80x256xbf16> to vector<80x256xbf16>
    %cst = arith.constant dense<0.000000e+00> : vector<8x256xf32>
    %3 = tpu.matmul %0, %2, %cst {dimension_numbers = #tpu.dot_dimension_numbers<[1], [0], [0], [1], [0, 0, 1, 1], [], []>} : vector<8x80xbf16>, vector<80x256xbf16>, vector<8x256xf32> -> vector<8x256xf32>
    %c1 = arith.constant 1 : index
    %c0_4 = arith.constant 0 : index
    %c0_5 = arith.constant 0 : index
    %4 = vector.load %arg3[%c1, %c0_4, %c0_5] : memref<4x80x256xbf16, #tpu.memory_space<vmem>>, vector<1x80x256xbf16>
    %5 = vector.shape_cast %4 : vector<1x80x256xbf16> to vector<80x256xbf16>
    %cst_6 = arith.constant dense<0.000000e+00> : vector<8x256xf32>
    %6 = tpu.matmul %0, %5, %cst_6 {dimension_numbers = #tpu.dot_dimension_numbers<[1], [0], [0], [1], [0, 0, 1, 1], [], []>} : vector<8x80xbf16>, vector<80x256xbf16>, vector<8x256xf32> -> vector<8x256xf32>
    %7 = arith.maximumf %3, %6 : vector<8x256xf32>
    %c2 = arith.constant 2 : index
    %c0_7 = arith.constant 0 : index
    %c0_8 = arith.constant 0 : index
    %8 = vector.load %arg3[%c2, %c0_7, %c0_8] : memref<4x80x256xbf16, #tpu.memory_space<vmem>>, vector<1x80x256xbf16>
    %9 = vector.shape_cast %8 : vector<1x80x256xbf16> to vector<80x256xbf16>
    %cst_9 = arith.constant dense<0.000000e+00> : vector<8x256xf32>
    %10 = tpu.matmul %0, %9, %cst_9 {dimension_numbers = #tpu.dot_dimension_numbers<[1], [0], [0], [1], [0, 0, 1, 1], [], []>} : vector<8x80xbf16>, vector<80x256xbf16>, vector<8x256xf32> -> vector<8x256xf32>
    %11 = arith.maximumf %7, %10 : vector<8x256xf32>
    %c3 = arith.constant 3 : index
    %c0_10 = arith.constant 0 : index
    %c0_11 = arith.constant 0 : index
    %12 = vector.load %arg3[%c3, %c0_10, %c0_11] : memref<4x80x256xbf16, #tpu.memory_space<vmem>>, vector<1x80x256xbf16>
    %13 = vector.shape_cast %12 : vector<1x80x256xbf16> to vector<80x256xbf16>
    %cst_12 = arith.constant dense<0.000000e+00> : vector<8x256xf32>
    %14 = tpu.matmul %0, %13, %cst_12 {dimension_numbers = #tpu.dot_dimension_numbers<[1], [0], [0], [1], [0, 0, 1, 1], [], []>} : vector<8x80xbf16>, vector<80x256xbf16>, vector<8x256xf32> -> vector<8x256xf32>
    %15 = arith.maximumf %11, %14 : vector<8x256xf32>
    %c0_13 = arith.constant 0 : index
    %c0_14 = arith.constant 0 : index
    %16 = vector.load %arg2[%c0_13, %c0_14] : memref<8x1xf32, #tpu.memory_space<vmem>>, vector<8x1xf32>
    %17 = vector.broadcast %16 : vector<8x1xf32> to vector<8x256xf32>
    %18 = arith.addf %15, %17 : vector<8x256xf32>
    %cst_15 = arith.constant 0.000000e+00 : f32
    %19 = vector.broadcast %cst_15 : f32 to vector<8x256xf32>
    %20 = arith.maximumf %18, %19 : vector<8x256xf32>
    %21 = arith.truncf %20 : vector<8x256xf32> to vector<8x256xbf16>
    %c0_16 = arith.constant 0 : index
    %c0_17 = arith.constant 0 : index
    %22 = vector.load %arg4[%c0_16, %c0_17] : memref<8x256xbf16, #tpu.memory_space<vmem>>, vector<8x256xbf16>
    tpu.vector_store %arg4[%c0_16, %c0_17], %21 {strides = array<i32>} : memref<8x256xbf16, #tpu.memory_space<vmem>>, vector<8x256xbf16>,
    return
  }
  func.func @transform_0(%arg0: i32) -> (i32, i32) {
    %c0_i32 = arith.constant 0 : i32
    %c0_i32_0 = arith.constant 0 : i32
    %c0_i32_1 = arith.constant 0 : i32
    return %c0_i32, %c0_i32_0 : i32, i32
  }
  func.func @transform_1(%arg0: i32) -> (i32, i32) {
    %c0_i32 = arith.constant 0 : i32
    %c0_i32_0 = arith.constant 0 : i32
    %c0_i32_1 = arith.constant 0 : i32
    return %c0_i32, %c0_i32_0 : i32, i32
  }
  func.func @transform_2(%arg0: i32) -> (i32, i32, i32) {
    %c0_i32 = arith.constant 0 : i32
    %c0_i32_0 = arith.constant 0 : i32
    %c0_i32_1 = arith.constant 0 : i32
    return %c0_i32, %c0_i32_0, %arg0 : i32, i32, i32
  }
  func.func @transform_3(%arg0: i32) -> (i32, i32) {
    %c0_i32 = arith.constant 0 : i32
    %c0_i32_0 = arith.constant 0 : i32
    return %c0_i32, %arg0 : i32, i32
  }
}

module attributes {stable_mosaic.version = 11 : i64} {
  func.func @_conv_pool_kernel(%arg0: i32, %arg1: memref<16x208xbf16, #tpu.memory_space<vmem>>, %arg2: memref<16x1xf32, #tpu.memory_space<vmem>>, %arg3: memref<4x208x128xbf16, #tpu.memory_space<vmem>>, %arg4: memref<16x128xbf16, #tpu.memory_space<vmem>>) attributes {dimension_semantics = [#tpu.dimension_semantics<parallel>], iteration_bounds = array<i64: 1>, scalar_prefetch = 0 : i64, scratch_operands = 0 : i64, tpu.core_type = #tpu.core_type<tc>, window_params = [{pipeline_mode = #tpu.pipeline_mode<synchronous>, transform_indices = @transform_0, window_bounds = array<i64: 16, 208>}, {pipeline_mode = #tpu.pipeline_mode<synchronous>, transform_indices = @transform_1, window_bounds = array<i64: 16, 1>}, {transform_indices = @transform_2, window_bounds = array<i64: 4, 208, 128>}, {transform_indices = @transform_3, window_bounds = array<i64: 16, 128>}]} {
    %c0 = arith.constant 0 : index
    %c0_0 = arith.constant 0 : index
    %0 = vector.load %arg1[%c0, %c0_0] : memref<16x208xbf16, #tpu.memory_space<vmem>>, vector<16x208xbf16>
    %c0_1 = arith.constant 0 : index
    %c0_2 = arith.constant 0 : index
    %c0_3 = arith.constant 0 : index
    %1 = vector.load %arg3[%c0_1, %c0_2, %c0_3] : memref<4x208x128xbf16, #tpu.memory_space<vmem>>, vector<1x208x128xbf16>
    %2 = vector.shape_cast %1 : vector<1x208x128xbf16> to vector<208x128xbf16>
    %cst = arith.constant dense<0.000000e+00> : vector<16x128xf32>
    %3 = tpu.matmul %0, %2, %cst {dimension_numbers = #tpu.dot_dimension_numbers<[1], [0], [0], [1], [0, 0, 1, 1], [], []>} : vector<16x208xbf16>, vector<208x128xbf16>, vector<16x128xf32> -> vector<16x128xf32>
    %c1 = arith.constant 1 : index
    %c0_4 = arith.constant 0 : index
    %c0_5 = arith.constant 0 : index
    %4 = vector.load %arg3[%c1, %c0_4, %c0_5] : memref<4x208x128xbf16, #tpu.memory_space<vmem>>, vector<1x208x128xbf16>
    %5 = vector.shape_cast %4 : vector<1x208x128xbf16> to vector<208x128xbf16>
    %cst_6 = arith.constant dense<0.000000e+00> : vector<16x128xf32>
    %6 = tpu.matmul %0, %5, %cst_6 {dimension_numbers = #tpu.dot_dimension_numbers<[1], [0], [0], [1], [0, 0, 1, 1], [], []>} : vector<16x208xbf16>, vector<208x128xbf16>, vector<16x128xf32> -> vector<16x128xf32>
    %7 = arith.maximumf %3, %6 : vector<16x128xf32>
    %c2 = arith.constant 2 : index
    %c0_7 = arith.constant 0 : index
    %c0_8 = arith.constant 0 : index
    %8 = vector.load %arg3[%c2, %c0_7, %c0_8] : memref<4x208x128xbf16, #tpu.memory_space<vmem>>, vector<1x208x128xbf16>
    %9 = vector.shape_cast %8 : vector<1x208x128xbf16> to vector<208x128xbf16>
    %cst_9 = arith.constant dense<0.000000e+00> : vector<16x128xf32>
    %10 = tpu.matmul %0, %9, %cst_9 {dimension_numbers = #tpu.dot_dimension_numbers<[1], [0], [0], [1], [0, 0, 1, 1], [], []>} : vector<16x208xbf16>, vector<208x128xbf16>, vector<16x128xf32> -> vector<16x128xf32>
    %11 = arith.maximumf %7, %10 : vector<16x128xf32>
    %c3 = arith.constant 3 : index
    %c0_10 = arith.constant 0 : index
    %c0_11 = arith.constant 0 : index
    %12 = vector.load %arg3[%c3, %c0_10, %c0_11] : memref<4x208x128xbf16, #tpu.memory_space<vmem>>, vector<1x208x128xbf16>
    %13 = vector.shape_cast %12 : vector<1x208x128xbf16> to vector<208x128xbf16>
    %cst_12 = arith.constant dense<0.000000e+00> : vector<16x128xf32>
    %14 = tpu.matmul %0, %13, %cst_12 {dimension_numbers = #tpu.dot_dimension_numbers<[1], [0], [0], [1], [0, 0, 1, 1], [], []>} : vector<16x208xbf16>, vector<208x128xbf16>, vector<16x128xf32> -> vector<16x128xf32>
    %15 = arith.maximumf %11, %14 : vector<16x128xf32>
    %c0_13 = arith.constant 0 : index
    %c0_14 = arith.constant 0 : index
    %16 = vector.load %arg2[%c0_13, %c0_14] : memref<16x1xf32, #tpu.memory_space<vmem>>, vector<16x1xf32>
    %17 = vector.broadcast %16 : vector<16x1xf32> to vector<16x128xf32>
    %18 = arith.addf %15, %17 : vector<16x128xf32>
    %cst_15 = arith.constant 0.000000e+00 : f32
    %19 = vector.broadcast %cst_15 : f32 to vector<16x128xf32>
    %20 = arith.maximumf %18, %19 : vector<16x128xf32>
    %21 = arith.truncf %20 : vector<16x128xf32> to vector<16x128xbf16>
    %c0_16 = arith.constant 0 : index
    %c0_17 = arith.constant 0 : index
    %22 = vector.load %arg4[%c0_16, %c0_17] : memref<16x128xbf16, #tpu.memory_space<vmem>>, vector<16x128xbf16>
    tpu.vector_store %arg4[%c0_16, %c0_17], %21 {strides = array<i32>} : memref<16x128xbf16, #tpu.memory_space<vmem>>, vector<16x128xbf16>,
    return
  }
  func.func @transform_0(%arg0: i32) -> (i32, i32) {
    %c0_i32 = arith.constant 0 : i32
    %c0_i32_0 = arith.constant 0 : i32
    %c0_i32_1 = arith.constant 0 : i32
    return %c0_i32, %c0_i32_0 : i32, i32
  }
  func.func @transform_1(%arg0: i32) -> (i32, i32) {
    %c0_i32 = arith.constant 0 : i32
    %c0_i32_0 = arith.constant 0 : i32
    %c0_i32_1 = arith.constant 0 : i32
    return %c0_i32, %c0_i32_0 : i32, i32
  }
  func.func @transform_2(%arg0: i32) -> (i32, i32, i32) {
    %c0_i32 = arith.constant 0 : i32
    %c0_i32_0 = arith.constant 0 : i32
    %c0_i32_1 = arith.constant 0 : i32
    return %c0_i32, %c0_i32_0, %arg0 : i32, i32, i32
  }
  func.func @transform_3(%arg0: i32) -> (i32, i32) {
    %c0_i32 = arith.constant 0 : i32
    %c0_i32_0 = arith.constant 0 : i32
    return %c0_i32, %arg0 : i32, i32
  }
}

module attributes {stable_mosaic.version = 11 : i64} {
  func.func @_mlp3_kernel(%arg0: i32, %arg1: memref<16x2x36xbf16, #tpu.memory_space<vmem>>, %arg2: memref<16x36x128xbf16, #tpu.memory_space<vmem>>, %arg3: memref<1x128xf32, #tpu.memory_space<vmem>>, %arg4: memref<128x128xbf16, #tpu.memory_space<vmem>>, %arg5: memref<1x128xf32, #tpu.memory_space<vmem>>, %arg6: memref<128x128xbf16, #tpu.memory_space<vmem>>, %arg7: memref<1x128xf32, #tpu.memory_space<vmem>>, %arg8: memref<2x128xf32, #tpu.memory_space<vmem>>) attributes {dimension_semantics = [#tpu.dimension_semantics<parallel>], iteration_bounds = array<i64: 1>, scalar_prefetch = 0 : i64, scratch_operands = 0 : i64, tpu.core_type = #tpu.core_type<tc>, window_params = [{transform_indices = @transform_0, window_bounds = array<i64: 16, 2, 36>}, {pipeline_mode = #tpu.pipeline_mode<synchronous>, transform_indices = @transform_1, window_bounds = array<i64: 16, 36, 128>}, {pipeline_mode = #tpu.pipeline_mode<synchronous>, transform_indices = @transform_2, window_bounds = array<i64: 1, 128>}, {pipeline_mode = #tpu.pipeline_mode<synchronous>, transform_indices = @transform_3, window_bounds = array<i64: 128, 128>}, {pipeline_mode = #tpu.pipeline_mode<synchronous>, transform_indices = @transform_4, window_bounds = array<i64: 1, 128>}, {pipeline_mode = #tpu.pipeline_mode<synchronous>, transform_indices = @transform_5, window_bounds = array<i64: 128, 128>}, {pipeline_mode = #tpu.pipeline_mode<synchronous>, transform_indices = @transform_6, window_bounds = array<i64: 1, 128>}, {transform_indices = @transform_7, window_bounds = array<i64: 2, 128>}]} {
    %c0 = arith.constant 0 : index
    %c0_0 = arith.constant 0 : index
    %c0_1 = arith.constant 0 : index
    %0 = vector.load %arg1[%c0, %c0_0, %c0_1] : memref<16x2x36xbf16, #tpu.memory_space<vmem>>, vector<1x2x36xbf16>
    %1 = vector.shape_cast %0 : vector<1x2x36xbf16> to vector<2x36xbf16>
    %c0_2 = arith.constant 0 : index
    %c0_3 = arith.constant 0 : index
    %c0_4 = arith.constant 0 : index
    %2 = vector.load %arg2[%c0_2, %c0_3, %c0_4] : memref<16x36x128xbf16, #tpu.memory_space<vmem>>, vector<1x36x128xbf16>
    %3 = vector.shape_cast %2 : vector<1x36x128xbf16> to vector<36x128xbf16>
    %cst = arith.constant dense<0.000000e+00> : vector<2x128xf32>
    %4 = tpu.matmul %1, %3, %cst {dimension_numbers = #tpu.dot_dimension_numbers<[1], [0], [0], [1], [0, 0, 1, 1], [], []>} : vector<2x36xbf16>, vector<36x128xbf16>, vector<2x128xf32> -> vector<2x128xf32>
    %c1 = arith.constant 1 : index
    %c0_5 = arith.constant 0 : index
    %c0_6 = arith.constant 0 : index
    %5 = vector.load %arg1[%c1, %c0_5, %c0_6] : memref<16x2x36xbf16, #tpu.memory_space<vmem>>, vector<1x2x36xbf16>
    %6 = vector.shape_cast %5 : vector<1x2x36xbf16> to vector<2x36xbf16>
    %c1_7 = arith.constant 1 : index
    %c0_8 = arith.constant 0 : index
    %c0_9 = arith.constant 0 : index
    %7 = vector.load %arg2[%c1_7, %c0_8, %c0_9] : memref<16x36x128xbf16, #tpu.memory_space<vmem>>, vector<1x36x128xbf16>
    %8 = vector.shape_cast %7 : vector<1x36x128xbf16> to vector<36x128xbf16>
    %cst_10 = arith.constant dense<0.000000e+00> : vector<2x128xf32>
    %9 = tpu.matmul %6, %8, %cst_10 {dimension_numbers = #tpu.dot_dimension_numbers<[1], [0], [0], [1], [0, 0, 1, 1], [], []>} : vector<2x36xbf16>, vector<36x128xbf16>, vector<2x128xf32> -> vector<2x128xf32>
    %10 = arith.addf %4, %9 : vector<2x128xf32>
    %c2 = arith.constant 2 : index
    %c0_11 = arith.constant 0 : index
    %c0_12 = arith.constant 0 : index
    %11 = vector.load %arg1[%c2, %c0_11, %c0_12] : memref<16x2x36xbf16, #tpu.memory_space<vmem>>, vector<1x2x36xbf16>
    %12 = vector.shape_cast %11 : vector<1x2x36xbf16> to vector<2x36xbf16>
    %c2_13 = arith.constant 2 : index
    %c0_14 = arith.constant 0 : index
    %c0_15 = arith.constant 0 : index
    %13 = vector.load %arg2[%c2_13, %c0_14, %c0_15] : memref<16x36x128xbf16, #tpu.memory_space<vmem>>, vector<1x36x128xbf16>
    %14 = vector.shape_cast %13 : vector<1x36x128xbf16> to vector<36x128xbf16>
    %cst_16 = arith.constant dense<0.000000e+00> : vector<2x128xf32>
    %15 = tpu.matmul %12, %14, %cst_16 {dimension_numbers = #tpu.dot_dimension_numbers<[1], [0], [0], [1], [0, 0, 1, 1], [], []>} : vector<2x36xbf16>, vector<36x128xbf16>, vector<2x128xf32> -> vector<2x128xf32>
    %16 = arith.addf %10, %15 : vector<2x128xf32>
    %c3 = arith.constant 3 : index
    %c0_17 = arith.constant 0 : index
    %c0_18 = arith.constant 0 : index
    %17 = vector.load %arg1[%c3, %c0_17, %c0_18] : memref<16x2x36xbf16, #tpu.memory_space<vmem>>, vector<1x2x36xbf16>
    %18 = vector.shape_cast %17 : vector<1x2x36xbf16> to vector<2x36xbf16>
    %c3_19 = arith.constant 3 : index
    %c0_20 = arith.constant 0 : index
    %c0_21 = arith.constant 0 : index
    %19 = vector.load %arg2[%c3_19, %c0_20, %c0_21] : memref<16x36x128xbf16, #tpu.memory_space<vmem>>, vector<1x36x128xbf16>
    %20 = vector.shape_cast %19 : vector<1x36x128xbf16> to vector<36x128xbf16>
    %cst_22 = arith.constant dense<0.000000e+00> : vector<2x128xf32>
    %21 = tpu.matmul %18, %20, %cst_22 {dimension_numbers = #tpu.dot_dimension_numbers<[1], [0], [0], [1], [0, 0, 1, 1], [], []>} : vector<2x36xbf16>, vector<36x128xbf16>, vector<2x128xf32> -> vector<2x128xf32>
    %22 = arith.addf %16, %21 : vector<2x128xf32>
    %c4 = arith.constant 4 : index
    %c0_23 = arith.constant 0 : index
    %c0_24 = arith.constant 0 : index
    %23 = vector.load %arg1[%c4, %c0_23, %c0_24] : memref<16x2x36xbf16, #tpu.memory_space<vmem>>, vector<1x2x36xbf16>
    %24 = vector.shape_cast %23 : vector<1x2x36xbf16> to vector<2x36xbf16>
    %c4_25 = arith.constant 4 : index
    %c0_26 = arith.constant 0 : index
    %c0_27 = arith.constant 0 : index
    %25 = vector.load %arg2[%c4_25, %c0_26, %c0_27] : memref<16x36x128xbf16, #tpu.memory_space<vmem>>, vector<1x36x128xbf16>
    %26 = vector.shape_cast %25 : vector<1x36x128xbf16> to vector<36x128xbf16>
    %cst_28 = arith.constant dense<0.000000e+00> : vector<2x128xf32>
    %27 = tpu.matmul %24, %26, %cst_28 {dimension_numbers = #tpu.dot_dimension_numbers<[1], [0], [0], [1], [0, 0, 1, 1], [], []>} : vector<2x36xbf16>, vector<36x128xbf16>, vector<2x128xf32> -> vector<2x128xf32>
    %28 = arith.addf %22, %27 : vector<2x128xf32>
    %c5 = arith.constant 5 : index
    %c0_29 = arith.constant 0 : index
    %c0_30 = arith.constant 0 : index
    %29 = vector.load %arg1[%c5, %c0_29, %c0_30] : memref<16x2x36xbf16, #tpu.memory_space<vmem>>, vector<1x2x36xbf16>
    %30 = vector.shape_cast %29 : vector<1x2x36xbf16> to vector<2x36xbf16>
    %c5_31 = arith.constant 5 : index
    %c0_32 = arith.constant 0 : index
    %c0_33 = arith.constant 0 : index
    %31 = vector.load %arg2[%c5_31, %c0_32, %c0_33] : memref<16x36x128xbf16, #tpu.memory_space<vmem>>, vector<1x36x128xbf16>
    %32 = vector.shape_cast %31 : vector<1x36x128xbf16> to vector<36x128xbf16>
    %cst_34 = arith.constant dense<0.000000e+00> : vector<2x128xf32>
    %33 = tpu.matmul %30, %32, %cst_34 {dimension_numbers = #tpu.dot_dimension_numbers<[1], [0], [0], [1], [0, 0, 1, 1], [], []>} : vector<2x36xbf16>, vector<36x128xbf16>, vector<2x128xf32> -> vector<2x128xf32>
    %34 = arith.addf %28, %33 : vector<2x128xf32>
    %c6 = arith.constant 6 : index
    %c0_35 = arith.constant 0 : index
    %c0_36 = arith.constant 0 : index
    %35 = vector.load %arg1[%c6, %c0_35, %c0_36] : memref<16x2x36xbf16, #tpu.memory_space<vmem>>, vector<1x2x36xbf16>
    %36 = vector.shape_cast %35 : vector<1x2x36xbf16> to vector<2x36xbf16>
    %c6_37 = arith.constant 6 : index
    %c0_38 = arith.constant 0 : index
    %c0_39 = arith.constant 0 : index
    %37 = vector.load %arg2[%c6_37, %c0_38, %c0_39] : memref<16x36x128xbf16, #tpu.memory_space<vmem>>, vector<1x36x128xbf16>
    %38 = vector.shape_cast %37 : vector<1x36x128xbf16> to vector<36x128xbf16>
    %cst_40 = arith.constant dense<0.000000e+00> : vector<2x128xf32>
    %39 = tpu.matmul %36, %38, %cst_40 {dimension_numbers = #tpu.dot_dimension_numbers<[1], [0], [0], [1], [0, 0, 1, 1], [], []>} : vector<2x36xbf16>, vector<36x128xbf16>, vector<2x128xf32> -> vector<2x128xf32>
    %40 = arith.addf %34, %39 : vector<2x128xf32>
    %c7 = arith.constant 7 : index
    %c0_41 = arith.constant 0 : index
    %c0_42 = arith.constant 0 : index
    %41 = vector.load %arg1[%c7, %c0_41, %c0_42] : memref<16x2x36xbf16, #tpu.memory_space<vmem>>, vector<1x2x36xbf16>
    %42 = vector.shape_cast %41 : vector<1x2x36xbf16> to vector<2x36xbf16>
    %c7_43 = arith.constant 7 : index
    %c0_44 = arith.constant 0 : index
    %c0_45 = arith.constant 0 : index
    %43 = vector.load %arg2[%c7_43, %c0_44, %c0_45] : memref<16x36x128xbf16, #tpu.memory_space<vmem>>, vector<1x36x128xbf16>
    %44 = vector.shape_cast %43 : vector<1x36x128xbf16> to vector<36x128xbf16>
    %cst_46 = arith.constant dense<0.000000e+00> : vector<2x128xf32>
    %45 = tpu.matmul %42, %44, %cst_46 {dimension_numbers = #tpu.dot_dimension_numbers<[1], [0], [0], [1], [0, 0, 1, 1], [], []>} : vector<2x36xbf16>, vector<36x128xbf16>, vector<2x128xf32> -> vector<2x128xf32>
    %46 = arith.addf %40, %45 : vector<2x128xf32>
    %c8 = arith.constant 8 : index
    %c0_47 = arith.constant 0 : index
    %c0_48 = arith.constant 0 : index
    %47 = vector.load %arg1[%c8, %c0_47, %c0_48] : memref<16x2x36xbf16, #tpu.memory_space<vmem>>, vector<1x2x36xbf16>
    %48 = vector.shape_cast %47 : vector<1x2x36xbf16> to vector<2x36xbf16>
    %c8_49 = arith.constant 8 : index
    %c0_50 = arith.constant 0 : index
    %c0_51 = arith.constant 0 : index
    %49 = vector.load %arg2[%c8_49, %c0_50, %c0_51] : memref<16x36x128xbf16, #tpu.memory_space<vmem>>, vector<1x36x128xbf16>
    %50 = vector.shape_cast %49 : vector<1x36x128xbf16> to vector<36x128xbf16>
    %cst_52 = arith.constant dense<0.000000e+00> : vector<2x128xf32>
    %51 = tpu.matmul %48, %50, %cst_52 {dimension_numbers = #tpu.dot_dimension_numbers<[1], [0], [0], [1], [0, 0, 1, 1], [], []>} : vector<2x36xbf16>, vector<36x128xbf16>, vector<2x128xf32> -> vector<2x128xf32>
    %52 = arith.addf %46, %51 : vector<2x128xf32>
    %c9 = arith.constant 9 : index
    %c0_53 = arith.constant 0 : index
    %c0_54 = arith.constant 0 : index
    %53 = vector.load %arg1[%c9, %c0_53, %c0_54] : memref<16x2x36xbf16, #tpu.memory_space<vmem>>, vector<1x2x36xbf16>
    %54 = vector.shape_cast %53 : vector<1x2x36xbf16> to vector<2x36xbf16>
    %c9_55 = arith.constant 9 : index
    %c0_56 = arith.constant 0 : index
    %c0_57 = arith.constant 0 : index
    %55 = vector.load %arg2[%c9_55, %c0_56, %c0_57] : memref<16x36x128xbf16, #tpu.memory_space<vmem>>, vector<1x36x128xbf16>
    %56 = vector.shape_cast %55 : vector<1x36x128xbf16> to vector<36x128xbf16>
    %cst_58 = arith.constant dense<0.000000e+00> : vector<2x128xf32>
    %57 = tpu.matmul %54, %56, %cst_58 {dimension_numbers = #tpu.dot_dimension_numbers<[1], [0], [0], [1], [0, 0, 1, 1], [], []>} : vector<2x36xbf16>, vector<36x128xbf16>, vector<2x128xf32> -> vector<2x128xf32>
    %58 = arith.addf %52, %57 : vector<2x128xf32>
    %c10 = arith.constant 10 : index
    %c0_59 = arith.constant 0 : index
    %c0_60 = arith.constant 0 : index
    %59 = vector.load %arg1[%c10, %c0_59, %c0_60] : memref<16x2x36xbf16, #tpu.memory_space<vmem>>, vector<1x2x36xbf16>
    %60 = vector.shape_cast %59 : vector<1x2x36xbf16> to vector<2x36xbf16>
    %c10_61 = arith.constant 10 : index
    %c0_62 = arith.constant 0 : index
    %c0_63 = arith.constant 0 : index
    %61 = vector.load %arg2[%c10_61, %c0_62, %c0_63] : memref<16x36x128xbf16, #tpu.memory_space<vmem>>, vector<1x36x128xbf16>
    %62 = vector.shape_cast %61 : vector<1x36x128xbf16> to vector<36x128xbf16>
    %cst_64 = arith.constant dense<0.000000e+00> : vector<2x128xf32>
    %63 = tpu.matmul %60, %62, %cst_64 {dimension_numbers = #tpu.dot_dimension_numbers<[1], [0], [0], [1], [0, 0, 1, 1], [], []>} : vector<2x36xbf16>, vector<36x128xbf16>, vector<2x128xf32> -> vector<2x128xf32>
    %64 = arith.addf %58, %63 : vector<2x128xf32>
    %c11 = arith.constant 11 : index
    %c0_65 = arith.constant 0 : index
    %c0_66 = arith.constant 0 : index
    %65 = vector.load %arg1[%c11, %c0_65, %c0_66] : memref<16x2x36xbf16, #tpu.memory_space<vmem>>, vector<1x2x36xbf16>
    %66 = vector.shape_cast %65 : vector<1x2x36xbf16> to vector<2x36xbf16>
    %c11_67 = arith.constant 11 : index
    %c0_68 = arith.constant 0 : index
    %c0_69 = arith.constant 0 : index
    %67 = vector.load %arg2[%c11_67, %c0_68, %c0_69] : memref<16x36x128xbf16, #tpu.memory_space<vmem>>, vector<1x36x128xbf16>
    %68 = vector.shape_cast %67 : vector<1x36x128xbf16> to vector<36x128xbf16>
    %cst_70 = arith.constant dense<0.000000e+00> : vector<2x128xf32>
    %69 = tpu.matmul %66, %68, %cst_70 {dimension_numbers = #tpu.dot_dimension_numbers<[1], [0], [0], [1], [0, 0, 1, 1], [], []>} : vector<2x36xbf16>, vector<36x128xbf16>, vector<2x128xf32> -> vector<2x128xf32>
    %70 = arith.addf %64, %69 : vector<2x128xf32>
    %c12 = arith.constant 12 : index
    %c0_71 = arith.constant 0 : index
    %c0_72 = arith.constant 0 : index
    %71 = vector.load %arg1[%c12, %c0_71, %c0_72] : memref<16x2x36xbf16, #tpu.memory_space<vmem>>, vector<1x2x36xbf16>
    %72 = vector.shape_cast %71 : vector<1x2x36xbf16> to vector<2x36xbf16>
    %c12_73 = arith.constant 12 : index
    %c0_74 = arith.constant 0 : index
    %c0_75 = arith.constant 0 : index
    %73 = vector.load %arg2[%c12_73, %c0_74, %c0_75] : memref<16x36x128xbf16, #tpu.memory_space<vmem>>, vector<1x36x128xbf16>
    %74 = vector.shape_cast %73 : vector<1x36x128xbf16> to vector<36x128xbf16>
    %cst_76 = arith.constant dense<0.000000e+00> : vector<2x128xf32>
    %75 = tpu.matmul %72, %74, %cst_76 {dimension_numbers = #tpu.dot_dimension_numbers<[1], [0], [0], [1], [0, 0, 1, 1], [], []>} : vector<2x36xbf16>, vector<36x128xbf16>, vector<2x128xf32> -> vector<2x128xf32>
    %76 = arith.addf %70, %75 : vector<2x128xf32>
    %c13 = arith.constant 13 : index
    %c0_77 = arith.constant 0 : index
    %c0_78 = arith.constant 0 : index
    %77 = vector.load %arg1[%c13, %c0_77, %c0_78] : memref<16x2x36xbf16, #tpu.memory_space<vmem>>, vector<1x2x36xbf16>
    %78 = vector.shape_cast %77 : vector<1x2x36xbf16> to vector<2x36xbf16>
    %c13_79 = arith.constant 13 : index
    %c0_80 = arith.constant 0 : index
    %c0_81 = arith.constant 0 : index
    %79 = vector.load %arg2[%c13_79, %c0_80, %c0_81] : memref<16x36x128xbf16, #tpu.memory_space<vmem>>, vector<1x36x128xbf16>
    %80 = vector.shape_cast %79 : vector<1x36x128xbf16> to vector<36x128xbf16>
    %cst_82 = arith.constant dense<0.000000e+00> : vector<2x128xf32>
    %81 = tpu.matmul %78, %80, %cst_82 {dimension_numbers = #tpu.dot_dimension_numbers<[1], [0], [0], [1], [0, 0, 1, 1], [], []>} : vector<2x36xbf16>, vector<36x128xbf16>, vector<2x128xf32> -> vector<2x128xf32>
    %82 = arith.addf %76, %81 : vector<2x128xf32>
    %c14 = arith.constant 14 : index
    %c0_83 = arith.constant 0 : index
    %c0_84 = arith.constant 0 : index
    %83 = vector.load %arg1[%c14, %c0_83, %c0_84] : memref<16x2x36xbf16, #tpu.memory_space<vmem>>, vector<1x2x36xbf16>
    %84 = vector.shape_cast %83 : vector<1x2x36xbf16> to vector<2x36xbf16>
    %c14_85 = arith.constant 14 : index
    %c0_86 = arith.constant 0 : index
    %c0_87 = arith.constant 0 : index
    %85 = vector.load %arg2[%c14_85, %c0_86, %c0_87] : memref<16x36x128xbf16, #tpu.memory_space<vmem>>, vector<1x36x128xbf16>
    %86 = vector.shape_cast %85 : vector<1x36x128xbf16> to vector<36x128xbf16>
    %cst_88 = arith.constant dense<0.000000e+00> : vector<2x128xf32>
    %87 = tpu.matmul %84, %86, %cst_88 {dimension_numbers = #tpu.dot_dimension_numbers<[1], [0], [0], [1], [0, 0, 1, 1], [], []>} : vector<2x36xbf16>, vector<36x128xbf16>, vector<2x128xf32> -> vector<2x128xf32>
    %88 = arith.addf %82, %87 : vector<2x128xf32>
    %c15 = arith.constant 15 : index
    %c0_89 = arith.constant 0 : index
    %c0_90 = arith.constant 0 : index
    %89 = vector.load %arg1[%c15, %c0_89, %c0_90] : memref<16x2x36xbf16, #tpu.memory_space<vmem>>, vector<1x2x36xbf16>
    %90 = vector.shape_cast %89 : vector<1x2x36xbf16> to vector<2x36xbf16>
    %c15_91 = arith.constant 15 : index
    %c0_92 = arith.constant 0 : index
    %c0_93 = arith.constant 0 : index
    %91 = vector.load %arg2[%c15_91, %c0_92, %c0_93] : memref<16x36x128xbf16, #tpu.memory_space<vmem>>, vector<1x36x128xbf16>
    %92 = vector.shape_cast %91 : vector<1x36x128xbf16> to vector<36x128xbf16>
    %cst_94 = arith.constant dense<0.000000e+00> : vector<2x128xf32>
    %93 = tpu.matmul %90, %92, %cst_94 {dimension_numbers = #tpu.dot_dimension_numbers<[1], [0], [0], [1], [0, 0, 1, 1], [], []>} : vector<2x36xbf16>, vector<36x128xbf16>, vector<2x128xf32> -> vector<2x128xf32>
    %94 = arith.addf %88, %93 : vector<2x128xf32>
    %c0_95 = arith.constant 0 : index
    %c0_96 = arith.constant 0 : index
    %95 = vector.load %arg3[%c0_95, %c0_96] : memref<1x128xf32, #tpu.memory_space<vmem>>, vector<1x128xf32>
    %96 = vector.broadcast %95 : vector<1x128xf32> to vector<2x128xf32>
    %97 = arith.addf %94, %96 : vector<2x128xf32>
    %cst_97 = arith.constant 0.000000e+00 : f32
    %98 = vector.broadcast %cst_97 : f32 to vector<2x128xf32>
    %99 = arith.maximumf %97, %98 : vector<2x128xf32>
    %100 = arith.truncf %99 : vector<2x128xf32> to vector<2x128xbf16>
    %c0_98 = arith.constant 0 : index
    %c0_99 = arith.constant 0 : index
    %101 = vector.load %arg4[%c0_98, %c0_99] : memref<128x128xbf16, #tpu.memory_space<vmem>>, vector<128x128xbf16>
    %cst_100 = arith.constant dense<0.000000e+00> : vector<2x128xf32>
    %102 = tpu.matmul %100, %101, %cst_100 {dimension_numbers = #tpu.dot_dimension_numbers<[1], [0], [0], [1], [0, 0, 1, 1], [], []>} : vector<2x128xbf16>, vector<128x128xbf16>, vector<2x128xf32> -> vector<2x128xf32>
    %c0_101 = arith.constant 0 : index
    %c0_102 = arith.constant 0 : index
    %103 = vector.load %arg5[%c0_101, %c0_102] : memref<1x128xf32, #tpu.memory_space<vmem>>, vector<1x128xf32>
    %104 = vector.broadcast %103 : vector<1x128xf32> to vector<2x128xf32>
    %105 = arith.addf %102, %104 : vector<2x128xf32>
    %cst_103 = arith.constant 0.000000e+00 : f32
    %106 = vector.broadcast %cst_103 : f32 to vector<2x128xf32>
    %107 = arith.maximumf %105, %106 : vector<2x128xf32>
    %108 = arith.truncf %107 : vector<2x128xf32> to vector<2x128xbf16>
    %c0_104 = arith.constant 0 : index
    %c0_105 = arith.constant 0 : index
    %109 = vector.load %arg6[%c0_104, %c0_105] : memref<128x128xbf16, #tpu.memory_space<vmem>>, vector<128x128xbf16>
    %cst_106 = arith.constant dense<0.000000e+00> : vector<2x128xf32>
    %110 = tpu.matmul %108, %109, %cst_106 {dimension_numbers = #tpu.dot_dimension_numbers<[1], [0], [0], [1], [0, 0, 1, 1], [], []>} : vector<2x128xbf16>, vector<128x128xbf16>, vector<2x128xf32> -> vector<2x128xf32>
    %c0_107 = arith.constant 0 : index
    %c0_108 = arith.constant 0 : index
    %111 = vector.load %arg7[%c0_107, %c0_108] : memref<1x128xf32, #tpu.memory_space<vmem>>, vector<1x128xf32>
    %112 = vector.broadcast %111 : vector<1x128xf32> to vector<2x128xf32>
    %113 = arith.addf %110, %112 : vector<2x128xf32>
    %c0_109 = arith.constant 0 : index
    %c0_110 = arith.constant 0 : index
    %114 = vector.load %arg8[%c0_109, %c0_110] : memref<2x128xf32, #tpu.memory_space<vmem>>, vector<2x128xf32>
    tpu.vector_store %arg8[%c0_109, %c0_110], %113 {strides = array<i32>} : memref<2x128xf32, #tpu.memory_space<vmem>>, vector<2x128xf32>,
    return
  }
  func.func @transform_0(%arg0: i32) -> (i32, i32, i32) {
    %c0_i32 = arith.constant 0 : i32
    %c0_i32_0 = arith.constant 0 : i32
    %c0_i32_1 = arith.constant 0 : i32
    return %c0_i32, %arg0, %c0_i32_0 : i32, i32, i32
  }
  func.func @transform_1(%arg0: i32) -> (i32, i32, i32) {
    %c0_i32 = arith.constant 0 : i32
    %c0_i32_0 = arith.constant 0 : i32
    %c0_i32_1 = arith.constant 0 : i32
    %c0_i32_2 = arith.constant 0 : i32
    return %c0_i32, %c0_i32_0, %c0_i32_1 : i32, i32, i32
  }
  func.func @transform_2(%arg0: i32) -> (i32, i32) {
    %c0_i32 = arith.constant 0 : i32
    %c0_i32_0 = arith.constant 0 : i32
    %c0_i32_1 = arith.constant 0 : i32
    return %c0_i32, %c0_i32_0 : i32, i32
  }
  func.func @transform_3(%arg0: i32) -> (i32, i32) {
    %c0_i32 = arith.constant 0 : i32
    %c0_i32_0 = arith.constant 0 : i32
    %c0_i32_1 = arith.constant 0 : i32
    return %c0_i32, %c0_i32_0 : i32, i32
  }
  func.func @transform_4(%arg0: i32) -> (i32, i32) {
    %c0_i32 = arith.constant 0 : i32
    %c0_i32_0 = arith.constant 0 : i32
    %c0_i32_1 = arith.constant 0 : i32
    return %c0_i32, %c0_i32_0 : i32, i32
  }
  func.func @transform_5(%arg0: i32) -> (i32, i32) {
    %c0_i32 = arith.constant 0 : i32
    %c0_i32_0 = arith.constant 0 : i32
    %c0_i32_1 = arith.constant 0 : i32
    return %c0_i32, %c0_i32_0 : i32, i32
  }
  func.func @transform_6(%arg0: i32) -> (i32, i32) {
    %c0_i32 = arith.constant 0 : i32
    %c0_i32_0 = arith.constant 0 : i32
    %c0_i32_1 = arith.constant 0 : i32
    return %c0_i32, %c0_i32_0 : i32, i32
  }
  func.func @transform_7(%arg0: i32) -> (i32, i32) {
    %c0_i32 = arith.constant 0 : i32
    %c0_i32_0 = arith.constant 0 : i32
    return %arg0, %c0_i32 : i32, i32
  }
}

</mosaic_0001>

<llo_original>
// kernel: lenet_forward.3
$region0: #{lenet_forward.3}
  #allocation0 [shape = 'u32[]', space=smem, size = 0x4, offset = 0x4, fixed_abs, tag = 'smem constant byte address 0x4 - core index']
  #allocation1 [shape = 'u32[144,128]{1,0:T(1,128)}', space=vmem, size = 0x12000, scoped, tag = 'internal scratch']
  %s0 = inlined_call_operand.vmem [shape: bf16[8,80], index: 0, kind: input, shape index: {}]
  %s1 = inlined_call_operand.vmem [shape: f32[8,1], index: 1, kind: input, shape index: {}]
  %s2 = inlined_call_operand.vmem [shape: bf16[4,80,512], index: 2, kind: input, shape index: {}]
  %s3 = inlined_call_operand.vmem [shape: bf16[8,512], index: 3, kind: output, shape index: {}]
  %s4 = sld [smem:[#allocation0]]
  $region83: #{lenet_forward.3} parent=0
    _
  %s6 = ssub.s32 1, %s4
  %s7 = scalar_select 0, %s6, %s4
  $region1: #{lenet_forward.3} parent=0
    #allocation2 [shape = 'u8[327680]{0}', space=vmem, size = 0x50000, scoped, tag = 'input window, operand 2']
    loop: start=0, step=1, limit=4
    $region2: #{lenet_forward.3} parent=1 // loop_pre_header
      _
    $region3: #{lenet_forward.3} parent=1 // loop_header
      %s9 = sphi 0, %s13
      %p10 = scmp.ge.s32.totalorder %s9, 4
      %s17 = sphi 0, %s17
      %s19 = sphi 0, %s17
      %s20 = sphi 0, %s19
      %s34 = sphi 0, %s20
      %s38 = sphi 0, %s38
      %s40 = sphi 0, %s38
      %s41 = sphi 0, %s40
      %s55 = sphi 0, %s41
      %s61 = sphi 0, %s63
      %s64 = sphi 0, %s61
      %s65 = sphi 0, %s64
      %s81 = sphi 0, %s65
      %s87 = sphi 0, %s89
      %s90 = sphi 0, %s87
      %s91 = sphi 0, %s90
      %s107 = sphi 0, %s91
    $region4: #{lenet_forward.3} parent=1 // loop_header_branch
      %12 = sbr.rel (%p10) target = $region8
    $region5: #{lenet_forward.3} parent=1 // loop_body
      %s14 = ssub.s32 %s9, 1
      %s15 = ssub.s32 %s9, 2
      %s16 = sadd.s32 %s9, 1
      %s18 = sadd.s32 %s17, 1
      %p21 = scmp.eq.s32.totalorder %s9, 1
      %p22 = scmp.ne.s32.totalorder %s17, %s19
      %p23 = scmp.eq.s32.totalorder %s9, 0
      %p24 = por %p22, %p23
      %p25 = scmp.ne.s32.totalorder %s17, %s19
      %p26 = scmp.eq.s32.totalorder %s14, 1
      %p27 = por %p25, %p26
      %p28 = scmp.ne.s32.totalorder %s19, %s20
      %p29 = scmp.eq.s32.totalorder %s14, 0
      %p30 = por %p28, %p29
      %p31 = scmp.ne.s32.totalorder %s19, %s20
      %p32 = scmp.eq.s32.totalorder %s15, 1
      %p33 = por %p31, %p32
      %p35 = scmp.ne.s32.totalorder %s20, %s34
      %p36 = scmp.eq.s32.totalorder %s15, 0
      %p37 = por %p35, %p36
      %s39 = sadd.s32 %s38, 1
      %p42 = scmp.eq.s32.totalorder %s9, 1
      %p43 = scmp.ne.s32.totalorder %s38, %s40
      %p44 = scmp.eq.s32.totalorder %s9, 0
      %p45 = por %p43, %p44
      %p46 = scmp.ne.s32.totalorder %s38, %s40
      %p47 = scmp.eq.s32.totalorder %s14, 1
      %p48 = por %p46, %p47
      %p49 = scmp.ne.s32.totalorder %s40, %s41
      %p50 = scmp.eq.s32.totalorder %s14, 0
      %p51 = por %p49, %p50
      %p52 = scmp.ne.s32.totalorder %s40, %s41
      %p53 = scmp.eq.s32.totalorder %s15, 1
      %p54 = por %p52, %p53
      %p56 = scmp.ne.s32.totalorder %s41, %s55
      %p57 = scmp.eq.s32.totalorder %s15, 0
      %p58 = por %p56, %p57
      %s59 = ssub.s32 %s9, %s16
      %p60 = scmp.eq.s32.totalorder %s59, 0
      %s62 = sadd.s32 %s61, 1
      %s63 = scalar_select %p60, %s61, %s62
      %p66 = pneg %p60
      %p67 = scmp.eq.s32.totalorder %s9, 1
      %p68 = por %p66, %p67
      %p69 = scmp.ne.s32.totalorder %s61, %s64
      %p70 = scmp.eq.s32.totalorder %s9, 0
      %p71 = por %p69, %p70
      %p72 = scmp.ne.s32.totalorder %s61, %s64
      %p73 = scmp.eq.s32.totalorder %s14, 1
      %p74 = por %p72, %p73
      %p75 = scmp.ne.s32.totalorder %s64, %s65
      %p76 = scmp.eq.s32.totalorder %s14, 0
      %p77 = por %p75, %p76
      %p78 = scmp.ne.s32.totalorder %s64, %s65
      %p79 = scmp.eq.s32.totalorder %s15, 1
      %p80 = por %p78, %p79
      %p82 = scmp.ne.s32.totalorder %s65, %s81
      %p83 = scmp.eq.s32.totalorder %s15, 0
      %p84 = por %p82, %p83
      %s85 = ssub.s32 %s9, %s16
      %p86 = scmp.eq.s32.totalorder %s85, 0
      %s88 = sadd.s32 %s87, 1
      %s89 = scalar_select %p86, %s87, %s88
      %p92 = pneg %p86
      %p93 = scmp.eq.s32.totalorder %s9, 1
      %p94 = por %p92, %p93
      %p95 = scmp.ne.s32.totalorder %s87, %s90
      %p96 = scmp.eq.s32.totalorder %s9, 0
      %p97 = por %p95, %p96
      %p98 = scmp.ne.s32.totalorder %s87, %s90
      %p99 = scmp.eq.s32.totalorder %s14, 1
      %p100 = por %p98, %p99
      %p101 = scmp.ne.s32.totalorder %s90, %s91
      %p102 = scmp.eq.s32.totalorder %s14, 0
      %p103 = por %p101, %p102
      %p104 = scmp.ne.s32.totalorder %s90, %s91
      %p105 = scmp.eq.s32.totalorder %s15, 1
      %p106 = por %p104, %p105
      %p108 = scmp.ne.s32.totalorder %s91, %s107
      %p109 = scmp.eq.s32.totalorder %s15, 0
      %p110 = por %p108, %p109
      %p111 = scmp.le.s32.totalorder 1, %s9
      %p112 = scmp.lt.s32.totalorder %s9, 3
      %p113 = pnand %p111, %p112
      %p114 = pneg %p113
      // Predicated region
      $region9: #{lenet_forward.3} parent=5 // pred_check
        _
      $region10: #{lenet_forward.3} parent=5 // pred_check_branch
        %116 = sbr.rel (%p113) target = $region12
      $region11: #{lenet_forward.3} parent=5 // pred_region
        %s117 = ssub.s32 %s9, 1
        // Predicated region
        $region13: #{lenet_forward.3} parent=11 // pred_check
          %p118 = pneg %p30
        $region14: #{lenet_forward.3} parent=11 // pred_check_branch
          %120 = sbr.rel (%p118) target = $region16
        $region15: #{lenet_forward.3} parent=11 // pred_region
          _
        $region16: #{lenet_forward.3} parent=11 // pred_fallthru
          _
        // Predicated region
        $region17: #{lenet_forward.3} parent=11 // pred_check
          %p121 = pneg %p51
        $region18: #{lenet_forward.3} parent=11 // pred_check_branch
          %123 = sbr.rel (%p121) target = $region20
        $region19: #{lenet_forward.3} parent=11 // pred_region
          _
        $region20: #{lenet_forward.3} parent=11 // pred_fallthru
          _
      $region12: #{lenet_forward.3} parent=5 // pred_fallthru
        _
      %p124 = scmp.lt.s32.totalorder %s9, 2
      // Predicated region
      $region21: #{lenet_forward.3} parent=5 // pred_check
        %p125 = pneg %p124
      $region22: #{lenet_forward.3} parent=5 // pred_check_branch
        %127 = sbr.rel (%p125) target = $region24
      $region23: #{lenet_forward.3} parent=5 // pred_region
        // Predicated region
        $region25: #{lenet_forward.3} parent=23 // pred_check
          %p128 = pneg %p71
        $region26: #{lenet_forward.3} parent=23 // pred_check_branch
          %130 = sbr.rel (%p128) target = $region28
        $region27: #{lenet_forward.3} parent=23 // pred_region
          %s131 = sand.u32 %s61, 1
          %s132 = sand.u32 %s61, 1
          %s133 = smul.addr %s132, 320
          %s134 = scalar_lea.vmem [#allocation2], %s133
          %s135 = smul.u32 2, %s9
          %s136 = smul.addr %s135, 4
          %s137 = scalar_lea.vmem %s2, %s136
          // Predicated region
          $region29: #{lenet_forward.3} parent=27 // pred_check
            _
          $region30: #{lenet_forward.3} parent=27 // pred_check_branch
            %139 = sbr.rel (0) target = $region32
          $region31: #{lenet_forward.3} parent=27 // pred_region
            // Predicated region
            $region33: #{lenet_forward.3} parent=31 // pred_check
              _
            $region34: #{lenet_forward.3} parent=31 // pred_check_branch
              %141 = sbr.rel (0) target = $region36
            $region35: #{lenet_forward.3} parent=31 // pred_region
              // Predicated region
              $region48: #{lenet_forward.3} parent=35 // pred_check
                _
              $region49: #{lenet_forward.3} parent=35 // pred_check_branch
                %234 = sbr.rel (0) target = $region51
              $region50: #{lenet_forward.3} parent=35 // pred_region
                loop: start=0, step=1, limit=1
                $region52: #{lenet_forward.3} parent=50 // loop_pre_header
                  _
                $region53: #{lenet_forward.3} parent=50 // loop_header
                  %s236 = sphi 0, %s240
                  %p237 = scmp.ge.s32.totalorder %s236, 1
                  %s241 = sphi %s137, %s137
                  %s242 = sphi %s134, %s134
                $region54: #{lenet_forward.3} parent=50 // loop_header_branch
                  %239 = sbr.rel (%p237) target = $region58
                $region55: #{lenet_forward.3} parent=50 // loop_body
                  %v243 = vld [vmem:[%s241] sm:$0xff]
                  %244 = vst [vmem:[%s242] sm:$0xff] %v243
                  %v245 = vld [vmem:[%s241 + $0x10] sm:$0xff]
                  %246 = vst [vmem:[%s242 + $0x8] sm:$0xff] %v245
                  %v247 = vld [vmem:[%s241 + $0x20] sm:$0xff]
                  %248 = vst [vmem:[%s242 + $0x10] sm:$0xff] %v247
                  %v249 = vld [vmem:[%s241 + $0x30] sm:$0xff]
                  %250 = vst [vmem:[%s242 + $0x18] sm:$0xff] %v249
                  %v251 = vld [vmem:[%s241 + $0x40] sm:$0xff]
                  %252 = vst [vmem:[%s242 + $0x20] sm:$0xff] %v251
                  %v253 = vld [vmem:[%s241 + $0x50] sm:$0xff]
                  %254 = vst [vmem:[%s242 + $0x28] sm:$0xff] %v253
                  %v255 = vld [vmem:[%s241 + $0x60] sm:$0xff]
                  %256 = vst [vmem:[%s242 + $0x30] sm:$0xff] %v255
                  %v257 = vld [vmem:[%s241 + $0x70] sm:$0xff]
                  %258 = vst [vmem:[%s242 + $0x38] sm:$0xff] %v257
                  %v259 = vld [vmem:[%s241 + $0x80] sm:$0xff]
                  %260 = vst [vmem:[%s242 + $0x40] sm:$0xff] %v259
                  %v261 = vld [vmem:[%s241 + $0x90] sm:$0xff]
                  %262 = vst [vmem:[%s242 + $0x48] sm:$0xff] %v261
                  %v263 = vld [vmem:[%s241 + $0xa0] sm:$0xff]
                  %264 = vst [vmem:[%s242 + $0x50] sm:$0xff] %v263
                  %v265 = vld [vmem:[%s241 + $0xb0] sm:$0xff]
                  %266 = vst [vmem:[%s242 + $0x58] sm:$0xff] %v265
                  %v267 = vld [vmem:[%s241 + $0xc0] sm:$0xff]
                  %268 = vst [vmem:[%s242 + $0x60] sm:$0xff] %v267
                  %v269 = vld [vmem:[%s241 + $0xd0] sm:$0xff]
                  %270 = vst [vmem:[%s242 + $0x68] sm:$0xff] %v269
                  %v271 = vld [vmem:[%s241 + $0xe0] sm:$0xff]
                  %272 = vst [vmem:[%s242 + $0x70] sm:$0xff] %v271
                  %v273 = vld [vmem:[%s241 + $0xf0] sm:$0xff]
                  %274 = vst [vmem:[%s242 + $0x78] sm:$0xff] %v273
                  %v275 = vld [vmem:[%s241 + $0x100] sm:$0xff]
                  %276 = vst [vmem:[%s242 + $0x80] sm:$0xff] %v275
                  %v277 = vld [vmem:[%s241 + $0x110] sm:$0xff]
                  %278 = vst [vmem:[%s242 + $0x88] sm:$0xff] %v277
                  %v279 = vld [vmem:[%s241 + $0x120] sm:$0xff]
                  %280 = vst [vmem:[%s242 + $0x90] sm:$0xff] %v279
                  %v281 = vld [vmem:[%s241 + $0x130] sm:$0xff]
                  %282 = vst [vmem:[%s242 + $0x98] sm:$0xff] %v281
                  %v283 = vld [vmem:[%s241 + $0x140] sm:$0xff]
                  %284 = vst [vmem:[%s242 + $0xa0] sm:$0xff] %v283
                  %v285 = vld [vmem:[%s241 + $0x150] sm:$0xff]
                  %286 = vst [vmem:[%s242 + $0xa8] sm:$0xff] %v285
                  %v287 = vld [vmem:[%s241 + $0x160] sm:$0xff]
                  %288 = vst [vmem:[%s242 + $0xb0] sm:$0xff] %v287
                  %v289 = vld [vmem:[%s241 + $0x170] sm:$0xff]
                  %290 = vst [vmem:[%s242 + $0xb8] sm:$0xff] %v289
                  %v291 = vld [vmem:[%s241 + $0x180] sm:$0xff]
                  %292 = vst [vmem:[%s242 + $0xc0] sm:$0xff] %v291
                  %v293 = vld [vmem:[%s241 + $0x190] sm:$0xff]
                  %294 = vst [vmem:[%s242 + $0xc8] sm:$0xff] %v293
                  %v295 = vld [vmem:[%s241 + $0x1a0] sm:$0xff]
                  %296 = vst [vmem:[%s242 + $0xd0] sm:$0xff] %v295
                  %v297 = vld [vmem:[%s241 + $0x1b0] sm:$0xff]
                  %298 = vst [vmem:[%s242 + $0xd8] sm:$0xff] %v297
                  %v299 = vld [vmem:[%s241 + $0x1c0] sm:$0xff]
                  %300 = vst [vmem:[%s242 + $0xe0] sm:$0xff] %v299
                  %v301 = vld [vmem:[%s241 + $0x1d0] sm:$0xff]
                  %302 = vst [vmem:[%s242 + $0xe8] sm:$0xff] %v301
                  %v303 = vld [vmem:[%s241 + $0x1e0] sm:$0xff]
                  %304 = vst [vmem:[%s242 + $0xf0] sm:$0xff] %v303
                  %v305 = vld [vmem:[%s241 + $0x1f0] sm:$0xff]
                  %306 = vst [vmem:[%s242 + $0xf8] sm:$0xff] %v305
                  %v307 = vld [vmem:[%s241 + $0x200] sm:$0xff]
                  %308 = vst [vmem:[%s242 + $0x100] sm:$0xff] %v307
                  %v309 = vld [vmem:[%s241 + $0x210] sm:$0xff]
                  %310 = vst [vmem:[%s242 + $0x108] sm:$0xff] %v309
                  %v311 = vld [vmem:[%s241 + $0x220] sm:$0xff]
                  %312 = vst [vmem:[%s242 + $0x110] sm:$0xff] %v311
                  %v313 = vld [vmem:[%s241 + $0x230] sm:$0xff]
                  %314 = vst [vmem:[%s242 + $0x118] sm:$0xff] %v313
                  %v315 = vld [vmem:[%s241 + $0x240] sm:$0xff]
                  %316 = vst [vmem:[%s242 + $0x120] sm:$0xff] %v315
                  %v317 = vld [vmem:[%s241 + $0x250] sm:$0xff]
                  %318 = vst [vmem:[%s242 + $0x128] sm:$0xff] %v317
                  %v319 = vld [vmem:[%s241 + $0x260] sm:$0xff]
                  %320 = vst [vmem:[%s242 + $0x130] sm:$0xff] %v319
                  %v321 = vld [vmem:[%s241 + $0x270] sm:$0xff]
                  %322 = vst [vmem:[%s242 + $0x138] sm:$0xff] %v321
                $region56: #{lenet_forward.3} parent=50 // loop_footer
                  %s240 = sadd.s32 1, %s236
                $region57: #{lenet_forward.3} parent=50 // loop_footer_branch
                  %235 = sbr.rel target = $region53
                $region58: #{lenet_forward.3} parent=50 // loop_exit
                  _
              $region51: #{lenet_forward.3} parent=35 // pred_fallthru
                _
              // Predicated region
              $region59: #{lenet_forward.3} parent=35 // pred_check
                _
              $region60: #{lenet_forward.3} parent=35 // pred_check_branch
                %324 = sbr.rel target = $region62
              $region61: #{lenet_forward.3} parent=35 // pred_region
                _
              $region62: #{lenet_forward.3} parent=35 // pred_fallthru
                _
            $region36: #{lenet_forward.3} parent=31 // pred_fallthru
              _
            // Predicated region
            $region37: #{lenet_forward.3} parent=31 // pred_check
              _
            $region38: #{lenet_forward.3} parent=31 // pred_check_branch
              %143 = sbr.rel target = $region40
            $region39: #{lenet_forward.3} parent=31 // pred_region
              loop: start=0, step=1, limit=1
              $region41: #{lenet_forward.3} parent=39 // loop_pre_header
                _
              $region42: #{lenet_forward.3} parent=39 // loop_header
                %s146 = sphi 0, %s150
                %p147 = scmp.ge.s32.totalorder %s146, 1
                %s151 = sphi %s137, %s137
                %s152 = sphi %s134, %s134
              $region43: #{lenet_forward.3} parent=39 // loop_header_branch
                %149 = sbr.rel (%p147) target = $region47
              $region44: #{lenet_forward.3} parent=39 // loop_body
                %v153 = vld [vmem:[%s151] sm:$0xff]
                %154 = vst [vmem:[%s152] sm:$0xff] %v153
                %v155 = vld [vmem:[%s151 + $0x10] sm:$0xff]
                %156 = vst [vmem:[%s152 + $0x8] sm:$0xff] %v155
                %v157 = vld [vmem:[%s151 + $0x20] sm:$0xff]
                %158 = vst [vmem:[%s152 + $0x10] sm:$0xff] %v157
                %v159 = vld [vmem:[%s151 + $0x30] sm:$0xff]
                %160 = vst [vmem:[%s152 + $0x18] sm:$0xff] %v159
                %v161 = vld [vmem:[%s151 + $0x40] sm:$0xff]
                %162 = vst [vmem:[%s152 + $0x20] sm:$0xff] %v161
                %v163 = vld [vmem:[%s151 + $0x50] sm:$0xff]
                %164 = vst [vmem:[%s152 + $0x28] sm:$0xff] %v163
                %v165 = vld [vmem:[%s151 + $0x60] sm:$0xff]
                %166 = vst [vmem:[%s152 + $0x30] sm:$0xff] %v165
                %v167 = vld [vmem:[%s151 + $0x70] sm:$0xff]
                %168 = vst [vmem:[%s152 + $0x38] sm:$0xff] %v167
                %v169 = vld [vmem:[%s151 + $0x80] sm:$0xff]
                %170 = vst [vmem:[%s152 + $0x40] sm:$0xff] %v169
                %v171 = vld [vmem:[%s151 + $0x90] sm:$0xff]
                %172 = vst [vmem:[%s152 + $0x48] sm:$0xff] %v171
                %v173 = vld [vmem:[%s151 + $0xa0] sm:$0xff]
                %174 = vst [vmem:[%s152 + $0x50] sm:$0xff] %v173
                %v175 = vld [vmem:[%s151 + $0xb0] sm:$0xff]
                %176 = vst [vmem:[%s152 + $0x58] sm:$0xff] %v175
                %v177 = vld [vmem:[%s151 + $0xc0] sm:$0xff]
                %178 = vst [vmem:[%s152 + $0x60] sm:$0xff] %v177
                %v179 = vld [vmem:[%s151 + $0xd0] sm:$0xff]
                %180 = vst [vmem:[%s152 + $0x68] sm:$0xff] %v179
                %v181 = vld [vmem:[%s151 + $0xe0] sm:$0xff]
                %182 = vst [vmem:[%s152 + $0x70] sm:$0xff] %v181
                %v183 = vld [vmem:[%s151 + $0xf0] sm:$0xff]
                %184 = vst [vmem:[%s152 + $0x78] sm:$0xff] %v183
                %v185 = vld [vmem:[%s151 + $0x100] sm:$0xff]
                %186 = vst [vmem:[%s152 + $0x80] sm:$0xff] %v185
                %v187 = vld [vmem:[%s151 + $0x110] sm:$0xff]
                %188 = vst [vmem:[%s152 + $0x88] sm:$0xff] %v187
                %v189 = vld [vmem:[%s151 + $0x120] sm:$0xff]
                %190 = vst [vmem:[%s152 + $0x90] sm:$0xff] %v189
                %v191 = vld [vmem:[%s151 + $0x130] sm:$0xff]
                %192 = vst [vmem:[%s152 + $0x98] sm:$0xff] %v191
                %v193 = vld [vmem:[%s151 + $0x140] sm:$0xff]
                %194 = vst [vmem:[%s152 + $0xa0] sm:$0xff] %v193
                %v195 = vld [vmem:[%s151 + $0x150] sm:$0xff]
                %196 = vst [vmem:[%s152 + $0xa8] sm:$0xff] %v195
                %v197 = vld [vmem:[%s151 + $0x160] sm:$0xff]
                %198 = vst [vmem:[%s152 + $0xb0] sm:$0xff] %v197
                %v199 = vld [vmem:[%s151 + $0x170] sm:$0xff]
                %200 = vst [vmem:[%s152 + $0xb8] sm:$0xff] %v199
                %v201 = vld [vmem:[%s151 + $0x180] sm:$0xff]
                %202 = vst [vmem:[%s152 + $0xc0] sm:$0xff] %v201
                %v203 = vld [vmem:[%s151 + $0x190] sm:$0xff]
                %204 = vst [vmem:[%s152 + $0xc8] sm:$0xff] %v203
                %v205 = vld [vmem:[%s151 + $0x1a0] sm:$0xff]
                %206 = vst [vmem:[%s152 + $0xd0] sm:$0xff] %v205
                %v207 = vld [vmem:[%s151 + $0x1b0] sm:$0xff]
                %208 = vst [vmem:[%s152 + $0xd8] sm:$0xff] %v207
                %v209 = vld [vmem:[%s151 + $0x1c0] sm:$0xff]
                %210 = vst [vmem:[%s152 + $0xe0] sm:$0xff] %v209
                %v211 = vld [vmem:[%s151 + $0x1d0] sm:$0xff]
                %212 = vst [vmem:[%s152 + $0xe8] sm:$0xff] %v211
                %v213 = vld [vmem:[%s151 + $0x1e0] sm:$0xff]
                %214 = vst [vmem:[%s152 + $0xf0] sm:$0xff] %v213
                %v215 = vld [vmem:[%s151 + $0x1f0] sm:$0xff]
                %216 = vst [vmem:[%s152 + $0xf8] sm:$0xff] %v215
                %v217 = vld [vmem:[%s151 + $0x200] sm:$0xff]
                %218 = vst [vmem:[%s152 + $0x100] sm:$0xff] %v217
                %v219 = vld [vmem:[%s151 + $0x210] sm:$0xff]
                %220 = vst [vmem:[%s152 + $0x108] sm:$0xff] %v219
                %v221 = vld [vmem:[%s151 + $0x220] sm:$0xff]
                %222 = vst [vmem:[%s152 + $0x110] sm:$0xff] %v221
                %v223 = vld [vmem:[%s151 + $0x230] sm:$0xff]
                %224 = vst [vmem:[%s152 + $0x118] sm:$0xff] %v223
                %v225 = vld [vmem:[%s151 + $0x240] sm:$0xff]
                %226 = vst [vmem:[%s152 + $0x120] sm:$0xff] %v225
                %v227 = vld [vmem:[%s151 + $0x250] sm:$0xff]
                %228 = vst [vmem:[%s152 + $0x128] sm:$0xff] %v227
                %v229 = vld [vmem:[%s151 + $0x260] sm:$0xff]
                %230 = vst [vmem:[%s152 + $0x130] sm:$0xff] %v229
                %v231 = vld [vmem:[%s151 + $0x270] sm:$0xff]
                %232 = vst [vmem:[%s152 + $0x138] sm:$0xff] %v231
              $region45: #{lenet_forward.3} parent=39 // loop_footer
                %s150 = sadd.s32 1, %s146
              $region46: #{lenet_forward.3} parent=39 // loop_footer_branch
                %145 = sbr.rel target = $region42
              $region47: #{lenet_forward.3} parent=39 // loop_exit
                _
            $region40: #{lenet_forward.3} parent=31 // pred_fallthru
              _
          $region32: #{lenet_forward.3} parent=27 // pred_fallthru
            _
          %325 = vnop
        $region28: #{lenet_forward.3} parent=23 // pred_fallthru
          _
      $region24: #{lenet_forward.3} parent=5 // pred_fallthru
        _
      %p326 = scmp.le.s32.totalorder 1, %s9
      %p327 = scmp.lt.s32.totalorder %s9, 3
      %p328 = pnand %p326, %p327
      %p329 = pneg %p328
      // Predicated region
      $region63: #{lenet_forward.3} parent=5 // pred_check
        _
      $region64: #{lenet_forward.3} parent=5 // pred_check_branch
        %331 = sbr.rel (%p328) target = $region66
      $region65: #{lenet_forward.3} parent=5 // pred_region
        %s332 = ssub.s32 %s9, 1
        %s333 = sand.u32 %s64, 1
        %s334 = sand.u32 %s64, 1
        %s335 = smul.addr %s334, 320
        %s336 = scalar_lea.vmem [#allocation2], %s335
        // Predicated region
        $region67: #{lenet_forward.3} parent=65 // pred_check
          %p337 = pneg %p77
        $region68: #{lenet_forward.3} parent=65 // pred_check_branch
          %339 = sbr.rel (%p337) target = $region70
        $region69: #{lenet_forward.3} parent=65 // pred_region
          _
        $region70: #{lenet_forward.3} parent=65 // pred_fallthru
          _
        %p340 = pneg %p30
        %p341 = pneg %p27
        %p342 = pneg %p51
        %p343 = pneg %p48
        %s344 = sand.u32 %s64, 1
        %s345 = sand.u32 %s64, 1
        %s346 = smul.addr %s345, 320
        %s347 = scalar_lea.vmem [#allocation2], %s346
        %p348 = pneg %p77
        %p349 = pneg %p74
        %p350 = pneg %p103
        %p351 = pneg %p100
        %s352 = smul.u32 2, %s14
        %p353 = scmp.lt.s32.totalorder %s352, 3
        %s354 = scalar_select %p353, %s352, 3
        %s355 = smul.addr %s354, 4
        %s356 = scalar_lea.vmem %s3, %s355
        %s357 = smul.u32 2, %s14
        %s358 = smul.u32 2, %s14
        %p359 = scmp.lt.s32.totalorder %s358, 3
        %s360 = scalar_select %p359, %s358, 3
        %s361 = smul.addr %s360, 4
        %s362 = scalar_lea.vmem %s3, %s361
        %s363 = smul.u32 2, %s14
        %v365 = vld [vmem:[%s0] sm:$0xf]
        %v366 = vld [vmem:[%s336] sm:$0xff]
        %v367 = vld [vmem:[%s336 + $0x8] sm:$0xff]
        %v368 = vld [vmem:[%s336 + $0x10] sm:$0xff]
        %v369 = vld [vmem:[%s336 + $0x18] sm:$0xff]
        %v370 = vld [vmem:[%s336 + $0x20] sm:$0xff]
        %v371 = vld [vmem:[%s336 + $0x28] sm:$0xff]
        %v372 = vld [vmem:[%s336 + $0x30] sm:$0xff]
        %v373 = vld [vmem:[%s336 + $0x38] sm:$0xff]
        %v374 = vld [vmem:[%s336 + $0x40] sm:$0xff]
        %v375 = vld [vmem:[%s336 + $0x48] sm:$0xff]
        %v386 = vunpack.c.l.b16 %v366
        %v387 = vunpack.c.h.b16 %v366
        %v388 = vunpack.c.l.b16 %v367
        %v389 = vunpack.c.h.b16 %v367
        %v390 = vunpack.c.l.b16 %v368
        %v391 = vunpack.c.h.b16 %v368
        %v392 = vunpack.c.l.b16 %v369
        %v393 = vunpack.c.h.b16 %v369
        %v394 = vunpack.c.l.b16 %v370
        %v395 = vunpack.c.h.b16 %v370
        %v396 = vunpack.c.l.b16 %v371
        %v397 = vunpack.c.h.b16 %v371
        %v398 = vunpack.c.l.b16 %v372
        %v399 = vunpack.c.h.b16 %v372
        %v400 = vunpack.c.l.b16 %v373
        %v401 = vunpack.c.h.b16 %v373
        %v402 = vunpack.c.l.b16 %v374
        %v403 = vunpack.c.h.b16 %v374
        %v404 = vunpack.c.l.b16 %v375
        %v405 = vunpack.c.h.b16 %v375
        %v406 = vpack.c.b16 %v388, %v386
        %v407 = vpack.c.b16 %v389, %v387
        %v408 = vpack.c.b16 %v392, %v390
        %v409 = vpack.c.b16 %v393, %v391
        %v410 = vpack.c.b16 %v396, %v394
        %v411 = vpack.c.b16 %v397, %v395
        %v412 = vpack.c.b16 %v400, %v398
        %v413 = vpack.c.b16 %v401, %v399
        %v414 = vpack.c.b16 %v404, %v402
        %v415 = vpack.c.b16 %v405, %v403
        %vm426 = vcmask 654336
        %v428 = vsel %vm426, %v365, 0
        %430 = vmatprep.subr.bf16.mxu0 %v407
        %431 = vmatpush1.bf16.msra.mxu0 %v406
        %432 = vmatprep.subr.bf16.mxu0 %v409
        %433 = vmatpush1.bf16.msra.mxu0 %v408
        %434 = vmatprep.subr.bf16.mxu0 %v411
        %435 = vmatpush1.bf16.msra.mxu0 %v410
        %436 = vmatprep.subr.bf16.mxu0 %v413
        %437 = vmatpush1.bf16.msra.mxu0 %v412
        %438 = vmatprep.subr.bf16.mxu0 %v415
        %439 = vmatpush1.bf16.msra.mxu0 %v414
        %440 = vmatprep.subr.bf16.mxu0 0
        %441 = vmatpush1.bf16.msra.mxu0 0
        %442 = vmatprep.subr.bf16.mxu0 0
        %443 = vmatpush1.bf16.msra.mxu0 0
        %444 = vmatprep.subr.bf16.mxu0 0
        %445 = vmatpush1.bf16.msra.mxu0 0
        %446 = vmatprep.subr.bf16.mxu0 0
        %447 = vmatpush1.bf16.msra.mxu0 0
        %448 = vmatprep.subr.bf16.mxu0 0
        %449 = vmatpush1.bf16.msra.mxu0 0
        %450 = vmatprep.subr.bf16.mxu0 0
        %451 = vmatpush1.bf16.msra.mxu0 0
        %452 = vmatprep.subr.bf16.mxu0 0
        %453 = vmatpush1.bf16.msra.mxu0 0
        %454 = vmatprep.subr.bf16.mxu0 0
        %455 = vmatpush1.bf16.msra.mxu0 0
        %456 = vmatprep.subr.bf16.mxu0 0
        %457 = vmatpush1.bf16.msra.mxu0 0
        %458 = vmatprep.subr.bf16.mxu0 0
        %459 = vmatpush1.bf16.msra.mxu0 0
        %460 = vmatprep.subr.bf16.mxu0 0
        %461 = vmatpush1.bf16.msra.mxu0 0
        %462 = vmatprep.mubr.bf16.mxu0 0
        %463 = vmatmul.mubr.bf16.gmra.mrb[0].mxu0 %v428
        %v464 = vpop.f32.mrb[0].mxu0
        %v465 = vadd.f32 0.0, %v464
        %v466 = vpop.f32.mrb[0].mxu0
        %v467 = vadd.f32 0.0, %v466
        %v468 = vpop.f32.mrb[0].mxu0
        %v469 = vpop.f32.mrb[0].mxu0
        %470 = vdwg.mxu0
        %s471 = scalar_lea.vmem %s336, 80 [#allocation2]
        %v472 = vld [vmem:[%s471] sm:$0xff]
        %v473 = vld [vmem:[%s471 + $0x8] sm:$0xff]
        %v474 = vld [vmem:[%s471 + $0x10] sm:$0xff]
        %v475 = vld [vmem:[%s471 + $0x18] sm:$0xff]
        %v476 = vld [vmem:[%s471 + $0x20] sm:$0xff]
        %v477 = vld [vmem:[%s471 + $0x28] sm:$0xff]
        %v478 = vld [vmem:[%s471 + $0x30] sm:$0xff]
        %v479 = vld [vmem:[%s471 + $0x38] sm:$0xff]
        %v480 = vld [vmem:[%s471 + $0x40] sm:$0xff]
        %v481 = vld [vmem:[%s471 + $0x48] sm:$0xff]
        %v492 = vunpack.c.l.b16 %v472
        %v493 = vunpack.c.h.b16 %v472
        %v494 = vunpack.c.l.b16 %v473
        %v495 = vunpack.c.h.b16 %v473
        %v496 = vunpack.c.l.b16 %v474
        %v497 = vunpack.c.h.b16 %v474
        %v498 = vunpack.c.l.b16 %v475
        %v499 = vunpack.c.h.b16 %v475
        %v500 = vunpack.c.l.b16 %v476
        %v501 = vunpack.c.h.b16 %v476
        %v502 = vunpack.c.l.b16 %v477
        %v503 = vunpack.c.h.b16 %v477
        %v504 = vunpack.c.l.b16 %v478
        %v505 = vunpack.c.h.b16 %v478
        %v506 = vunpack.c.l.b16 %v479
        %v507 = vunpack.c.h.b16 %v479
        %v508 = vunpack.c.l.b16 %v480
        %v509 = vunpack.c.h.b16 %v480
        %v510 = vunpack.c.l.b16 %v481
        %v511 = vunpack.c.h.b16 %v481
        %v512 = vpack.c.b16 %v494, %v492
        %v513 = vpack.c.b16 %v495, %v493
        %v514 = vpack.c.b16 %v498, %v496
        %v515 = vpack.c.b16 %v499, %v497
        %v516 = vpack.c.b16 %v502, %v500
        %v517 = vpack.c.b16 %v503, %v501
        %v518 = vpack.c.b16 %v506, %v504
        %v519 = vpack.c.b16 %v507, %v505
        %v520 = vpack.c.b16 %v510, %v508
        %v521 = vpack.c.b16 %v511, %v509
        %532 = vmatprep.subr.bf16.mxu0 %v513
        %533 = vmatpush1.bf16.msra.mxu0 %v512
        %534 = vmatprep.subr.bf16.mxu0 %v515
        %535 = vmatpush1.bf16.msra.mxu0 %v514
        %536 = vmatprep.subr.bf16.mxu0 %v517
        %537 = vmatpush1.bf16.msra.mxu0 %v516
        %538 = vmatprep.subr.bf16.mxu0 %v519
        %539 = vmatpush1.bf16.msra.mxu0 %v518
        %540 = vmatprep.subr.bf16.mxu0 %v521
        %541 = vmatpush1.bf16.msra.mxu0 %v520
        %542 = vmatprep.subr.bf16.mxu0 0
        %543 = vmatpush1.bf16.msra.mxu0 0
        %544 = vmatprep.subr.bf16.mxu0 0
        %545 = vmatpush1.bf16.msra.mxu0 0
        %546 = vmatprep.subr.bf16.mxu0 0
        %547 = vmatpush1.bf16.msra.mxu0 0
        %548 = vmatprep.subr.bf16.mxu0 0
        %549 = vmatpush1.bf16.msra.mxu0 0
        %550 = vmatprep.subr.bf16.mxu0 0
        %551 = vmatpush1.bf16.msra.mxu0 0
        %552 = vmatprep.subr.bf16.mxu0 0
        %553 = vmatpush1.bf16.msra.mxu0 0
        %554 = vmatprep.subr.bf16.mxu0 0
        %555 = vmatpush1.bf16.msra.mxu0 0
        %556 = vmatprep.subr.bf16.mxu0 0
        %557 = vmatpush1.bf16.msra.mxu0 0
        %558 = vmatprep.subr.bf16.mxu0 0
        %559 = vmatpush1.bf16.msra.mxu0 0
        %560 = vmatprep.subr.bf16.mxu0 0
        %561 = vmatpush1.bf16.msra.mxu0 0
        %562 = vmatprep.subr.bf16.mxu0 0
        %563 = vmatpush1.bf16.msra.mxu0 0
        %564 = vmatprep.mubr.bf16.mxu0 0
        %565 = vmatmul.mubr.bf16.gmra.mrb[0].mxu0 %v428
        %v566 = vpop.f32.mrb[0].mxu0
        %v567 = vadd.f32 0.0, %v566
        %v568 = vpop.f32.mrb[0].mxu0
        %v569 = vadd.f32 0.0, %v568
        %v570 = vpop.f32.mrb[0].mxu0
        %v571 = vpop.f32.mrb[0].mxu0
        %572 = vdwg.mxu0
        %v573 = vmax.f32 %v465, %v567
        %v574 = vmax.f32 %v467, %v569
        %s575 = scalar_lea.vmem %s336, 160 [#allocation2]
        %v576 = vld [vmem:[%s575] sm:$0xff]
        %v577 = vld [vmem:[%s575 + $0x8] sm:$0xff]
        %v578 = vld [vmem:[%s575 + $0x10] sm:$0xff]
        %v579 = vld [vmem:[%s575 + $0x18] sm:$0xff]
        %v580 = vld [vmem:[%s575 + $0x20] sm:$0xff]
        %v581 = vld [vmem:[%s575 + $0x28] sm:$0xff]
        %v582 = vld [vmem:[%s575 + $0x30] sm:$0xff]
        %v583 = vld [vmem:[%s575 + $0x38] sm:$0xff]
        %v584 = vld [vmem:[%s575 + $0x40] sm:$0xff]
        %v585 = vld [vmem:[%s575 + $0x48] sm:$0xff]
        %v596 = vunpack.c.l.b16 %v576
        %v597 = vunpack.c.h.b16 %v576
        %v598 = vunpack.c.l.b16 %v577
        %v599 = vunpack.c.h.b16 %v577
        %v600 = vunpack.c.l.b16 %v578
        %v601 = vunpack.c.h.b16 %v578
        %v602 = vunpack.c.l.b16 %v579
        %v603 = vunpack.c.h.b16 %v579
        %v604 = vunpack.c.l.b16 %v580
        %v605 = vunpack.c.h.b16 %v580
        %v606 = vunpack.c.l.b16 %v581
        %v607 = vunpack.c.h.b16 %v581
        %v608 = vunpack.c.l.b16 %v582
        %v609 = vunpack.c.h.b16 %v582
        %v610 = vunpack.c.l.b16 %v583
        %v611 = vunpack.c.h.b16 %v583
        %v612 = vunpack.c.l.b16 %v584
        %v613 = vunpack.c.h.b16 %v584
        %v614 = vunpack.c.l.b16 %v585
        %v615 = vunpack.c.h.b16 %v585
        %v616 = vpack.c.b16 %v598, %v596
        %v617 = vpack.c.b16 %v599, %v597
        %v618 = vpack.c.b16 %v602, %v600
        %v619 = vpack.c.b16 %v603, %v601
        %v620 = vpack.c.b16 %v606, %v604
        %v621 = vpack.c.b16 %v607, %v605
        %v622 = vpack.c.b16 %v610, %v608
        %v623 = vpack.c.b16 %v611, %v609
        %v624 = vpack.c.b16 %v614, %v612
        %v625 = vpack.c.b16 %v615, %v613
        %636 = vmatprep.subr.bf16.mxu0 %v617
        %637 = vmatpush1.bf16.msra.mxu0 %v616
        %638 = vmatprep.subr.bf16.mxu0 %v619
        %639 = vmatpush1.bf16.msra.mxu0 %v618
        %640 = vmatprep.subr.bf16.mxu0 %v621
        %641 = vmatpush1.bf16.msra.mxu0 %v620
        %642 = vmatprep.subr.bf16.mxu0 %v623
        %643 = vmatpush1.bf16.msra.mxu0 %v622
        %644 = vmatprep.subr.bf16.mxu0 %v625
        %645 = vmatpush1.bf16.msra.mxu0 %v624
        %646 = vmatprep.subr.bf16.mxu0 0
        %647 = vmatpush1.bf16.msra.mxu0 0
        %648 = vmatprep.subr.bf16.mxu0 0
        %649 = vmatpush1.bf16.msra.mxu0 0
        %650 = vmatprep.subr.bf16.mxu0 0
        %651 = vmatpush1.bf16.msra.mxu0 0
        %652 = vmatprep.subr.bf16.mxu0 0
        %653 = vmatpush1.bf16.msra.mxu0 0
        %654 = vmatprep.subr.bf16.mxu0 0
        %655 = vmatpush1.bf16.msra.mxu0 0
        %656 = vmatprep.subr.bf16.mxu0 0
        %657 = vmatpush1.bf16.msra.mxu0 0
        %658 = vmatprep.subr.bf16.mxu0 0
        %659 = vmatpush1.bf16.msra.mxu0 0
        %660 = vmatprep.subr.bf16.mxu0 0
        %661 = vmatpush1.bf16.msra.mxu0 0
        %662 = vmatprep.subr.bf16.mxu0 0
        %663 = vmatpush1.bf16.msra.mxu0 0
        %664 = vmatprep.subr.bf16.mxu0 0
        %665 = vmatpush1.bf16.msra.mxu0 0
        %666 = vmatprep.subr.bf16.mxu0 0
        %667 = vmatpush1.bf16.msra.mxu0 0
        %668 = vmatprep.mubr.bf16.mxu0 0
        %669 = vmatmul.mubr.bf16.gmra.mrb[0].mxu0 %v428
        %v670 = vpop.f32.mrb[0].mxu0
        %v671 = vadd.f32 0.0, %v670
        %v672 = vpop.f32.mrb[0].mxu0
        %v673 = vadd.f32 0.0, %v672
        %v674 = vpop.f32.mrb[0].mxu0
        %v675 = vpop.f32.mrb[0].mxu0
        %676 = vdwg.mxu0
        %v677 = vmax.f32 %v573, %v671
        %v678 = vmax.f32 %v574, %v673
        %s679 = scalar_lea.vmem %s336, 240 [#allocation2]
        %v680 = vld [vmem:[%s679] sm:$0xff]
        %v681 = vld [vmem:[%s679 + $0x8] sm:$0xff]
        %v682 = vld [vmem:[%s679 + $0x10] sm:$0xff]
        %v683 = vld [vmem:[%s679 + $0x18] sm:$0xff]
        %v684 = vld [vmem:[%s679 + $0x20] sm:$0xff]
        %v685 = vld [vmem:[%s679 + $0x28] sm:$0xff]
        %v686 = vld [vmem:[%s679 + $0x30] sm:$0xff]
        %v687 = vld [vmem:[%s679 + $0x38] sm:$0xff]
        %v688 = vld [vmem:[%s679 + $0x40] sm:$0xff]
        %v689 = vld [vmem:[%s679 + $0x48] sm:$0xff]
        %v700 = vunpack.c.l.b16 %v680
        %v701 = vunpack.c.h.b16 %v680
        %v702 = vunpack.c.l.b16 %v681
        %v703 = vunpack.c.h.b16 %v681
        %v704 = vunpack.c.l.b16 %v682
        %v705 = vunpack.c.h.b16 %v682
        %v706 = vunpack.c.l.b16 %v683
        %v707 = vunpack.c.h.b16 %v683
        %v708 = vunpack.c.l.b16 %v684
        %v709 = vunpack.c.h.b16 %v684
        %v710 = vunpack.c.l.b16 %v685
        %v711 = vunpack.c.h.b16 %v685
        %v712 = vunpack.c.l.b16 %v686
        %v713 = vunpack.c.h.b16 %v686
        %v714 = vunpack.c.l.b16 %v687
        %v715 = vunpack.c.h.b16 %v687
        %v716 = vunpack.c.l.b16 %v688
        %v717 = vunpack.c.h.b16 %v688
        %v718 = vunpack.c.l.b16 %v689
        %v719 = vunpack.c.h.b16 %v689
        %v720 = vpack.c.b16 %v702, %v700
        %v721 = vpack.c.b16 %v703, %v701
        %v722 = vpack.c.b16 %v706, %v704
        %v723 = vpack.c.b16 %v707, %v705
        %v724 = vpack.c.b16 %v710, %v708
        %v725 = vpack.c.b16 %v711, %v709
        %v726 = vpack.c.b16 %v714, %v712
        %v727 = vpack.c.b16 %v715, %v713
        %v728 = vpack.c.b16 %v718, %v716
        %v729 = vpack.c.b16 %v719, %v717
        %740 = vmatprep.subr.bf16.mxu0 %v721
        %741 = vmatpush1.bf16.msra.mxu0 %v720
        %742 = vmatprep.subr.bf16.mxu0 %v723
        %743 = vmatpush1.bf16.msra.mxu0 %v722
        %744 = vmatprep.subr.bf16.mxu0 %v725
        %745 = vmatpush1.bf16.msra.mxu0 %v724
        %746 = vmatprep.subr.bf16.mxu0 %v727
        %747 = vmatpush1.bf16.msra.mxu0 %v726
        %748 = vmatprep.subr.bf16.mxu0 %v729
        %749 = vmatpush1.bf16.msra.mxu0 %v728
        %750 = vmatprep.subr.bf16.mxu0 0
        %751 = vmatpush1.bf16.msra.mxu0 0
        %752 = vmatprep.subr.bf16.mxu0 0
        %753 = vmatpush1.bf16.msra.mxu0 0
        %754 = vmatprep.subr.bf16.mxu0 0
        %755 = vmatpush1.bf16.msra.mxu0 0
        %756 = vmatprep.subr.bf16.mxu0 0
        %757 = vmatpush1.bf16.msra.mxu0 0
        %758 = vmatprep.subr.bf16.mxu0 0
        %759 = vmatpush1.bf16.msra.mxu0 0
        %760 = vmatprep.subr.bf16.mxu0 0
        %761 = vmatpush1.bf16.msra.mxu0 0
        %762 = vmatprep.subr.bf16.mxu0 0
        %763 = vmatpush1.bf16.msra.mxu0 0
        %764 = vmatprep.subr.bf16.mxu0 0
        %765 = vmatpush1.bf16.msra.mxu0 0
        %766 = vmatprep.subr.bf16.mxu0 0
        %767 = vmatpush1.bf16.msra.mxu0 0
        %768 = vmatprep.subr.bf16.mxu0 0
        %769 = vmatpush1.bf16.msra.mxu0 0
        %770 = vmatprep.subr.bf16.mxu0 0
        %771 = vmatpush1.bf16.msra.mxu0 0
        %772 = vmatprep.mubr.bf16.mxu0 0
        %773 = vmatmul.mubr.bf16.gmra.mrb[0].mxu0 %v428
        %v774 = vpop.f32.mrb[0].mxu0
        %v775 = vadd.f32 0.0, %v774
        %v776 = vpop.f32.mrb[0].mxu0
        %v777 = vadd.f32 0.0, %v776
        %v778 = vpop.f32.mrb[0].mxu0
        %v779 = vpop.f32.mrb[0].mxu0
        %780 = vdwg.mxu0
        %v781 = vmax.f32 %v677, %v775
        %v782 = vmax.f32 %v678, %v777
        %v783 = vld [vmem:[%s1] sm:$0xff]
        %785 = vset.pattern.permute.xlu0 0
        %786 = vperm.xlu0 %785, %v783
        %v787 = vpop.permute.xlu0 %786
        %v789 = vadd.f32 %v781, %v787
        %v790 = vadd.f32 %v782, %v787
        %v791 = vmax.f32 %v789, 0.0
        %v792 = vmax.f32 %v790, 0.0
        %v793 = vpack.c.bf16 %v791, %v791
        %v794 = vpack.c.bf16 %v792, %v792
        %v797 = vunpack.c.l.b16 %v793
        %v798 = vunpack.c.l.b16 %v794
        %v799 = vpack.c.b16 %v798, %v797
        %801 = vst [vmem:[%s362] sm:$0xff] %v799
        %s802 = smul.u32 2, %s14
        %p803 = scmp.lt.s32.totalorder %s802, 3
        %s804 = scalar_select %p803, %s802, 3
        %s805 = smul.addr %s804, 4
        %s806 = scalar_lea.vmem %s3, %s805
        // Predicated region
        $region71: #{lenet_forward.3} parent=65 // pred_check
          %p807 = pneg %p100
        $region72: #{lenet_forward.3} parent=65 // pred_check_branch
          %809 = sbr.rel (%p807) target = $region74
        $region73: #{lenet_forward.3} parent=65 // pred_region
          %s810 = smul.u32 2, %s14
        $region74: #{lenet_forward.3} parent=65 // pred_fallthru
          _
      $region66: #{lenet_forward.3} parent=5 // pred_fallthru
        _
      %p811 = scmp.le.s32.totalorder 2, %s9
      // Predicated region
      $region75: #{lenet_forward.3} parent=5 // pred_check
        %p812 = pneg %p811
      $region76: #{lenet_forward.3} parent=5 // pred_check_branch
        %814 = sbr.rel (%p812) target = $region78
      $region77: #{lenet_forward.3} parent=5 // pred_region
        %s815 = ssub.s32 %s9, 2
        // Predicated region
        $region79: #{lenet_forward.3} parent=77 // pred_check
          %p816 = pneg %p106
        $region80: #{lenet_forward.3} parent=77 // pred_check_branch
          %818 = sbr.rel (%p816) target = $region82
        $region81: #{lenet_forward.3} parent=77 // pred_region
          %s819 = smul.u32 2, %s15
          %p820 = scmp.lt.s32.totalorder %s819, 3
          %s821 = scalar_select %p820, %s819, 3
          %s822 = smul.addr %s821, 4
          %s823 = scalar_lea.vmem %s3, %s822
        $region82: #{lenet_forward.3} parent=77 // pred_fallthru
          _
      $region78: #{lenet_forward.3} parent=5 // pred_fallthru
        _
    $region6: #{lenet_forward.3} parent=1 // loop_footer
      %s13 = sadd.s32 1, %s9
    $region7: #{lenet_forward.3} parent=1 // loop_footer_branch
      %8 = sbr.rel target = $region3
    $region8: #{lenet_forward.3} parent=1 // loop_exit
      _

// kernel: lenet_forward.4
$region0: #{lenet_forward.4}
  #allocation0 [shape = 'u32[]', space=smem, size = 0x4, offset = 0x4, fixed_abs, tag = 'smem constant byte address 0x4 - core index']
  #allocation1 [shape = 'u32[144,128]{1,0:T(1,128)}', space=vmem, size = 0x12000, scoped, tag = 'internal scratch']
  %s0 = inlined_call_operand.vmem [shape: bf16[16,208], index: 0, kind: input, shape index: {}]
  %s1 = inlined_call_operand.vmem [shape: f32[16,1], index: 1, kind: input, shape index: {}]
  %s2 = inlined_call_operand.vmem [shape: bf16[4,208,128], index: 2, kind: input, shape index: {}]
  %s3 = inlined_call_operand.vmem [shape: bf16[16,128], index: 3, kind: output, shape index: {}]
  %s4 = sld [smem:[#allocation0]]
  $region22: #{lenet_forward.4} parent=0
    _
  %s6 = ssub.s32 1, %s4
  %s7 = scalar_select 0, %s6, %s4
  // Predicated region
  $region2: #{lenet_forward.4} parent=0 // pred_check
    _
  $region3: #{lenet_forward.4} parent=0 // pred_check_branch
    %9 = sbr.rel (0) target = $region5
  $region4: #{lenet_forward.4} parent=0 // pred_region
    _
  $region5: #{lenet_forward.4} parent=0 // pred_fallthru
    _
  // Predicated region
  $region6: #{lenet_forward.4} parent=0 // pred_check
    _
  $region7: #{lenet_forward.4} parent=0 // pred_check_branch
    %11 = sbr.rel (0) target = $region9
  $region8: #{lenet_forward.4} parent=0 // pred_region
    _
  $region9: #{lenet_forward.4} parent=0 // pred_fallthru
    _
  // Predicated region
  $region10: #{lenet_forward.4} parent=0 // pred_check
    _
  $region11: #{lenet_forward.4} parent=0 // pred_check_branch
    %13 = sbr.rel (0) target = $region13
  $region12: #{lenet_forward.4} parent=0 // pred_region
    _
  $region13: #{lenet_forward.4} parent=0 // pred_fallthru
    _
  %v15 = vld [vmem:[%s0] sm:$0xff]
  %v16 = vld [vmem:[%s0 + $0x8] sm:$0xff]
  %v17 = vld [vmem:[%s2] sm:$0xf]
  %v18 = vld [vmem:[%s2 + $0x4] sm:$0xf]
  %v19 = vld [vmem:[%s2 + $0x8] sm:$0xf]
  %v20 = vld [vmem:[%s2 + $0xc] sm:$0xf]
  %v21 = vld [vmem:[%s2 + $0x10] sm:$0xf]
  %v22 = vld [vmem:[%s2 + $0x14] sm:$0xf]
  %v23 = vld [vmem:[%s2 + $0x18] sm:$0xf]
  %v24 = vld [vmem:[%s2 + $0x1c] sm:$0xf]
  %v25 = vld [vmem:[%s2 + $0x20] sm:$0xf]
  %v26 = vld [vmem:[%s2 + $0x24] sm:$0xf]
  %v27 = vld [vmem:[%s2 + $0x28] sm:$0xf]
  %v28 = vld [vmem:[%s2 + $0x2c] sm:$0xf]
  %v29 = vld [vmem:[%s2 + $0x30] sm:$0xf]
  %v30 = vld [vmem:[%s2 + $0x34] sm:$0xf]
  %v31 = vld [vmem:[%s2 + $0x38] sm:$0xf]
  %v32 = vld [vmem:[%s2 + $0x3c] sm:$0xf]
  %v33 = vld [vmem:[%s2 + $0x40] sm:$0xf]
  %v34 = vld [vmem:[%s2 + $0x44] sm:$0xf]
  %v35 = vld [vmem:[%s2 + $0x48] sm:$0xf]
  %v36 = vld [vmem:[%s2 + $0x4c] sm:$0xf]
  %v37 = vld [vmem:[%s2 + $0x50] sm:$0xf]
  %v38 = vld [vmem:[%s2 + $0x54] sm:$0xf]
  %v39 = vld [vmem:[%s2 + $0x58] sm:$0xf]
  %v40 = vld [vmem:[%s2 + $0x5c] sm:$0xf]
  %v41 = vld [vmem:[%s2 + $0x60] sm:$0xf]
  %v42 = vld [vmem:[%s2 + $0x64] sm:$0xf]
  %v45 = vunpack.c.l.b16 %v15
  %v46 = vunpack.c.h.b16 %v15
  %v47 = vunpack.c.l.b16 %v16
  %v48 = vunpack.c.h.b16 %v16
  %v49 = vpack.c.b16 %v47, %v45
  %v50 = vpack.c.b16 %v48, %v46
  %v78 = vunpack.c.l.b16 %v17
  %v79 = vunpack.c.l.b16 %v18
  %v80 = vunpack.c.l.b16 %v19
  %v81 = vunpack.c.l.b16 %v20
  %v82 = vunpack.c.l.b16 %v21
  %v83 = vunpack.c.l.b16 %v22
  %v84 = vunpack.c.l.b16 %v23
  %v85 = vunpack.c.l.b16 %v24
  %v86 = vunpack.c.l.b16 %v25
  %v87 = vunpack.c.l.b16 %v26
  %v88 = vunpack.c.l.b16 %v27
  %v89 = vunpack.c.l.b16 %v28
  %v90 = vunpack.c.l.b16 %v29
  %v91 = vunpack.c.l.b16 %v30
  %v92 = vunpack.c.l.b16 %v31
  %v93 = vunpack.c.l.b16 %v32
  %v94 = vunpack.c.l.b16 %v33
  %v95 = vunpack.c.l.b16 %v34
  %v96 = vunpack.c.l.b16 %v35
  %v97 = vunpack.c.l.b16 %v36
  %v98 = vunpack.c.l.b16 %v37
  %v99 = vunpack.c.l.b16 %v38
  %v100 = vunpack.c.l.b16 %v39
  %v101 = vunpack.c.l.b16 %v40
  %v102 = vunpack.c.l.b16 %v41
  %v103 = vunpack.c.l.b16 %v42
  %v104 = vpack.c.b16 %v79, %v78
  %v105 = vpack.c.b16 %v81, %v80
  %v106 = vpack.c.b16 %v83, %v82
  %v107 = vpack.c.b16 %v85, %v84
  %v108 = vpack.c.b16 %v87, %v86
  %v109 = vpack.c.b16 %v89, %v88
  %v110 = vpack.c.b16 %v91, %v90
  %v111 = vpack.c.b16 %v93, %v92
  %v112 = vpack.c.b16 %v95, %v94
  %v113 = vpack.c.b16 %v97, %v96
  %v114 = vpack.c.b16 %v99, %v98
  %v115 = vpack.c.b16 %v101, %v100
  %v116 = vpack.c.b16 %v103, %v102
  %vm130 = vcmask 654336
  %v132 = vsel %vm130, %v50, 0
  %134 = vmatprep.subr.bf16.mxu0 0
  %135 = vmatpush1.bf16.msra.mxu0 %v104
  %136 = vmatprep.subr.bf16.mxu0 0
  %137 = vmatpush1.bf16.msra.mxu0 %v105
  %138 = vmatprep.subr.bf16.mxu0 0
  %139 = vmatpush1.bf16.msra.mxu0 %v106
  %140 = vmatprep.subr.bf16.mxu0 0
  %141 = vmatpush1.bf16.msra.mxu0 %v107
  %142 = vmatprep.subr.bf16.mxu0 0
  %143 = vmatpush1.bf16.msra.mxu0 %v108
  %144 = vmatprep.subr.bf16.mxu0 0
  %145 = vmatpush1.bf16.msra.mxu0 %v109
  %146 = vmatprep.subr.bf16.mxu0 0
  %147 = vmatpush1.bf16.msra.mxu0 %v110
  %148 = vmatprep.subr.bf16.mxu0 0
  %149 = vmatpush1.bf16.msra.mxu0 %v111
  %150 = vmatprep.subr.bf16.mxu0 0
  %151 = vmatpush1.bf16.msra.mxu0 %v112
  %152 = vmatprep.subr.bf16.mxu0 0
  %153 = vmatpush1.bf16.msra.mxu0 %v113
  %154 = vmatprep.subr.bf16.mxu0 0
  %155 = vmatpush1.bf16.msra.mxu0 %v114
  %156 = vmatprep.subr.bf16.mxu0 0
  %157 = vmatpush1.bf16.msra.mxu0 %v115
  %158 = vmatprep.subr.bf16.mxu0 0
  %159 = vmatpush1.bf16.msra.mxu0 %v116
  %160 = vmatprep.subr.bf16.mxu0 0
  %161 = vmatpush1.bf16.msra.mxu0 0
  %162 = vmatprep.subr.bf16.mxu0 0
  %163 = vmatpush1.bf16.msra.mxu0 0
  %164 = vmatprep.subr.bf16.mxu0 0
  %165 = vmatpush1.bf16.msra.mxu0 0
  %166 = vmatprep.mubr.bf16.mxu0 %v132
  %167 = vmatmul.mubr.bf16.gmra.mrb[0].mxu0 %v49
  %v168 = vpop.f32.mrb[0].mxu0
  %v169 = vadd.f32 0.0, %v168
  %v170 = vpop.f32.mrb[0].mxu0
  %v171 = vpop.f32.mrb[0].mxu0
  %v172 = vadd.f32 0.0, %v171
  %v173 = vpop.f32.mrb[0].mxu0
  %174 = vdwg.mxu0
  %s175 = scalar_lea.vmem %s2, 104
  %v176 = vld [vmem:[%s175] sm:$0xf]
  %v177 = vld [vmem:[%s175 + $0x4] sm:$0xf]
  %v178 = vld [vmem:[%s175 + $0x8] sm:$0xf]
  %v179 = vld [vmem:[%s175 + $0xc] sm:$0xf]
  %v180 = vld [vmem:[%s175 + $0x10] sm:$0xf]
  %v181 = vld [vmem:[%s175 + $0x14] sm:$0xf]
  %v182 = vld [vmem:[%s175 + $0x18] sm:$0xf]
  %v183 = vld [vmem:[%s175 + $0x1c] sm:$0xf]
  %v184 = vld [vmem:[%s175 + $0x20] sm:$0xf]
  %v185 = vld [vmem:[%s175 + $0x24] sm:$0xf]
  %v186 = vld [vmem:[%s175 + $0x28] sm:$0xf]
  %v187 = vld [vmem:[%s175 + $0x2c] sm:$0xf]
  %v188 = vld [vmem:[%s175 + $0x30] sm:$0xf]
  %v189 = vld [vmem:[%s175 + $0x34] sm:$0xf]
  %v190 = vld [vmem:[%s175 + $0x38] sm:$0xf]
  %v191 = vld [vmem:[%s175 + $0x3c] sm:$0xf]
  %v192 = vld [vmem:[%s175 + $0x40] sm:$0xf]
  %v193 = vld [vmem:[%s175 + $0x44] sm:$0xf]
  %v194 = vld [vmem:[%s175 + $0x48] sm:$0xf]
  %v195 = vld [vmem:[%s175 + $0x4c] sm:$0xf]
  %v196 = vld [vmem:[%s175 + $0x50] sm:$0xf]
  %v197 = vld [vmem:[%s175 + $0x54] sm:$0xf]
  %v198 = vld [vmem:[%s175 + $0x58] sm:$0xf]
  %v199 = vld [vmem:[%s175 + $0x5c] sm:$0xf]
  %v200 = vld [vmem:[%s175 + $0x60] sm:$0xf]
  %v201 = vld [vmem:[%s175 + $0x64] sm:$0xf]
  %v228 = vunpack.c.l.b16 %v176
  %v229 = vunpack.c.l.b16 %v177
  %v230 = vunpack.c.l.b16 %v178
  %v231 = vunpack.c.l.b16 %v179
  %v232 = vunpack.c.l.b16 %v180
  %v233 = vunpack.c.l.b16 %v181
  %v234 = vunpack.c.l.b16 %v182
  %v235 = vunpack.c.l.b16 %v183
  %v236 = vunpack.c.l.b16 %v184
  %v237 = vunpack.c.l.b16 %v185
  %v238 = vunpack.c.l.b16 %v186
  %v239 = vunpack.c.l.b16 %v187
  %v240 = vunpack.c.l.b16 %v188
  %v241 = vunpack.c.l.b16 %v189
  %v242 = vunpack.c.l.b16 %v190
  %v243 = vunpack.c.l.b16 %v191
  %v244 = vunpack.c.l.b16 %v192
  %v245 = vunpack.c.l.b16 %v193
  %v246 = vunpack.c.l.b16 %v194
  %v247 = vunpack.c.l.b16 %v195
  %v248 = vunpack.c.l.b16 %v196
  %v249 = vunpack.c.l.b16 %v197
  %v250 = vunpack.c.l.b16 %v198
  %v251 = vunpack.c.l.b16 %v199
  %v252 = vunpack.c.l.b16 %v200
  %v253 = vunpack.c.l.b16 %v201
  %v254 = vpack.c.b16 %v229, %v228
  %v255 = vpack.c.b16 %v231, %v230
  %v256 = vpack.c.b16 %v233, %v232
  %v257 = vpack.c.b16 %v235, %v234
  %v258 = vpack.c.b16 %v237, %v236
  %v259 = vpack.c.b16 %v239, %v238
  %v260 = vpack.c.b16 %v241, %v240
  %v261 = vpack.c.b16 %v243, %v242
  %v262 = vpack.c.b16 %v245, %v244
  %v263 = vpack.c.b16 %v247, %v246
  %v264 = vpack.c.b16 %v249, %v248
  %v265 = vpack.c.b16 %v251, %v250
  %v266 = vpack.c.b16 %v253, %v252
  %280 = vmatprep.subr.bf16.mxu0 0
  %281 = vmatpush1.bf16.msra.mxu0 %v254
  %282 = vmatprep.subr.bf16.mxu0 0
  %283 = vmatpush1.bf16.msra.mxu0 %v255
  %284 = vmatprep.subr.bf16.mxu0 0
  %285 = vmatpush1.bf16.msra.mxu0 %v256
  %286 = vmatprep.subr.bf16.mxu0 0
  %287 = vmatpush1.bf16.msra.mxu0 %v257
  %288 = vmatprep.subr.bf16.mxu0 0
  %289 = vmatpush1.bf16.msra.mxu0 %v258
  %290 = vmatprep.subr.bf16.mxu0 0
  %291 = vmatpush1.bf16.msra.mxu0 %v259
  %292 = vmatprep.subr.bf16.mxu0 0
  %293 = vmatpush1.bf16.msra.mxu0 %v260
  %294 = vmatprep.subr.bf16.mxu0 0
  %295 = vmatpush1.bf16.msra.mxu0 %v261
  %296 = vmatprep.subr.bf16.mxu0 0
  %297 = vmatpush1.bf16.msra.mxu0 %v262
  %298 = vmatprep.subr.bf16.mxu0 0
  %299 = vmatpush1.bf16.msra.mxu0 %v263
  %300 = vmatprep.subr.bf16.mxu0 0
  %301 = vmatpush1.bf16.msra.mxu0 %v264
  %302 = vmatprep.subr.bf16.mxu0 0
  %303 = vmatpush1.bf16.msra.mxu0 %v265
  %304 = vmatprep.subr.bf16.mxu0 0
  %305 = vmatpush1.bf16.msra.mxu0 %v266
  %306 = vmatprep.subr.bf16.mxu0 0
  %307 = vmatpush1.bf16.msra.mxu0 0
  %308 = vmatprep.subr.bf16.mxu0 0
  %309 = vmatpush1.bf16.msra.mxu0 0
  %310 = vmatprep.subr.bf16.mxu0 0
  %311 = vmatpush1.bf16.msra.mxu0 0
  %312 = vmatprep.mubr.bf16.mxu0 %v132
  %313 = vmatmul.mubr.bf16.gmra.mrb[0].mxu0 %v49
  %v314 = vpop.f32.mrb[0].mxu0
  %v315 = vadd.f32 0.0, %v314
  %v316 = vpop.f32.mrb[0].mxu0
  %v317 = vpop.f32.mrb[0].mxu0
  %v318 = vadd.f32 0.0, %v317
  %v319 = vpop.f32.mrb[0].mxu0
  %320 = vdwg.mxu0
  %v321 = vmax.f32 %v169, %v315
  %v322 = vmax.f32 %v172, %v318
  %s323 = scalar_lea.vmem %s2, 208
  %v324 = vld [vmem:[%s323] sm:$0xf]
  %v325 = vld [vmem:[%s323 + $0x4] sm:$0xf]
  %v326 = vld [vmem:[%s323 + $0x8] sm:$0xf]
  %v327 = vld [vmem:[%s323 + $0xc] sm:$0xf]
  %v328 = vld [vmem:[%s323 + $0x10] sm:$0xf]
  %v329 = vld [vmem:[%s323 + $0x14] sm:$0xf]
  %v330 = vld [vmem:[%s323 + $0x18] sm:$0xf]
  %v331 = vld [vmem:[%s323 + $0x1c] sm:$0xf]
  %v332 = vld [vmem:[%s323 + $0x20] sm:$0xf]
  %v333 = vld [vmem:[%s323 + $0x24] sm:$0xf]
  %v334 = vld [vmem:[%s323 + $0x28] sm:$0xf]
  %v335 = vld [vmem:[%s323 + $0x2c] sm:$0xf]
  %v336 = vld [vmem:[%s323 + $0x30] sm:$0xf]
  %v337 = vld [vmem:[%s323 + $0x34] sm:$0xf]
  %v338 = vld [vmem:[%s323 + $0x38] sm:$0xf]
  %v339 = vld [vmem:[%s323 + $0x3c] sm:$0xf]
  %v340 = vld [vmem:[%s323 + $0x40] sm:$0xf]
  %v341 = vld [vmem:[%s323 + $0x44] sm:$0xf]
  %v342 = vld [vmem:[%s323 + $0x48] sm:$0xf]
  %v343 = vld [vmem:[%s323 + $0x4c] sm:$0xf]
  %v344 = vld [vmem:[%s323 + $0x50] sm:$0xf]
  %v345 = vld [vmem:[%s323 + $0x54] sm:$0xf]
  %v346 = vld [vmem:[%s323 + $0x58] sm:$0xf]
  %v347 = vld [vmem:[%s323 + $0x5c] sm:$0xf]
  %v348 = vld [vmem:[%s323 + $0x60] sm:$0xf]
  %v349 = vld [vmem:[%s323 + $0x64] sm:$0xf]
  %v376 = vunpack.c.l.b16 %v324
  %v377 = vunpack.c.l.b16 %v325
  %v378 = vunpack.c.l.b16 %v326
  %v379 = vunpack.c.l.b16 %v327
  %v380 = vunpack.c.l.b16 %v328
  %v381 = vunpack.c.l.b16 %v329
  %v382 = vunpack.c.l.b16 %v330
  %v383 = vunpack.c.l.b16 %v331
  %v384 = vunpack.c.l.b16 %v332
  %v385 = vunpack.c.l.b16 %v333
  %v386 = vunpack.c.l.b16 %v334
  %v387 = vunpack.c.l.b16 %v335
  %v388 = vunpack.c.l.b16 %v336
  %v389 = vunpack.c.l.b16 %v337
  %v390 = vunpack.c.l.b16 %v338
  %v391 = vunpack.c.l.b16 %v339
  %v392 = vunpack.c.l.b16 %v340
  %v393 = vunpack.c.l.b16 %v341
  %v394 = vunpack.c.l.b16 %v342
  %v395 = vunpack.c.l.b16 %v343
  %v396 = vunpack.c.l.b16 %v344
  %v397 = vunpack.c.l.b16 %v345
  %v398 = vunpack.c.l.b16 %v346
  %v399 = vunpack.c.l.b16 %v347
  %v400 = vunpack.c.l.b16 %v348
  %v401 = vunpack.c.l.b16 %v349
  %v402 = vpack.c.b16 %v377, %v376
  %v403 = vpack.c.b16 %v379, %v378
  %v404 = vpack.c.b16 %v381, %v380
  %v405 = vpack.c.b16 %v383, %v382
  %v406 = vpack.c.b16 %v385, %v384
  %v407 = vpack.c.b16 %v387, %v386
  %v408 = vpack.c.b16 %v389, %v388
  %v409 = vpack.c.b16 %v391, %v390
  %v410 = vpack.c.b16 %v393, %v392
  %v411 = vpack.c.b16 %v395, %v394
  %v412 = vpack.c.b16 %v397, %v396
  %v413 = vpack.c.b16 %v399, %v398
  %v414 = vpack.c.b16 %v401, %v400
  %428 = vmatprep.subr.bf16.mxu0 0
  %429 = vmatpush1.bf16.msra.mxu0 %v402
  %430 = vmatprep.subr.bf16.mxu0 0
  %431 = vmatpush1.bf16.msra.mxu0 %v403
  %432 = vmatprep.subr.bf16.mxu0 0
  %433 = vmatpush1.bf16.msra.mxu0 %v404
  %434 = vmatprep.subr.bf16.mxu0 0
  %435 = vmatpush1.bf16.msra.mxu0 %v405
  %436 = vmatprep.subr.bf16.mxu0 0
  %437 = vmatpush1.bf16.msra.mxu0 %v406
  %438 = vmatprep.subr.bf16.mxu0 0
  %439 = vmatpush1.bf16.msra.mxu0 %v407
  %440 = vmatprep.subr.bf16.mxu0 0
  %441 = vmatpush1.bf16.msra.mxu0 %v408
  %442 = vmatprep.subr.bf16.mxu0 0
  %443 = vmatpush1.bf16.msra.mxu0 %v409
  %444 = vmatprep.subr.bf16.mxu0 0
  %445 = vmatpush1.bf16.msra.mxu0 %v410
  %446 = vmatprep.subr.bf16.mxu0 0
  %447 = vmatpush1.bf16.msra.mxu0 %v411
  %448 = vmatprep.subr.bf16.mxu0 0
  %449 = vmatpush1.bf16.msra.mxu0 %v412
  %450 = vmatprep.subr.bf16.mxu0 0
  %451 = vmatpush1.bf16.msra.mxu0 %v413
  %452 = vmatprep.subr.bf16.mxu0 0
  %453 = vmatpush1.bf16.msra.mxu0 %v414
  %454 = vmatprep.subr.bf16.mxu0 0
  %455 = vmatpush1.bf16.msra.mxu0 0
  %456 = vmatprep.subr.bf16.mxu0 0
  %457 = vmatpush1.bf16.msra.mxu0 0
  %458 = vmatprep.subr.bf16.mxu0 0
  %459 = vmatpush1.bf16.msra.mxu0 0
  %460 = vmatprep.mubr.bf16.mxu0 %v132
  %461 = vmatmul.mubr.bf16.gmra.mrb[0].mxu0 %v49
  %v462 = vpop.f32.mrb[0].mxu0
  %v463 = vadd.f32 0.0, %v462
  %v464 = vpop.f32.mrb[0].mxu0
  %v465 = vpop.f32.mrb[0].mxu0
  %v466 = vadd.f32 0.0, %v465
  %v467 = vpop.f32.mrb[0].mxu0
  %468 = vdwg.mxu0
  %v469 = vmax.f32 %v321, %v463
  %v470 = vmax.f32 %v322, %v466
  %s471 = scalar_lea.vmem %s2, 312
  %v472 = vld [vmem:[%s471] sm:$0xf]
  %v473 = vld [vmem:[%s471 + $0x4] sm:$0xf]
  %v474 = vld [vmem:[%s471 + $0x8] sm:$0xf]
  %v475 = vld [vmem:[%s471 + $0xc] sm:$0xf]
  %v476 = vld [vmem:[%s471 + $0x10] sm:$0xf]
  %v477 = vld [vmem:[%s471 + $0x14] sm:$0xf]
  %v478 = vld [vmem:[%s471 + $0x18] sm:$0xf]
  %v479 = vld [vmem:[%s471 + $0x1c] sm:$0xf]
  %v480 = vld [vmem:[%s471 + $0x20] sm:$0xf]
  %v481 = vld [vmem:[%s471 + $0x24] sm:$0xf]
  %v482 = vld [vmem:[%s471 + $0x28] sm:$0xf]
  %v483 = vld [vmem:[%s471 + $0x2c] sm:$0xf]
  %v484 = vld [vmem:[%s471 + $0x30] sm:$0xf]
  %v485 = vld [vmem:[%s471 + $0x34] sm:$0xf]
  %v486 = vld [vmem:[%s471 + $0x38] sm:$0xf]
  %v487 = vld [vmem:[%s471 + $0x3c] sm:$0xf]
  %v488 = vld [vmem:[%s471 + $0x40] sm:$0xf]
  %v489 = vld [vmem:[%s471 + $0x44] sm:$0xf]
  %v490 = vld [vmem:[%s471 + $0x48] sm:$0xf]
  %v491 = vld [vmem:[%s471 + $0x4c] sm:$0xf]
  %v492 = vld [vmem:[%s471 + $0x50] sm:$0xf]
  %v493 = vld [vmem:[%s471 + $0x54] sm:$0xf]
  %v494 = vld [vmem:[%s471 + $0x58] sm:$0xf]
  %v495 = vld [vmem:[%s471 + $0x5c] sm:$0xf]
  %v496 = vld [vmem:[%s471 + $0x60] sm:$0xf]
  %v497 = vld [vmem:[%s471 + $0x64] sm:$0xf]
  %v524 = vunpack.c.l.b16 %v472
  %v525 = vunpack.c.l.b16 %v473
  %v526 = vunpack.c.l.b16 %v474
  %v527 = vunpack.c.l.b16 %v475
  %v528 = vunpack.c.l.b16 %v476
  %v529 = vunpack.c.l.b16 %v477
  %v530 = vunpack.c.l.b16 %v478
  %v531 = vunpack.c.l.b16 %v479
  %v532 = vunpack.c.l.b16 %v480
  %v533 = vunpack.c.l.b16 %v481
  %v534 = vunpack.c.l.b16 %v482
  %v535 = vunpack.c.l.b16 %v483
  %v536 = vunpack.c.l.b16 %v484
  %v537 = vunpack.c.l.b16 %v485
  %v538 = vunpack.c.l.b16 %v486
  %v539 = vunpack.c.l.b16 %v487
  %v540 = vunpack.c.l.b16 %v488
  %v541 = vunpack.c.l.b16 %v489
  %v542 = vunpack.c.l.b16 %v490
  %v543 = vunpack.c.l.b16 %v491
  %v544 = vunpack.c.l.b16 %v492
  %v545 = vunpack.c.l.b16 %v493
  %v546 = vunpack.c.l.b16 %v494
  %v547 = vunpack.c.l.b16 %v495
  %v548 = vunpack.c.l.b16 %v496
  %v549 = vunpack.c.l.b16 %v497
  %v550 = vpack.c.b16 %v525, %v524
  %v551 = vpack.c.b16 %v527, %v526
  %v552 = vpack.c.b16 %v529, %v528
  %v553 = vpack.c.b16 %v531, %v530
  %v554 = vpack.c.b16 %v533, %v532
  %v555 = vpack.c.b16 %v535, %v534
  %v556 = vpack.c.b16 %v537, %v536
  %v557 = vpack.c.b16 %v539, %v538
  %v558 = vpack.c.b16 %v541, %v540
  %v559 = vpack.c.b16 %v543, %v542
  %v560 = vpack.c.b16 %v545, %v544
  %v561 = vpack.c.b16 %v547, %v546
  %v562 = vpack.c.b16 %v549, %v548
  %576 = vmatprep.subr.bf16.mxu0 0
  %577 = vmatpush1.bf16.msra.mxu0 %v550
  %578 = vmatprep.subr.bf16.mxu0 0
  %579 = vmatpush1.bf16.msra.mxu0 %v551
  %580 = vmatprep.subr.bf16.mxu0 0
  %581 = vmatpush1.bf16.msra.mxu0 %v552
  %582 = vmatprep.subr.bf16.mxu0 0
  %583 = vmatpush1.bf16.msra.mxu0 %v553
  %584 = vmatprep.subr.bf16.mxu0 0
  %585 = vmatpush1.bf16.msra.mxu0 %v554
  %586 = vmatprep.subr.bf16.mxu0 0
  %587 = vmatpush1.bf16.msra.mxu0 %v555
  %588 = vmatprep.subr.bf16.mxu0 0
  %589 = vmatpush1.bf16.msra.mxu0 %v556
  %590 = vmatprep.subr.bf16.mxu0 0
  %591 = vmatpush1.bf16.msra.mxu0 %v557
  %592 = vmatprep.subr.bf16.mxu0 0
  %593 = vmatpush1.bf16.msra.mxu0 %v558
  %594 = vmatprep.subr.bf16.mxu0 0
  %595 = vmatpush1.bf16.msra.mxu0 %v559
  %596 = vmatprep.subr.bf16.mxu0 0
  %597 = vmatpush1.bf16.msra.mxu0 %v560
  %598 = vmatprep.subr.bf16.mxu0 0
  %599 = vmatpush1.bf16.msra.mxu0 %v561
  %600 = vmatprep.subr.bf16.mxu0 0
  %601 = vmatpush1.bf16.msra.mxu0 %v562
  %602 = vmatprep.subr.bf16.mxu0 0
  %603 = vmatpush1.bf16.msra.mxu0 0
  %604 = vmatprep.subr.bf16.mxu0 0
  %605 = vmatpush1.bf16.msra.mxu0 0
  %606 = vmatprep.subr.bf16.mxu0 0
  %607 = vmatpush1.bf16.msra.mxu0 0
  %608 = vmatprep.mubr.bf16.mxu0 %v132
  %609 = vmatmul.mubr.bf16.gmra.mrb[0].mxu0 %v49
  %v610 = vpop.f32.mrb[0].mxu0
  %v611 = vadd.f32 0.0, %v610
  %v612 = vpop.f32.mrb[0].mxu0
  %v613 = vpop.f32.mrb[0].mxu0
  %v614 = vadd.f32 0.0, %v613
  %v615 = vpop.f32.mrb[0].mxu0
  %616 = vdwg.mxu0
  %v617 = vmax.f32 %v469, %v611
  %v618 = vmax.f32 %v470, %v614
  %v619 = vld [vmem:[%s1] sm:$0xff]
  %v620 = vld [vmem:[%s1 + $0x8] sm:$0xff]
  %622 = vset.pattern.permute.xlu0 0
  %623 = vperm.xlu0 %622, %v619
  %v624 = vpop.permute.xlu0 %623
  %627 = vset.pattern.permute.xlu0 0
  %628 = vperm.xlu0 %627, %v620
  %v629 = vpop.permute.xlu0 %628
  %v631 = vadd.f32 %v617, %v624
  %v632 = vadd.f32 %v618, %v629
  %v633 = vmax.f32 %v631, 0.0
  %v634 = vmax.f32 %v632, 0.0
  %v635 = vpack.c.bf16 %v634, %v633
  %v637 = vunpack.c.l.b16 %v635
  %v638 = vunpack.c.h.b16 %v635
  %v639 = vpack.c.b16 %v637, %v637
  %v640 = vpack.c.b16 %v638, %v638
  %643 = vst [vmem:[%s3] sm:$0xf] %v639
  %644 = vst [vmem:[%s3 + $0x4] sm:$0xf] %v640
  // Predicated region
  $region14: #{lenet_forward.4} parent=0 // pred_check
    _
  $region15: #{lenet_forward.4} parent=0 // pred_check_branch
    %646 = sbr.rel (0) target = $region17
  $region16: #{lenet_forward.4} parent=0 // pred_region
    _
  $region17: #{lenet_forward.4} parent=0 // pred_fallthru
    _
  // Predicated region
  $region18: #{lenet_forward.4} parent=0 // pred_check
    _
  $region19: #{lenet_forward.4} parent=0 // pred_check_branch
    %648 = sbr.rel (0) target = $region21
  $region20: #{lenet_forward.4} parent=0 // pred_region
    _
  $region21: #{lenet_forward.4} parent=0 // pred_fallthru
    _

// kernel: lenet_forward.5
$region0: #{lenet_forward.5}
  #allocation0 [shape = 'u32[]', space=smem, size = 0x4, offset = 0x4, fixed_abs, tag = 'smem constant byte address 0x4 - core index']
  #allocation1 [shape = 'u32[144,128]{1,0:T(1,128)}', space=vmem, size = 0x12000, scoped, tag = 'internal scratch']
  %s0 = inlined_call_operand.vmem [shape: bf16[16,2,36], index: 0, kind: input, shape index: {}]
  %s1 = inlined_call_operand.vmem [shape: bf16[16,36,128], index: 1, kind: input, shape index: {}]
  %s2 = inlined_call_operand.vmem [shape: f32[1,128], index: 2, kind: input, shape index: {}]
  %s3 = inlined_call_operand.vmem [shape: bf16[128,128], index: 3, kind: input, shape index: {}]
  %s4 = inlined_call_operand.vmem [shape: f32[1,128], index: 4, kind: input, shape index: {}]
  %s5 = inlined_call_operand.vmem [shape: bf16[128,128], index: 5, kind: input, shape index: {}]
  %s6 = inlined_call_operand.vmem [shape: f32[1,128], index: 6, kind: input, shape index: {}]
  %s7 = inlined_call_operand.hbm [shape: f32[2,128], index: 7, kind: output, shape index: {}]
  %s8 = sld [smem:[#allocation0]]
  $region38: #{lenet_forward.5} parent=0
    _
  %s10 = ssub.s32 1, %s8
  %s11 = scalar_select 0, %s10, %s8
  $region1: #{lenet_forward.5} parent=0
    #allocation2 [shape = 'u8[1024]{0}', space=vmem, size = 0x400, scoped, tag = 'output window, operand 0, single buffered']
    #allocation3 [shape = 's32[1]{0}', space=sflag, size = 0x4, scoped, tag = 'scoped memory for lenet_forward.5']
    %12 = vsyncpa [#allocation3], 0
    // Predicated region
    $region2: #{lenet_forward.5} parent=1 // pred_check
      _
    $region3: #{lenet_forward.5} parent=1 // pred_check_branch
      %14 = sbr.rel (0) target = $region5
    $region4: #{lenet_forward.5} parent=1 // pred_region
      _
    $region5: #{lenet_forward.5} parent=1 // pred_fallthru
      _
    // Predicated region
    $region6: #{lenet_forward.5} parent=1 // pred_check
      _
    $region7: #{lenet_forward.5} parent=1 // pred_check_branch
      %16 = sbr.rel (0) target = $region9
    $region8: #{lenet_forward.5} parent=1 // pred_region
      _
    $region9: #{lenet_forward.5} parent=1 // pred_fallthru
      _
    // Predicated region
    $region10: #{lenet_forward.5} parent=1 // pred_check
      _
    $region11: #{lenet_forward.5} parent=1 // pred_check_branch
      %18 = sbr.rel (0) target = $region13
    $region12: #{lenet_forward.5} parent=1 // pred_region
      _
    $region13: #{lenet_forward.5} parent=1 // pred_fallthru
      _
    // Predicated region
    $region14: #{lenet_forward.5} parent=1 // pred_check
      _
    $region15: #{lenet_forward.5} parent=1 // pred_check_branch
      %20 = sbr.rel (0) target = $region17
    $region16: #{lenet_forward.5} parent=1 // pred_region
      _
    $region17: #{lenet_forward.5} parent=1 // pred_fallthru
      _
    // Predicated region
    $region18: #{lenet_forward.5} parent=1 // pred_check
      _
    $region19: #{lenet_forward.5} parent=1 // pred_check_branch
      %22 = sbr.rel (0) target = $region21
    $region20: #{lenet_forward.5} parent=1 // pred_region
      _
    $region21: #{lenet_forward.5} parent=1 // pred_fallthru
      _
    // Predicated region
    $region22: #{lenet_forward.5} parent=1 // pred_check
      _
    $region23: #{lenet_forward.5} parent=1 // pred_check_branch
      %24 = sbr.rel (0) target = $region25
    $region24: #{lenet_forward.5} parent=1 // pred_region
      _
    $region25: #{lenet_forward.5} parent=1 // pred_fallthru
      _
    // Predicated region
    $region26: #{lenet_forward.5} parent=1 // pred_check
      _
    $region27: #{lenet_forward.5} parent=1 // pred_check_branch
      %26 = sbr.rel (0) target = $region29
    $region28: #{lenet_forward.5} parent=1 // pred_region
      _
    $region29: #{lenet_forward.5} parent=1 // pred_fallthru
      _
    %v28 = vld [vmem:[%s0] sm:$0x1]
    %v29 = vld [vmem:[%s1] sm:$0xf]
    %v30 = vld [vmem:[%s1 + $0x4] sm:$0xf]
    %v31 = vld [vmem:[%s1 + $0x8] sm:$0xf]
    %v32 = vld [vmem:[%s1 + $0xc] sm:$0xf]
    %v33 = vld [vmem:[%s1 + $0x10] sm:$0x3]
    %s34 = scalar_lea.vmem %s0, 1
    %v35 = vld [vmem:[%s34] sm:$0x1]
    %s36 = scalar_lea.vmem %s1, 20
    %v37 = vld [vmem:[%s36] sm:$0xf]
    %v38 = vld [vmem:[%s36 + $0x4] sm:$0xf]
    %v39 = vld [vmem:[%s36 + $0x8] sm:$0xf]
    %v40 = vld [vmem:[%s36 + $0xc] sm:$0xf]
    %v41 = vld [vmem:[%s36 + $0x10] sm:$0x3]
    %v47 = vunpack.c.l.b16 %v37
    %v48 = vunpack.c.l.b16 %v38
    %v49 = vunpack.c.l.b16 %v39
    %v50 = vunpack.c.l.b16 %v40
    %v51 = vunpack.c.l.b16 %v41
    %v52 = vpack.c.b16 %v48, %v47
    %v53 = vpack.c.b16 %v50, %v49
    %v54 = vpack.c.b16 %v51, %v51
    %vm57 = vcmask 293888
    %v59 = vsel %vm57, %v35, 0
    %vm61 = vcmask 1041408
    %v63 = vsel %vm61, %v54, 0
    %65 = vmatprep.subr.bf16.mxu0 0
    %66 = vmatpush1.bf16.msra.mxu0 %v52
    %67 = vmatprep.subr.bf16.mxu0 0
    %68 = vmatpush1.bf16.msra.mxu0 %v53
    %69 = vmatprep.subr.bf16.mxu0 0
    %70 = vmatpush1.bf16.msra.mxu0 %v63
    %71 = vmatprep.subr.bf16.mxu0 0
    %72 = vmatpush1.bf16.msra.mxu0 0
    %73 = vmatprep.subr.bf16.mxu0 0
    %74 = vmatpush1.bf16.msra.mxu0 0
    %75 = vmatprep.subr.bf16.mxu0 0
    %76 = vmatpush1.bf16.msra.mxu0 0
    %77 = vmatprep.subr.bf16.mxu0 0
    %78 = vmatpush1.bf16.msra.mxu0 0
    %79 = vmatprep.subr.bf16.mxu0 0
    %80 = vmatpush1.bf16.msra.mxu0 0
    %81 = vmatprep.subr.bf16.mxu0 0
    %82 = vmatpush1.bf16.msra.mxu0 0
    %83 = vmatprep.subr.bf16.mxu0 0
    %84 = vmatpush1.bf16.msra.mxu0 0
    %85 = vmatprep.subr.bf16.mxu0 0
    %86 = vmatpush1.bf16.msra.mxu0 0
    %87 = vmatprep.subr.bf16.mxu0 0
    %88 = vmatpush1.bf16.msra.mxu0 0
    %89 = vmatprep.subr.bf16.mxu0 0
    %90 = vmatpush1.bf16.msra.mxu0 0
    %91 = vmatprep.subr.bf16.mxu0 0
    %92 = vmatpush1.bf16.msra.mxu0 0
    %93 = vmatprep.subr.bf16.mxu0 0
    %94 = vmatpush1.bf16.msra.mxu0 0
    %95 = vmatprep.subr.bf16.mxu0 0
    %96 = vmatpush1.bf16.msra.mxu0 0
    %97 = vmatprep.mubr.bf16.mxu0 0
    %98 = vmatmul.mubr.bf16.gmra.mrb[0].mxu0 %v59
    %v99 = vpop.f32.mrb[0].mxu0
    %v100 = vadd.f32 0.0, %v99
    %v101 = vpop.f32.mrb[0].mxu0
    %v102 = vpop.f32.mrb[0].mxu0
    %v103 = vpop.f32.mrb[0].mxu0
    %104 = vdwg.mxu0
    %v110 = vunpack.c.l.b16 %v29
    %v111 = vunpack.c.l.b16 %v30
    %v112 = vunpack.c.l.b16 %v31
    %v113 = vunpack.c.l.b16 %v32
    %v114 = vunpack.c.l.b16 %v33
    %v115 = vpack.c.b16 %v111, %v110
    %v116 = vpack.c.b16 %v113, %v112
    %v117 = vpack.c.b16 %v114, %v114
    %v121 = vsel %vm57, %v28, 0
    %v124 = vsel %vm61, %v117, 0
    %126 = vmatprep.subr.bf16.mxu0 0
    %127 = vmatpush1.bf16.msra.mxu0 %v115
    %128 = vmatprep.subr.bf16.mxu0 0
    %129 = vmatpush1.bf16.msra.mxu0 %v116
    %130 = vmatprep.subr.bf16.mxu0 0
    %131 = vmatpush1.bf16.msra.mxu0 %v124
    %132 = vmatprep.subr.bf16.mxu0 0
    %133 = vmatpush1.bf16.msra.mxu0 0
    %134 = vmatprep.subr.bf16.mxu0 0
    %135 = vmatpush1.bf16.msra.mxu0 0
    %136 = vmatprep.subr.bf16.mxu0 0
    %137 = vmatpush1.bf16.msra.mxu0 0
    %138 = vmatprep.subr.bf16.mxu0 0
    %139 = vmatpush1.bf16.msra.mxu0 0
    %140 = vmatprep.subr.bf16.mxu0 0
    %141 = vmatpush1.bf16.msra.mxu0 0
    %142 = vmatprep.subr.bf16.mxu0 0
    %143 = vmatpush1.bf16.msra.mxu0 0
    %144 = vmatprep.subr.bf16.mxu0 0
    %145 = vmatpush1.bf16.msra.mxu0 0
    %146 = vmatprep.subr.bf16.mxu0 0
    %147 = vmatpush1.bf16.msra.mxu0 0
    %148 = vmatprep.subr.bf16.mxu0 0
    %149 = vmatpush1.bf16.msra.mxu0 0
    %150 = vmatprep.subr.bf16.mxu0 0
    %151 = vmatpush1.bf16.msra.mxu0 0
    %152 = vmatprep.subr.bf16.mxu0 0
    %153 = vmatpush1.bf16.msra.mxu0 0
    %154 = vmatprep.subr.bf16.mxu0 0
    %155 = vmatpush1.bf16.msra.mxu0 0
    %156 = vmatprep.subr.bf16.mxu0 0
    %157 = vmatpush1.bf16.msra.mxu0 0
    %158 = vmatprep.mubr.bf16.mxu0 0
    %159 = vmatmul.mubr.bf16.gmra.mrb[0].mxu0 %v121
    %v160 = vpop.f32.mrb[0].mxu0
    %v161 = vadd.f32 %v100, %v160
    %v162 = vpop.f32.mrb[0].mxu0
    %v163 = vpop.f32.mrb[0].mxu0
    %v164 = vpop.f32.mrb[0].mxu0
    %165 = vdwg.mxu0
    %s166 = scalar_lea.vmem %s0, 2
    %v167 = vld [vmem:[%s166] sm:$0x1]
    %s168 = scalar_lea.vmem %s1, 40
    %v169 = vld [vmem:[%s168] sm:$0xf]
    %v170 = vld [vmem:[%s168 + $0x4] sm:$0xf]
    %v171 = vld [vmem:[%s168 + $0x8] sm:$0xf]
    %v172 = vld [vmem:[%s168 + $0xc] sm:$0xf]
    %v173 = vld [vmem:[%s168 + $0x10] sm:$0x3]
    %v179 = vunpack.c.l.b16 %v169
    %v180 = vunpack.c.l.b16 %v170
    %v181 = vunpack.c.l.b16 %v171
    %v182 = vunpack.c.l.b16 %v172
    %v183 = vunpack.c.l.b16 %v173
    %v184 = vpack.c.b16 %v180, %v179
    %v185 = vpack.c.b16 %v182, %v181
    %v186 = vpack.c.b16 %v183, %v183
    %v190 = vsel %vm57, %v167, 0
    %v193 = vsel %vm61, %v186, 0
    %195 = vmatprep.subr.bf16.mxu0 0
    %196 = vmatpush1.bf16.msra.mxu0 %v184
    %197 = vmatprep.subr.bf16.mxu0 0
    %198 = vmatpush1.bf16.msra.mxu0 %v185
    %199 = vmatprep.subr.bf16.mxu0 0
    %200 = vmatpush1.bf16.msra.mxu0 %v193
    %201 = vmatprep.subr.bf16.mxu0 0
    %202 = vmatpush1.bf16.msra.mxu0 0
    %203 = vmatprep.subr.bf16.mxu0 0
    %204 = vmatpush1.bf16.msra.mxu0 0
    %205 = vmatprep.subr.bf16.mxu0 0
    %206 = vmatpush1.bf16.msra.mxu0 0
    %207 = vmatprep.subr.bf16.mxu0 0
    %208 = vmatpush1.bf16.msra.mxu0 0
    %209 = vmatprep.subr.bf16.mxu0 0
    %210 = vmatpush1.bf16.msra.mxu0 0
    %211 = vmatprep.subr.bf16.mxu0 0
    %212 = vmatpush1.bf16.msra.mxu0 0
    %213 = vmatprep.subr.bf16.mxu0 0
    %214 = vmatpush1.bf16.msra.mxu0 0
    %215 = vmatprep.subr.bf16.mxu0 0
    %216 = vmatpush1.bf16.msra.mxu0 0
    %217 = vmatprep.subr.bf16.mxu0 0
    %218 = vmatpush1.bf16.msra.mxu0 0
    %219 = vmatprep.subr.bf16.mxu0 0
    %220 = vmatpush1.bf16.msra.mxu0 0
    %221 = vmatprep.subr.bf16.mxu0 0
    %222 = vmatpush1.bf16.msra.mxu0 0
    %223 = vmatprep.subr.bf16.mxu0 0
    %224 = vmatpush1.bf16.msra.mxu0 0
    %225 = vmatprep.subr.bf16.mxu0 0
    %226 = vmatpush1.bf16.msra.mxu0 0
    %227 = vmatprep.mubr.bf16.mxu0 0
    %228 = vmatmul.mubr.bf16.gmra.mrb[0].mxu0 %v190
    %v229 = vpop.f32.mrb[0].mxu0
    %v230 = vadd.f32 0.0, %v229
    %v231 = vpop.f32.mrb[0].mxu0
    %v232 = vpop.f32.mrb[0].mxu0
    %v233 = vpop.f32.mrb[0].mxu0
    %234 = vdwg.mxu0
    %v235 = vadd.f32 %v161, %v230
    %s236 = scalar_lea.vmem %s0, 3
    %v237 = vld [vmem:[%s236] sm:$0x1]
    %s238 = scalar_lea.vmem %s1, 60
    %v239 = vld [vmem:[%s238] sm:$0xf]
    %v240 = vld [vmem:[%s238 + $0x4] sm:$0xf]
    %v241 = vld [vmem:[%s238 + $0x8] sm:$0xf]
    %v242 = vld [vmem:[%s238 + $0xc] sm:$0xf]
    %v243 = vld [vmem:[%s238 + $0x10] sm:$0x3]
    %v249 = vunpack.c.l.b16 %v239
    %v250 = vunpack.c.l.b16 %v240
    %v251 = vunpack.c.l.b16 %v241
    %v252 = vunpack.c.l.b16 %v242
    %v253 = vunpack.c.l.b16 %v243
    %v254 = vpack.c.b16 %v250, %v249
    %v255 = vpack.c.b16 %v252, %v251
    %v256 = vpack.c.b16 %v253, %v253
    %v260 = vsel %vm57, %v237, 0
    %v263 = vsel %vm61, %v256, 0
    %265 = vmatprep.subr.bf16.mxu0 0
    %266 = vmatpush1.bf16.msra.mxu0 %v254
    %267 = vmatprep.subr.bf16.mxu0 0
    %268 = vmatpush1.bf16.msra.mxu0 %v255
    %269 = vmatprep.subr.bf16.mxu0 0
    %270 = vmatpush1.bf16.msra.mxu0 %v263
    %271 = vmatprep.subr.bf16.mxu0 0
    %272 = vmatpush1.bf16.msra.mxu0 0
    %273 = vmatprep.subr.bf16.mxu0 0
    %274 = vmatpush1.bf16.msra.mxu0 0
    %275 = vmatprep.subr.bf16.mxu0 0
    %276 = vmatpush1.bf16.msra.mxu0 0
    %277 = vmatprep.subr.bf16.mxu0 0
    %278 = vmatpush1.bf16.msra.mxu0 0
    %279 = vmatprep.subr.bf16.mxu0 0
    %280 = vmatpush1.bf16.msra.mxu0 0
    %281 = vmatprep.subr.bf16.mxu0 0
    %282 = vmatpush1.bf16.msra.mxu0 0
    %283 = vmatprep.subr.bf16.mxu0 0
    %284 = vmatpush1.bf16.msra.mxu0 0
    %285 = vmatprep.subr.bf16.mxu0 0
    %286 = vmatpush1.bf16.msra.mxu0 0
    %287 = vmatprep.subr.bf16.mxu0 0
    %288 = vmatpush1.bf16.msra.mxu0 0
    %289 = vmatprep.subr.bf16.mxu0 0
    %290 = vmatpush1.bf16.msra.mxu0 0
    %291 = vmatprep.subr.bf16.mxu0 0
    %292 = vmatpush1.bf16.msra.mxu0 0
    %293 = vmatprep.subr.bf16.mxu0 0
    %294 = vmatpush1.bf16.msra.mxu0 0
    %295 = vmatprep.subr.bf16.mxu0 0
    %296 = vmatpush1.bf16.msra.mxu0 0
    %297 = vmatprep.mubr.bf16.mxu0 0
    %298 = vmatmul.mubr.bf16.gmra.mrb[0].mxu0 %v260
    %v299 = vpop.f32.mrb[0].mxu0
    %v300 = vadd.f32 0.0, %v299
    %v301 = vpop.f32.mrb[0].mxu0
    %v302 = vpop.f32.mrb[0].mxu0
    %v303 = vpop.f32.mrb[0].mxu0
    %304 = vdwg.mxu0
    %v305 = vadd.f32 %v235, %v300
    %s306 = scalar_lea.vmem %s0, 4
    %v307 = vld [vmem:[%s306] sm:$0x1]
    %s308 = scalar_lea.vmem %s1, 80
    %v309 = vld [vmem:[%s308] sm:$0xf]
    %v310 = vld [vmem:[%s308 + $0x4] sm:$0xf]
    %v311 = vld [vmem:[%s308 + $0x8] sm:$0xf]
    %v312 = vld [vmem:[%s308 + $0xc] sm:$0xf]
    %v313 = vld [vmem:[%s308 + $0x10] sm:$0x3]
    %v319 = vunpack.c.l.b16 %v309
    %v320 = vunpack.c.l.b16 %v310
    %v321 = vunpack.c.l.b16 %v311
    %v322 = vunpack.c.l.b16 %v312
    %v323 = vunpack.c.l.b16 %v313
    %v324 = vpack.c.b16 %v320, %v319
    %v325 = vpack.c.b16 %v322, %v321
    %v326 = vpack.c.b16 %v323, %v323
    %v330 = vsel %vm57, %v307, 0
    %v333 = vsel %vm61, %v326, 0
    %335 = vmatprep.subr.bf16.mxu0 0
    %336 = vmatpush1.bf16.msra.mxu0 %v324
    %337 = vmatprep.subr.bf16.mxu0 0
    %338 = vmatpush1.bf16.msra.mxu0 %v325
    %339 = vmatprep.subr.bf16.mxu0 0
    %340 = vmatpush1.bf16.msra.mxu0 %v333
    %341 = vmatprep.subr.bf16.mxu0 0
    %342 = vmatpush1.bf16.msra.mxu0 0
    %343 = vmatprep.subr.bf16.mxu0 0
    %344 = vmatpush1.bf16.msra.mxu0 0
    %345 = vmatprep.subr.bf16.mxu0 0
    %346 = vmatpush1.bf16.msra.mxu0 0
    %347 = vmatprep.subr.bf16.mxu0 0
    %348 = vmatpush1.bf16.msra.mxu0 0
    %349 = vmatprep.subr.bf16.mxu0 0
    %350 = vmatpush1.bf16.msra.mxu0 0
    %351 = vmatprep.subr.bf16.mxu0 0
    %352 = vmatpush1.bf16.msra.mxu0 0
    %353 = vmatprep.subr.bf16.mxu0 0
    %354 = vmatpush1.bf16.msra.mxu0 0
    %355 = vmatprep.subr.bf16.mxu0 0
    %356 = vmatpush1.bf16.msra.mxu0 0
    %357 = vmatprep.subr.bf16.mxu0 0
    %358 = vmatpush1.bf16.msra.mxu0 0
    %359 = vmatprep.subr.bf16.mxu0 0
    %360 = vmatpush1.bf16.msra.mxu0 0
    %361 = vmatprep.subr.bf16.mxu0 0
    %362 = vmatpush1.bf16.msra.mxu0 0
    %363 = vmatprep.subr.bf16.mxu0 0
    %364 = vmatpush1.bf16.msra.mxu0 0
    %365 = vmatprep.subr.bf16.mxu0 0
    %366 = vmatpush1.bf16.msra.mxu0 0
    %367 = vmatprep.mubr.bf16.mxu0 0
    %368 = vmatmul.mubr.bf16.gmra.mrb[0].mxu0 %v330
    %v369 = vpop.f32.mrb[0].mxu0
    %v370 = vadd.f32 0.0, %v369
    %v371 = vpop.f32.mrb[0].mxu0
    %v372 = vpop.f32.mrb[0].mxu0
    %v373 = vpop.f32.mrb[0].mxu0
    %374 = vdwg.mxu0
    %v375 = vadd.f32 %v305, %v370
    %s376 = scalar_lea.vmem %s0, 5
    %v377 = vld [vmem:[%s376] sm:$0x1]
    %s378 = scalar_lea.vmem %s1, 100
    %v379 = vld [vmem:[%s378] sm:$0xf]
    %v380 = vld [vmem:[%s378 + $0x4] sm:$0xf]
    %v381 = vld [vmem:[%s378 + $0x8] sm:$0xf]
    %v382 = vld [vmem:[%s378 + $0xc] sm:$0xf]
    %v383 = vld [vmem:[%s378 + $0x10] sm:$0x3]
    %v389 = vunpack.c.l.b16 %v379
    %v390 = vunpack.c.l.b16 %v380
    %v391 = vunpack.c.l.b16 %v381
    %v392 = vunpack.c.l.b16 %v382
    %v393 = vunpack.c.l.b16 %v383
    %v394 = vpack.c.b16 %v390, %v389
    %v395 = vpack.c.b16 %v392, %v391
    %v396 = vpack.c.b16 %v393, %v393
    %v400 = vsel %vm57, %v377, 0
    %v403 = vsel %vm61, %v396, 0
    %405 = vmatprep.subr.bf16.mxu0 0
    %406 = vmatpush1.bf16.msra.mxu0 %v394
    %407 = vmatprep.subr.bf16.mxu0 0
    %408 = vmatpush1.bf16.msra.mxu0 %v395
    %409 = vmatprep.subr.bf16.mxu0 0
    %410 = vmatpush1.bf16.msra.mxu0 %v403
    %411 = vmatprep.subr.bf16.mxu0 0
    %412 = vmatpush1.bf16.msra.mxu0 0
    %413 = vmatprep.subr.bf16.mxu0 0
    %414 = vmatpush1.bf16.msra.mxu0 0
    %415 = vmatprep.subr.bf16.mxu0 0
    %416 = vmatpush1.bf16.msra.mxu0 0
    %417 = vmatprep.subr.bf16.mxu0 0
    %418 = vmatpush1.bf16.msra.mxu0 0
    %419 = vmatprep.subr.bf16.mxu0 0
    %420 = vmatpush1.bf16.msra.mxu0 0
    %421 = vmatprep.subr.bf16.mxu0 0
    %422 = vmatpush1.bf16.msra.mxu0 0
    %423 = vmatprep.subr.bf16.mxu0 0
    %424 = vmatpush1.bf16.msra.mxu0 0
    %425 = vmatprep.subr.bf16.mxu0 0
    %426 = vmatpush1.bf16.msra.mxu0 0
    %427 = vmatprep.subr.bf16.mxu0 0
    %428 = vmatpush1.bf16.msra.mxu0 0
    %429 = vmatprep.subr.bf16.mxu0 0
    %430 = vmatpush1.bf16.msra.mxu0 0
    %431 = vmatprep.subr.bf16.mxu0 0
    %432 = vmatpush1.bf16.msra.mxu0 0
    %433 = vmatprep.subr.bf16.mxu0 0
    %434 = vmatpush1.bf16.msra.mxu0 0
    %435 = vmatprep.subr.bf16.mxu0 0
    %436 = vmatpush1.bf16.msra.mxu0 0
    %437 = vmatprep.mubr.bf16.mxu0 0
    %438 = vmatmul.mubr.bf16.gmra.mrb[0].mxu0 %v400
    %v439 = vpop.f32.mrb[0].mxu0
    %v440 = vadd.f32 0.0, %v439
    %v441 = vpop.f32.mrb[0].mxu0
    %v442 = vpop.f32.mrb[0].mxu0
    %v443 = vpop.f32.mrb[0].mxu0
    %444 = vdwg.mxu0
    %v445 = vadd.f32 %v375, %v440
    %s446 = scalar_lea.vmem %s0, 6
    %v447 = vld [vmem:[%s446] sm:$0x1]
    %s448 = scalar_lea.vmem %s1, 120
    %v449 = vld [vmem:[%s448] sm:$0xf]
    %v450 = vld [vmem:[%s448 + $0x4] sm:$0xf]
    %v451 = vld [vmem:[%s448 + $0x8] sm:$0xf]
    %v452 = vld [vmem:[%s448 + $0xc] sm:$0xf]
    %v453 = vld [vmem:[%s448 + $0x10] sm:$0x3]
    %v459 = vunpack.c.l.b16 %v449
    %v460 = vunpack.c.l.b16 %v450
    %v461 = vunpack.c.l.b16 %v451
    %v462 = vunpack.c.l.b16 %v452
    %v463 = vunpack.c.l.b16 %v453
    %v464 = vpack.c.b16 %v460, %v459
    %v465 = vpack.c.b16 %v462, %v461
    %v466 = vpack.c.b16 %v463, %v463
    %v470 = vsel %vm57, %v447, 0
    %v473 = vsel %vm61, %v466, 0
    %475 = vmatprep.subr.bf16.mxu0 0
    %476 = vmatpush1.bf16.msra.mxu0 %v464
    %477 = vmatprep.subr.bf16.mxu0 0
    %478 = vmatpush1.bf16.msra.mxu0 %v465
    %479 = vmatprep.subr.bf16.mxu0 0
    %480 = vmatpush1.bf16.msra.mxu0 %v473
    %481 = vmatprep.subr.bf16.mxu0 0
    %482 = vmatpush1.bf16.msra.mxu0 0
    %483 = vmatprep.subr.bf16.mxu0 0
    %484 = vmatpush1.bf16.msra.mxu0 0
    %485 = vmatprep.subr.bf16.mxu0 0
    %486 = vmatpush1.bf16.msra.mxu0 0
    %487 = vmatprep.subr.bf16.mxu0 0
    %488 = vmatpush1.bf16.msra.mxu0 0
    %489 = vmatprep.subr.bf16.mxu0 0
    %490 = vmatpush1.bf16.msra.mxu0 0
    %491 = vmatprep.subr.bf16.mxu0 0
    %492 = vmatpush1.bf16.msra.mxu0 0
    %493 = vmatprep.subr.bf16.mxu0 0
    %494 = vmatpush1.bf16.msra.mxu0 0
    %495 = vmatprep.subr.bf16.mxu0 0
    %496 = vmatpush1.bf16.msra.mxu0 0
    %497 = vmatprep.subr.bf16.mxu0 0
    %498 = vmatpush1.bf16.msra.mxu0 0
    %499 = vmatprep.subr.bf16.mxu0 0
    %500 = vmatpush1.bf16.msra.mxu0 0
    %501 = vmatprep.subr.bf16.mxu0 0
    %502 = vmatpush1.bf16.msra.mxu0 0
    %503 = vmatprep.subr.bf16.mxu0 0
    %504 = vmatpush1.bf16.msra.mxu0 0
    %505 = vmatprep.subr.bf16.mxu0 0
    %506 = vmatpush1.bf16.msra.mxu0 0
    %507 = vmatprep.mubr.bf16.mxu0 0
    %508 = vmatmul.mubr.bf16.gmra.mrb[0].mxu0 %v470
    %v509 = vpop.f32.mrb[0].mxu0
    %v510 = vadd.f32 0.0, %v509
    %v511 = vpop.f32.mrb[0].mxu0
    %v512 = vpop.f32.mrb[0].mxu0
    %v513 = vpop.f32.mrb[0].mxu0
    %514 = vdwg.mxu0
    %v515 = vadd.f32 %v445, %v510
    %s516 = scalar_lea.vmem %s0, 7
    %v517 = vld [vmem:[%s516] sm:$0x1]
    %s518 = scalar_lea.vmem %s1, 140
    %v519 = vld [vmem:[%s518] sm:$0xf]
    %v520 = vld [vmem:[%s518 + $0x4] sm:$0xf]
    %v521 = vld [vmem:[%s518 + $0x8] sm:$0xf]
    %v522 = vld [vmem:[%s518 + $0xc] sm:$0xf]
    %v523 = vld [vmem:[%s518 + $0x10] sm:$0x3]
    %v529 = vunpack.c.l.b16 %v519
    %v530 = vunpack.c.l.b16 %v520
    %v531 = vunpack.c.l.b16 %v521
    %v532 = vunpack.c.l.b16 %v522
    %v533 = vunpack.c.l.b16 %v523
    %v534 = vpack.c.b16 %v530, %v529
    %v535 = vpack.c.b16 %v532, %v531
    %v536 = vpack.c.b16 %v533, %v533
    %v540 = vsel %vm57, %v517, 0
    %v543 = vsel %vm61, %v536, 0
    %545 = vmatprep.subr.bf16.mxu0 0
    %546 = vmatpush1.bf16.msra.mxu0 %v534
    %547 = vmatprep.subr.bf16.mxu0 0
    %548 = vmatpush1.bf16.msra.mxu0 %v535
    %549 = vmatprep.subr.bf16.mxu0 0
    %550 = vmatpush1.bf16.msra.mxu0 %v543
    %551 = vmatprep.subr.bf16.mxu0 0
    %552 = vmatpush1.bf16.msra.mxu0 0
    %553 = vmatprep.subr.bf16.mxu0 0
    %554 = vmatpush1.bf16.msra.mxu0 0
    %555 = vmatprep.subr.bf16.mxu0 0
    %556 = vmatpush1.bf16.msra.mxu0 0
    %557 = vmatprep.subr.bf16.mxu0 0
    %558 = vmatpush1.bf16.msra.mxu0 0
    %559 = vmatprep.subr.bf16.mxu0 0
    %560 = vmatpush1.bf16.msra.mxu0 0
    %561 = vmatprep.subr.bf16.mxu0 0
    %562 = vmatpush1.bf16.msra.mxu0 0
    %563 = vmatprep.subr.bf16.mxu0 0
    %564 = vmatpush1.bf16.msra.mxu0 0
    %565 = vmatprep.subr.bf16.mxu0 0
    %566 = vmatpush1.bf16.msra.mxu0 0
    %567 = vmatprep.subr.bf16.mxu0 0
    %568 = vmatpush1.bf16.msra.mxu0 0
    %569 = vmatprep.subr.bf16.mxu0 0
    %570 = vmatpush1.bf16.msra.mxu0 0
    %571 = vmatprep.subr.bf16.mxu0 0
    %572 = vmatpush1.bf16.msra.mxu0 0
    %573 = vmatprep.subr.bf16.mxu0 0
    %574 = vmatpush1.bf16.msra.mxu0 0
    %575 = vmatprep.subr.bf16.mxu0 0
    %576 = vmatpush1.bf16.msra.mxu0 0
    %577 = vmatprep.mubr.bf16.mxu0 0
    %578 = vmatmul.mubr.bf16.gmra.mrb[0].mxu0 %v540
    %v579 = vpop.f32.mrb[0].mxu0
    %v580 = vadd.f32 0.0, %v579
    %v581 = vpop.f32.mrb[0].mxu0
    %v582 = vpop.f32.mrb[0].mxu0
    %v583 = vpop.f32.mrb[0].mxu0
    %584 = vdwg.mxu0
    %v585 = vadd.f32 %v515, %v580
    %s586 = scalar_lea.vmem %s0, 8
    %v587 = vld [vmem:[%s586] sm:$0x1]
    %s588 = scalar_lea.vmem %s1, 160
    %v589 = vld [vmem:[%s588] sm:$0xf]
    %v590 = vld [vmem:[%s588 + $0x4] sm:$0xf]
    %v591 = vld [vmem:[%s588 + $0x8] sm:$0xf]
    %v592 = vld [vmem:[%s588 + $0xc] sm:$0xf]
    %v593 = vld [vmem:[%s588 + $0x10] sm:$0x3]
    %v599 = vunpack.c.l.b16 %v589
    %v600 = vunpack.c.l.b16 %v590
    %v601 = vunpack.c.l.b16 %v591
    %v602 = vunpack.c.l.b16 %v592
    %v603 = vunpack.c.l.b16 %v593
    %v604 = vpack.c.b16 %v600, %v599
    %v605 = vpack.c.b16 %v602, %v601
    %v606 = vpack.c.b16 %v603, %v603
    %v610 = vsel %vm57, %v587, 0
    %v613 = vsel %vm61, %v606, 0
    %615 = vmatprep.subr.bf16.mxu0 0
    %616 = vmatpush1.bf16.msra.mxu0 %v604
    %617 = vmatprep.subr.bf16.mxu0 0
    %618 = vmatpush1.bf16.msra.mxu0 %v605
    %619 = vmatprep.subr.bf16.mxu0 0
    %620 = vmatpush1.bf16.msra.mxu0 %v613
    %621 = vmatprep.subr.bf16.mxu0 0
    %622 = vmatpush1.bf16.msra.mxu0 0
    %623 = vmatprep.subr.bf16.mxu0 0
    %624 = vmatpush1.bf16.msra.mxu0 0
    %625 = vmatprep.subr.bf16.mxu0 0
    %626 = vmatpush1.bf16.msra.mxu0 0
    %627 = vmatprep.subr.bf16.mxu0 0
    %628 = vmatpush1.bf16.msra.mxu0 0
    %629 = vmatprep.subr.bf16.mxu0 0
    %630 = vmatpush1.bf16.msra.mxu0 0
    %631 = vmatprep.subr.bf16.mxu0 0
    %632 = vmatpush1.bf16.msra.mxu0 0
    %633 = vmatprep.subr.bf16.mxu0 0
    %634 = vmatpush1.bf16.msra.mxu0 0
    %635 = vmatprep.subr.bf16.mxu0 0
    %636 = vmatpush1.bf16.msra.mxu0 0
    %637 = vmatprep.subr.bf16.mxu0 0
    %638 = vmatpush1.bf16.msra.mxu0 0
    %639 = vmatprep.subr.bf16.mxu0 0
    %640 = vmatpush1.bf16.msra.mxu0 0
    %641 = vmatprep.subr.bf16.mxu0 0
    %642 = vmatpush1.bf16.msra.mxu0 0
    %643 = vmatprep.subr.bf16.mxu0 0
    %644 = vmatpush1.bf16.msra.mxu0 0
    %645 = vmatprep.subr.bf16.mxu0 0
    %646 = vmatpush1.bf16.msra.mxu0 0
    %647 = vmatprep.mubr.bf16.mxu0 0
    %648 = vmatmul.mubr.bf16.gmra.mrb[0].mxu0 %v610
    %v649 = vpop.f32.mrb[0].mxu0
    %v650 = vadd.f32 0.0, %v649
    %v651 = vpop.f32.mrb[0].mxu0
    %v652 = vpop.f32.mrb[0].mxu0
    %v653 = vpop.f32.mrb[0].mxu0
    %654 = vdwg.mxu0
    %v655 = vadd.f32 %v585, %v650
    %s656 = scalar_lea.vmem %s0, 9
    %v657 = vld [vmem:[%s656] sm:$0x1]
    %s658 = scalar_lea.vmem %s1, 180
    %v659 = vld [vmem:[%s658] sm:$0xf]
    %v660 = vld [vmem:[%s658 + $0x4] sm:$0xf]
    %v661 = vld [vmem:[%s658 + $0x8] sm:$0xf]
    %v662 = vld [vmem:[%s658 + $0xc] sm:$0xf]
    %v663 = vld [vmem:[%s658 + $0x10] sm:$0x3]
    %v669 = vunpack.c.l.b16 %v659
    %v670 = vunpack.c.l.b16 %v660
    %v671 = vunpack.c.l.b16 %v661
    %v672 = vunpack.c.l.b16 %v662
    %v673 = vunpack.c.l.b16 %v663
    %v674 = vpack.c.b16 %v670, %v669
    %v675 = vpack.c.b16 %v672, %v671
    %v676 = vpack.c.b16 %v673, %v673
    %v680 = vsel %vm57, %v657, 0
    %v683 = vsel %vm61, %v676, 0
    %685 = vmatprep.subr.bf16.mxu0 0
    %686 = vmatpush1.bf16.msra.mxu0 %v674
    %687 = vmatprep.subr.bf16.mxu0 0
    %688 = vmatpush1.bf16.msra.mxu0 %v675
    %689 = vmatprep.subr.bf16.mxu0 0
    %690 = vmatpush1.bf16.msra.mxu0 %v683
    %691 = vmatprep.subr.bf16.mxu0 0
    %692 = vmatpush1.bf16.msra.mxu0 0
    %693 = vmatprep.subr.bf16.mxu0 0
    %694 = vmatpush1.bf16.msra.mxu0 0
    %695 = vmatprep.subr.bf16.mxu0 0
    %696 = vmatpush1.bf16.msra.mxu0 0
    %697 = vmatprep.subr.bf16.mxu0 0
    %698 = vmatpush1.bf16.msra.mxu0 0
    %699 = vmatprep.subr.bf16.mxu0 0
    %700 = vmatpush1.bf16.msra.mxu0 0
    %701 = vmatprep.subr.bf16.mxu0 0
    %702 = vmatpush1.bf16.msra.mxu0 0
    %703 = vmatprep.subr.bf16.mxu0 0
    %704 = vmatpush1.bf16.msra.mxu0 0
    %705 = vmatprep.subr.bf16.mxu0 0
    %706 = vmatpush1.bf16.msra.mxu0 0
    %707 = vmatprep.subr.bf16.mxu0 0
    %708 = vmatpush1.bf16.msra.mxu0 0
    %709 = vmatprep.subr.bf16.mxu0 0
    %710 = vmatpush1.bf16.msra.mxu0 0
    %711 = vmatprep.subr.bf16.mxu0 0
    %712 = vmatpush1.bf16.msra.mxu0 0
    %713 = vmatprep.subr.bf16.mxu0 0
    %714 = vmatpush1.bf16.msra.mxu0 0
    %715 = vmatprep.subr.bf16.mxu0 0
    %716 = vmatpush1.bf16.msra.mxu0 0
    %717 = vmatprep.mubr.bf16.mxu0 0
    %718 = vmatmul.mubr.bf16.gmra.mrb[0].mxu0 %v680
    %v719 = vpop.f32.mrb[0].mxu0
    %v720 = vadd.f32 0.0, %v719
    %v721 = vpop.f32.mrb[0].mxu0
    %v722 = vpop.f32.mrb[0].mxu0
    %v723 = vpop.f32.mrb[0].mxu0
    %724 = vdwg.mxu0
    %v725 = vadd.f32 %v655, %v720
    %s726 = scalar_lea.vmem %s0, 10
    %v727 = vld [vmem:[%s726] sm:$0x1]
    %s728 = scalar_lea.vmem %s1, 200
    %v729 = vld [vmem:[%s728] sm:$0xf]
    %v730 = vld [vmem:[%s728 + $0x4] sm:$0xf]
    %v731 = vld [vmem:[%s728 + $0x8] sm:$0xf]
    %v732 = vld [vmem:[%s728 + $0xc] sm:$0xf]
    %v733 = vld [vmem:[%s728 + $0x10] sm:$0x3]
    %v739 = vunpack.c.l.b16 %v729
    %v740 = vunpack.c.l.b16 %v730
    %v741 = vunpack.c.l.b16 %v731
    %v742 = vunpack.c.l.b16 %v732
    %v743 = vunpack.c.l.b16 %v733
    %v744 = vpack.c.b16 %v740, %v739
    %v745 = vpack.c.b16 %v742, %v741
    %v746 = vpack.c.b16 %v743, %v743
    %v750 = vsel %vm57, %v727, 0
    %v753 = vsel %vm61, %v746, 0
    %755 = vmatprep.subr.bf16.mxu0 0
    %756 = vmatpush1.bf16.msra.mxu0 %v744
    %757 = vmatprep.subr.bf16.mxu0 0
    %758 = vmatpush1.bf16.msra.mxu0 %v745
    %759 = vmatprep.subr.bf16.mxu0 0
    %760 = vmatpush1.bf16.msra.mxu0 %v753
    %761 = vmatprep.subr.bf16.mxu0 0
    %762 = vmatpush1.bf16.msra.mxu0 0
    %763 = vmatprep.subr.bf16.mxu0 0
    %764 = vmatpush1.bf16.msra.mxu0 0
    %765 = vmatprep.subr.bf16.mxu0 0
    %766 = vmatpush1.bf16.msra.mxu0 0
    %767 = vmatprep.subr.bf16.mxu0 0
    %768 = vmatpush1.bf16.msra.mxu0 0
    %769 = vmatprep.subr.bf16.mxu0 0
    %770 = vmatpush1.bf16.msra.mxu0 0
    %771 = vmatprep.subr.bf16.mxu0 0
    %772 = vmatpush1.bf16.msra.mxu0 0
    %773 = vmatprep.subr.bf16.mxu0 0
    %774 = vmatpush1.bf16.msra.mxu0 0
    %775 = vmatprep.subr.bf16.mxu0 0
    %776 = vmatpush1.bf16.msra.mxu0 0
    %777 = vmatprep.subr.bf16.mxu0 0
    %778 = vmatpush1.bf16.msra.mxu0 0
    %779 = vmatprep.subr.bf16.mxu0 0
    %780 = vmatpush1.bf16.msra.mxu0 0
    %781 = vmatprep.subr.bf16.mxu0 0
    %782 = vmatpush1.bf16.msra.mxu0 0
    %783 = vmatprep.subr.bf16.mxu0 0
    %784 = vmatpush1.bf16.msra.mxu0 0
    %785 = vmatprep.subr.bf16.mxu0 0
    %786 = vmatpush1.bf16.msra.mxu0 0
    %787 = vmatprep.mubr.bf16.mxu0 0
    %788 = vmatmul.mubr.bf16.gmra.mrb[0].mxu0 %v750
    %v789 = vpop.f32.mrb[0].mxu0
    %v790 = vadd.f32 0.0, %v789
    %v791 = vpop.f32.mrb[0].mxu0
    %v792 = vpop.f32.mrb[0].mxu0
    %v793 = vpop.f32.mrb[0].mxu0
    %794 = vdwg.mxu0
    %v795 = vadd.f32 %v725, %v790
    %s796 = scalar_lea.vmem %s0, 11
    %v797 = vld [vmem:[%s796] sm:$0x1]
    %s798 = scalar_lea.vmem %s1, 220
    %v799 = vld [vmem:[%s798] sm:$0xf]
    %v800 = vld [vmem:[%s798 + $0x4] sm:$0xf]
    %v801 = vld [vmem:[%s798 + $0x8] sm:$0xf]
    %v802 = vld [vmem:[%s798 + $0xc] sm:$0xf]
    %v803 = vld [vmem:[%s798 + $0x10] sm:$0x3]
    %v809 = vunpack.c.l.b16 %v799
    %v810 = vunpack.c.l.b16 %v800
    %v811 = vunpack.c.l.b16 %v801
    %v812 = vunpack.c.l.b16 %v802
    %v813 = vunpack.c.l.b16 %v803
    %v814 = vpack.c.b16 %v810, %v809
    %v815 = vpack.c.b16 %v812, %v811
    %v816 = vpack.c.b16 %v813, %v813
    %v820 = vsel %vm57, %v797, 0
    %v823 = vsel %vm61, %v816, 0
    %825 = vmatprep.subr.bf16.mxu0 0
    %826 = vmatpush1.bf16.msra.mxu0 %v814
    %827 = vmatprep.subr.bf16.mxu0 0
    %828 = vmatpush1.bf16.msra.mxu0 %v815
    %829 = vmatprep.subr.bf16.mxu0 0
    %830 = vmatpush1.bf16.msra.mxu0 %v823
    %831 = vmatprep.subr.bf16.mxu0 0
    %832 = vmatpush1.bf16.msra.mxu0 0
    %833 = vmatprep.subr.bf16.mxu0 0
    %834 = vmatpush1.bf16.msra.mxu0 0
    %835 = vmatprep.subr.bf16.mxu0 0
    %836 = vmatpush1.bf16.msra.mxu0 0
    %837 = vmatprep.subr.bf16.mxu0 0
    %838 = vmatpush1.bf16.msra.mxu0 0
    %839 = vmatprep.subr.bf16.mxu0 0
    %840 = vmatpush1.bf16.msra.mxu0 0
    %841 = vmatprep.subr.bf16.mxu0 0
    %842 = vmatpush1.bf16.msra.mxu0 0
    %843 = vmatprep.subr.bf16.mxu0 0
    %844 = vmatpush1.bf16.msra.mxu0 0
    %845 = vmatprep.subr.bf16.mxu0 0
    %846 = vmatpush1.bf16.msra.mxu0 0
    %847 = vmatprep.subr.bf16.mxu0 0
    %848 = vmatpush1.bf16.msra.mxu0 0
    %849 = vmatprep.subr.bf16.mxu0 0
    %850 = vmatpush1.bf16.msra.mxu0 0
    %851 = vmatprep.subr.bf16.mxu0 0
    %852 = vmatpush1.bf16.msra.mxu0 0
    %853 = vmatprep.subr.bf16.mxu0 0
    %854 = vmatpush1.bf16.msra.mxu0 0
    %855 = vmatprep.subr.bf16.mxu0 0
    %856 = vmatpush1.bf16.msra.mxu0 0
    %857 = vmatprep.mubr.bf16.mxu0 0
    %858 = vmatmul.mubr.bf16.gmra.mrb[0].mxu0 %v820
    %v859 = vpop.f32.mrb[0].mxu0
    %v860 = vadd.f32 0.0, %v859
    %v861 = vpop.f32.mrb[0].mxu0
    %v862 = vpop.f32.mrb[0].mxu0
    %v863 = vpop.f32.mrb[0].mxu0
    %864 = vdwg.mxu0
    %v865 = vadd.f32 %v795, %v860
    %s866 = scalar_lea.vmem %s0, 12
    %v867 = vld [vmem:[%s866] sm:$0x1]
    %s868 = scalar_lea.vmem %s1, 240
    %v869 = vld [vmem:[%s868] sm:$0xf]
    %v870 = vld [vmem:[%s868 + $0x4] sm:$0xf]
    %v871 = vld [vmem:[%s868 + $0x8] sm:$0xf]
    %v872 = vld [vmem:[%s868 + $0xc] sm:$0xf]
    %v873 = vld [vmem:[%s868 + $0x10] sm:$0x3]
    %v879 = vunpack.c.l.b16 %v869
    %v880 = vunpack.c.l.b16 %v870
    %v881 = vunpack.c.l.b16 %v871
    %v882 = vunpack.c.l.b16 %v872
    %v883 = vunpack.c.l.b16 %v873
    %v884 = vpack.c.b16 %v880, %v879
    %v885 = vpack.c.b16 %v882, %v881
    %v886 = vpack.c.b16 %v883, %v883
    %v890 = vsel %vm57, %v867, 0
    %v893 = vsel %vm61, %v886, 0
    %895 = vmatprep.subr.bf16.mxu0 0
    %896 = vmatpush1.bf16.msra.mxu0 %v884
    %897 = vmatprep.subr.bf16.mxu0 0
    %898 = vmatpush1.bf16.msra.mxu0 %v885
    %899 = vmatprep.subr.bf16.mxu0 0
    %900 = vmatpush1.bf16.msra.mxu0 %v893
    %901 = vmatprep.subr.bf16.mxu0 0
    %902 = vmatpush1.bf16.msra.mxu0 0
    %903 = vmatprep.subr.bf16.mxu0 0
    %904 = vmatpush1.bf16.msra.mxu0 0
    %905 = vmatprep.subr.bf16.mxu0 0
    %906 = vmatpush1.bf16.msra.mxu0 0
    %907 = vmatprep.subr.bf16.mxu0 0
    %908 = vmatpush1.bf16.msra.mxu0 0
    %909 = vmatprep.subr.bf16.mxu0 0
    %910 = vmatpush1.bf16.msra.mxu0 0
    %911 = vmatprep.subr.bf16.mxu0 0
    %912 = vmatpush1.bf16.msra.mxu0 0
    %913 = vmatprep.subr.bf16.mxu0 0
    %914 = vmatpush1.bf16.msra.mxu0 0
    %915 = vmatprep.subr.bf16.mxu0 0
    %916 = vmatpush1.bf16.msra.mxu0 0
    %917 = vmatprep.subr.bf16.mxu0 0
    %918 = vmatpush1.bf16.msra.mxu0 0
    %919 = vmatprep.subr.bf16.mxu0 0
    %920 = vmatpush1.bf16.msra.mxu0 0
    %921 = vmatprep.subr.bf16.mxu0 0
    %922 = vmatpush1.bf16.msra.mxu0 0
    %923 = vmatprep.subr.bf16.mxu0 0
    %924 = vmatpush1.bf16.msra.mxu0 0
    %925 = vmatprep.subr.bf16.mxu0 0
    %926 = vmatpush1.bf16.msra.mxu0 0
    %927 = vmatprep.mubr.bf16.mxu0 0
    %928 = vmatmul.mubr.bf16.gmra.mrb[0].mxu0 %v890
    %v929 = vpop.f32.mrb[0].mxu0
    %v930 = vadd.f32 0.0, %v929
    %v931 = vpop.f32.mrb[0].mxu0
    %v932 = vpop.f32.mrb[0].mxu0
    %v933 = vpop.f32.mrb[0].mxu0
    %934 = vdwg.mxu0
    %v935 = vadd.f32 %v865, %v930
    %s936 = scalar_lea.vmem %s0, 13
    %v937 = vld [vmem:[%s936] sm:$0x1]
    %s938 = scalar_lea.vmem %s1, 260
    %v939 = vld [vmem:[%s938] sm:$0xf]
    %v940 = vld [vmem:[%s938 + $0x4] sm:$0xf]
    %v941 = vld [vmem:[%s938 + $0x8] sm:$0xf]
    %v942 = vld [vmem:[%s938 + $0xc] sm:$0xf]
    %v943 = vld [vmem:[%s938 + $0x10] sm:$0x3]
    %v949 = vunpack.c.l.b16 %v939
    %v950 = vunpack.c.l.b16 %v940
    %v951 = vunpack.c.l.b16 %v941
    %v952 = vunpack.c.l.b16 %v942
    %v953 = vunpack.c.l.b16 %v943
    %v954 = vpack.c.b16 %v950, %v949
    %v955 = vpack.c.b16 %v952, %v951
    %v956 = vpack.c.b16 %v953, %v953
    %v960 = vsel %vm57, %v937, 0
    %v963 = vsel %vm61, %v956, 0
    %965 = vmatprep.subr.bf16.mxu0 0
    %966 = vmatpush1.bf16.msra.mxu0 %v954
    %967 = vmatprep.subr.bf16.mxu0 0
    %968 = vmatpush1.bf16.msra.mxu0 %v955
    %969 = vmatprep.subr.bf16.mxu0 0
    %970 = vmatpush1.bf16.msra.mxu0 %v963
    %971 = vmatprep.subr.bf16.mxu0 0
    %972 = vmatpush1.bf16.msra.mxu0 0
    %973 = vmatprep.subr.bf16.mxu0 0
    %974 = vmatpush1.bf16.msra.mxu0 0
    %975 = vmatprep.subr.bf16.mxu0 0
    %976 = vmatpush1.bf16.msra.mxu0 0
    %977 = vmatprep.subr.bf16.mxu0 0
    %978 = vmatpush1.bf16.msra.mxu0 0
    %979 = vmatprep.subr.bf16.mxu0 0
    %980 = vmatpush1.bf16.msra.mxu0 0
    %981 = vmatprep.subr.bf16.mxu0 0
    %982 = vmatpush1.bf16.msra.mxu0 0
    %983 = vmatprep.subr.bf16.mxu0 0
    %984 = vmatpush1.bf16.msra.mxu0 0
    %985 = vmatprep.subr.bf16.mxu0 0
    %986 = vmatpush1.bf16.msra.mxu0 0
    %987 = vmatprep.subr.bf16.mxu0 0
    %988 = vmatpush1.bf16.msra.mxu0 0
    %989 = vmatprep.subr.bf16.mxu0 0
    %990 = vmatpush1.bf16.msra.mxu0 0
    %991 = vmatprep.subr.bf16.mxu0 0
    %992 = vmatpush1.bf16.msra.mxu0 0
    %993 = vmatprep.subr.bf16.mxu0 0
    %994 = vmatpush1.bf16.msra.mxu0 0
    %995 = vmatprep.subr.bf16.mxu0 0
    %996 = vmatpush1.bf16.msra.mxu0 0
    %997 = vmatprep.mubr.bf16.mxu0 0
    %998 = vmatmul.mubr.bf16.gmra.mrb[0].mxu0 %v960
    %v999 = vpop.f32.mrb[0].mxu0
    %v1000 = vadd.f32 0.0, %v999
    %v1001 = vpop.f32.mrb[0].mxu0
    %v1002 = vpop.f32.mrb[0].mxu0
    %v1003 = vpop.f32.mrb[0].mxu0
    %1004 = vdwg.mxu0
    %v1005 = vadd.f32 %v935, %v1000
    %s1006 = scalar_lea.vmem %s0, 14
    %v1007 = vld [vmem:[%s1006] sm:$0x1]
    %s1008 = scalar_lea.vmem %s1, 280
    %v1009 = vld [vmem:[%s1008] sm:$0xf]
    %v1010 = vld [vmem:[%s1008 + $0x4] sm:$0xf]
    %v1011 = vld [vmem:[%s1008 + $0x8] sm:$0xf]
    %v1012 = vld [vmem:[%s1008 + $0xc] sm:$0xf]
    %v1013 = vld [vmem:[%s1008 + $0x10] sm:$0x3]
    %v1019 = vunpack.c.l.b16 %v1009
    %v1020 = vunpack.c.l.b16 %v1010
    %v1021 = vunpack.c.l.b16 %v1011
    %v1022 = vunpack.c.l.b16 %v1012
    %v1023 = vunpack.c.l.b16 %v1013
    %v1024 = vpack.c.b16 %v1020, %v1019
    %v1025 = vpack.c.b16 %v1022, %v1021
    %v1026 = vpack.c.b16 %v1023, %v1023
    %v1030 = vsel %vm57, %v1007, 0
    %v1033 = vsel %vm61, %v1026, 0
    %1035 = vmatprep.subr.bf16.mxu0 0
    %1036 = vmatpush1.bf16.msra.mxu0 %v1024
    %1037 = vmatprep.subr.bf16.mxu0 0
    %1038 = vmatpush1.bf16.msra.mxu0 %v1025
    %1039 = vmatprep.subr.bf16.mxu0 0
    %1040 = vmatpush1.bf16.msra.mxu0 %v1033
    %1041 = vmatprep.subr.bf16.mxu0 0
    %1042 = vmatpush1.bf16.msra.mxu0 0
    %1043 = vmatprep.subr.bf16.mxu0 0
    %1044 = vmatpush1.bf16.msra.mxu0 0
    %1045 = vmatprep.subr.bf16.mxu0 0
    %1046 = vmatpush1.bf16.msra.mxu0 0
    %1047 = vmatprep.subr.bf16.mxu0 0
    %1048 = vmatpush1.bf16.msra.mxu0 0
    %1049 = vmatprep.subr.bf16.mxu0 0
    %1050 = vmatpush1.bf16.msra.mxu0 0
    %1051 = vmatprep.subr.bf16.mxu0 0
    %1052 = vmatpush1.bf16.msra.mxu0 0
    %1053 = vmatprep.subr.bf16.mxu0 0
    %1054 = vmatpush1.bf16.msra.mxu0 0
    %1055 = vmatprep.subr.bf16.mxu0 0
    %1056 = vmatpush1.bf16.msra.mxu0 0
    %1057 = vmatprep.subr.bf16.mxu0 0
    %1058 = vmatpush1.bf16.msra.mxu0 0
    %1059 = vmatprep.subr.bf16.mxu0 0
    %1060 = vmatpush1.bf16.msra.mxu0 0
    %1061 = vmatprep.subr.bf16.mxu0 0
    %1062 = vmatpush1.bf16.msra.mxu0 0
    %1063 = vmatprep.subr.bf16.mxu0 0
    %1064 = vmatpush1.bf16.msra.mxu0 0
    %1065 = vmatprep.subr.bf16.mxu0 0
    %1066 = vmatpush1.bf16.msra.mxu0 0
    %1067 = vmatprep.mubr.bf16.mxu0 0
    %1068 = vmatmul.mubr.bf16.gmra.mrb[0].mxu0 %v1030
    %v1069 = vpop.f32.mrb[0].mxu0
    %v1070 = vadd.f32 0.0, %v1069
    %v1071 = vpop.f32.mrb[0].mxu0
    %v1072 = vpop.f32.mrb[0].mxu0
    %v1073 = vpop.f32.mrb[0].mxu0
    %1074 = vdwg.mxu0
    %v1075 = vadd.f32 %v1005, %v1070
    %s1076 = scalar_lea.vmem %s0, 15
    %v1077 = vld [vmem:[%s1076] sm:$0x1]
    %s1078 = scalar_lea.vmem %s1, 300
    %v1079 = vld [vmem:[%s1078] sm:$0xf]
    %v1080 = vld [vmem:[%s1078 + $0x4] sm:$0xf]
    %v1081 = vld [vmem:[%s1078 + $0x8] sm:$0xf]
    %v1082 = vld [vmem:[%s1078 + $0xc] sm:$0xf]
    %v1083 = vld [vmem:[%s1078 + $0x10] sm:$0x3]
    %v1089 = vunpack.c.l.b16 %v1079
    %v1090 = vunpack.c.l.b16 %v1080
    %v1091 = vunpack.c.l.b16 %v1081
    %v1092 = vunpack.c.l.b16 %v1082
    %v1093 = vunpack.c.l.b16 %v1083
    %v1094 = vpack.c.b16 %v1090, %v1089
    %v1095 = vpack.c.b16 %v1092, %v1091
    %v1096 = vpack.c.b16 %v1093, %v1093
    %v1100 = vsel %vm57, %v1077, 0
    %v1103 = vsel %vm61, %v1096, 0
    %1105 = vmatprep.subr.bf16.mxu0 0
    %1106 = vmatpush1.bf16.msra.mxu0 %v1094
    %1107 = vmatprep.subr.bf16.mxu0 0
    %1108 = vmatpush1.bf16.msra.mxu0 %v1095
    %1109 = vmatprep.subr.bf16.mxu0 0
    %1110 = vmatpush1.bf16.msra.mxu0 %v1103
    %1111 = vmatprep.subr.bf16.mxu0 0
    %1112 = vmatpush1.bf16.msra.mxu0 0
    %1113 = vmatprep.subr.bf16.mxu0 0
    %1114 = vmatpush1.bf16.msra.mxu0 0
    %1115 = vmatprep.subr.bf16.mxu0 0
    %1116 = vmatpush1.bf16.msra.mxu0 0
    %1117 = vmatprep.subr.bf16.mxu0 0
    %1118 = vmatpush1.bf16.msra.mxu0 0
    %1119 = vmatprep.subr.bf16.mxu0 0
    %1120 = vmatpush1.bf16.msra.mxu0 0
    %1121 = vmatprep.subr.bf16.mxu0 0
    %1122 = vmatpush1.bf16.msra.mxu0 0
    %1123 = vmatprep.subr.bf16.mxu0 0
    %1124 = vmatpush1.bf16.msra.mxu0 0
    %1125 = vmatprep.subr.bf16.mxu0 0
    %1126 = vmatpush1.bf16.msra.mxu0 0
    %1127 = vmatprep.subr.bf16.mxu0 0
    %1128 = vmatpush1.bf16.msra.mxu0 0
    %1129 = vmatprep.subr.bf16.mxu0 0
    %1130 = vmatpush1.bf16.msra.mxu0 0
    %1131 = vmatprep.subr.bf16.mxu0 0
    %1132 = vmatpush1.bf16.msra.mxu0 0
    %1133 = vmatprep.subr.bf16.mxu0 0
    %1134 = vmatpush1.bf16.msra.mxu0 0
    %1135 = vmatprep.subr.bf16.mxu0 0
    %1136 = vmatpush1.bf16.msra.mxu0 0
    %1137 = vmatprep.mubr.bf16.mxu0 0
    %1138 = vmatmul.mubr.bf16.gmra.mrb[0].mxu0 %v1100
    %v1139 = vpop.f32.mrb[0].mxu0
    %v1140 = vadd.f32 0.0, %v1139
    %v1141 = vpop.f32.mrb[0].mxu0
    %v1142 = vpop.f32.mrb[0].mxu0
    %v1143 = vpop.f32.mrb[0].mxu0
    %1144 = vdwg.mxu0
    %v1145 = vadd.f32 %v1075, %v1140
    %v1146 = vld [vmem:[%s2] sm:$0x1]
    %v1148 = vlaneseq
    %v1149 = vshrl.u32 %v1148, 7
    %v1150 = vsub.s32 0, %v1149
    %v1151 = vrot.slane %v1146, %v1150
    %v1153 = vadd.f32 %v1145, %v1151
    %v1154 = vmax.f32 %v1153, 0.0
    %v1155 = vpack.c.bf16 %v1154, %v1154
    %v1156 = vld [vmem:[%s3] sm:$0xf]
    %v1157 = vld [vmem:[%s3 + $0x4] sm:$0xf]
    %v1158 = vld [vmem:[%s3 + $0x8] sm:$0xf]
    %v1159 = vld [vmem:[%s3 + $0xc] sm:$0xf]
    %v1160 = vld [vmem:[%s3 + $0x10] sm:$0xf]
    %v1161 = vld [vmem:[%s3 + $0x14] sm:$0xf]
    %v1162 = vld [vmem:[%s3 + $0x18] sm:$0xf]
    %v1163 = vld [vmem:[%s3 + $0x1c] sm:$0xf]
    %v1164 = vld [vmem:[%s3 + $0x20] sm:$0xf]
    %v1165 = vld [vmem:[%s3 + $0x24] sm:$0xf]
    %v1166 = vld [vmem:[%s3 + $0x28] sm:$0xf]
    %v1167 = vld [vmem:[%s3 + $0x2c] sm:$0xf]
    %v1168 = vld [vmem:[%s3 + $0x30] sm:$0xf]
    %v1169 = vld [vmem:[%s3 + $0x34] sm:$0xf]
    %v1170 = vld [vmem:[%s3 + $0x38] sm:$0xf]
    %v1171 = vld [vmem:[%s3 + $0x3c] sm:$0xf]
    %v1172 = vld [vmem:[%s4] sm:$0x1]
    %v1174 = vlaneseq
    %v1175 = vshrl.u32 %v1174, 7
    %v1176 = vsub.s32 0, %v1175
    %v1177 = vrot.slane %v1172, %v1176
    %v1195 = vunpack.c.l.b16 %v1156
    %v1196 = vunpack.c.l.b16 %v1157
    %v1197 = vunpack.c.l.b16 %v1158
    %v1198 = vunpack.c.l.b16 %v1159
    %v1199 = vunpack.c.l.b16 %v1160
    %v1200 = vunpack.c.l.b16 %v1161
    %v1201 = vunpack.c.l.b16 %v1162
    %v1202 = vunpack.c.l.b16 %v1163
    %v1203 = vunpack.c.l.b16 %v1164
    %v1204 = vunpack.c.l.b16 %v1165
    %v1205 = vunpack.c.l.b16 %v1166
    %v1206 = vunpack.c.l.b16 %v1167
    %v1207 = vunpack.c.l.b16 %v1168
    %v1208 = vunpack.c.l.b16 %v1169
    %v1209 = vunpack.c.l.b16 %v1170
    %v1210 = vunpack.c.l.b16 %v1171
    %v1211 = vpack.c.b16 %v1196, %v1195
    %v1212 = vpack.c.b16 %v1198, %v1197
    %v1213 = vpack.c.b16 %v1200, %v1199
    %v1214 = vpack.c.b16 %v1202, %v1201
    %v1215 = vpack.c.b16 %v1204, %v1203
    %v1216 = vpack.c.b16 %v1206, %v1205
    %v1217 = vpack.c.b16 %v1208, %v1207
    %v1218 = vpack.c.b16 %v1210, %v1209
    %1227 = vmatprep.subr.bf16.mxu0 0
    %1228 = vmatpush1.bf16.msra.mxu0 %v1211
    %1229 = vmatprep.subr.bf16.mxu0 0
    %1230 = vmatpush1.bf16.msra.mxu0 %v1212
    %1231 = vmatprep.subr.bf16.mxu0 0
    %1232 = vmatpush1.bf16.msra.mxu0 %v1213
    %1233 = vmatprep.subr.bf16.mxu0 0
    %1234 = vmatpush1.bf16.msra.mxu0 %v1214
    %1235 = vmatprep.subr.bf16.mxu0 0
    %1236 = vmatpush1.bf16.msra.mxu0 %v1215
    %1237 = vmatprep.subr.bf16.mxu0 0
    %1238 = vmatpush1.bf16.msra.mxu0 %v1216
    %1239 = vmatprep.subr.bf16.mxu0 0
    %1240 = vmatpush1.bf16.msra.mxu0 %v1217
    %1241 = vmatprep.subr.bf16.mxu0 0
    %1242 = vmatpush1.bf16.msra.mxu0 %v1218
    %1243 = vmatprep.subr.bf16.mxu0 0
    %1244 = vmatpush1.bf16.msra.mxu0 0
    %1245 = vmatprep.subr.bf16.mxu0 0
    %1246 = vmatpush1.bf16.msra.mxu0 0
    %1247 = vmatprep.subr.bf16.mxu0 0
    %1248 = vmatpush1.bf16.msra.mxu0 0
    %1249 = vmatprep.subr.bf16.mxu0 0
    %1250 = vmatpush1.bf16.msra.mxu0 0
    %1251 = vmatprep.subr.bf16.mxu0 0
    %1252 = vmatpush1.bf16.msra.mxu0 0
    %1253 = vmatprep.subr.bf16.mxu0 0
    %1254 = vmatpush1.bf16.msra.mxu0 0
    %1255 = vmatprep.subr.bf16.mxu0 0
    %1256 = vmatpush1.bf16.msra.mxu0 0
    %1257 = vmatprep.subr.bf16.mxu0 0
    %1258 = vmatpush1.bf16.msra.mxu0 0
    %1259 = vmatprep.mubr.bf16.mxu0 0
    %1260 = vmatmul.mubr.bf16.gmra.mrb[0].mxu0 %v1155
    %v1261 = vpop.f32.mrb[0].mxu0
    %v1262 = vadd.f32 %v1177, %v1261
    %v1263 = vpop.f32.mrb[0].mxu0
    %v1264 = vpop.f32.mrb[0].mxu0
    %v1265 = vpop.f32.mrb[0].mxu0
    %1266 = vdwg.mxu0
    %v1267 = vmax.f32 %v1262, 0.0
    %v1268 = vpack.c.bf16 %v1267, %v1267
    %v1269 = vld [vmem:[%s5] sm:$0xf]
    %v1270 = vld [vmem:[%s5 + $0x4] sm:$0xf]
    %v1271 = vld [vmem:[%s5 + $0x8] sm:$0xf]
    %v1272 = vld [vmem:[%s5 + $0xc] sm:$0xf]
    %v1273 = vld [vmem:[%s5 + $0x10] sm:$0xf]
    %v1274 = vld [vmem:[%s5 + $0x14] sm:$0xf]
    %v1275 = vld [vmem:[%s5 + $0x18] sm:$0xf]
    %v1276 = vld [vmem:[%s5 + $0x1c] sm:$0xf]
    %v1277 = vld [vmem:[%s5 + $0x20] sm:$0xf]
    %v1278 = vld [vmem:[%s5 + $0x24] sm:$0xf]
    %v1279 = vld [vmem:[%s5 + $0x28] sm:$0xf]
    %v1280 = vld [vmem:[%s5 + $0x2c] sm:$0xf]
    %v1281 = vld [vmem:[%s5 + $0x30] sm:$0xf]
    %v1282 = vld [vmem:[%s5 + $0x34] sm:$0xf]
    %v1283 = vld [vmem:[%s5 + $0x38] sm:$0xf]
    %v1284 = vld [vmem:[%s5 + $0x3c] sm:$0xf]
    %v1285 = vld [vmem:[%s6] sm:$0x1]
    %v1287 = vlaneseq
    %v1288 = vshrl.u32 %v1287, 7
    %v1289 = vsub.s32 0, %v1288
    %v1290 = vrot.slane %v1285, %v1289
    %v1308 = vunpack.c.l.b16 %v1269
    %v1309 = vunpack.c.l.b16 %v1270
    %v1310 = vunpack.c.l.b16 %v1271
    %v1311 = vunpack.c.l.b16 %v1272
    %v1312 = vunpack.c.l.b16 %v1273
    %v1313 = vunpack.c.l.b16 %v1274
    %v1314 = vunpack.c.l.b16 %v1275
    %v1315 = vunpack.c.l.b16 %v1276
    %v1316 = vunpack.c.l.b16 %v1277
    %v1317 = vunpack.c.l.b16 %v1278
    %v1318 = vunpack.c.l.b16 %v1279
    %v1319 = vunpack.c.l.b16 %v1280
    %v1320 = vunpack.c.l.b16 %v1281
    %v1321 = vunpack.c.l.b16 %v1282
    %v1322 = vunpack.c.l.b16 %v1283
    %v1323 = vunpack.c.l.b16 %v1284
    %v1324 = vpack.c.b16 %v1309, %v1308
    %v1325 = vpack.c.b16 %v1311, %v1310
    %v1326 = vpack.c.b16 %v1313, %v1312
    %v1327 = vpack.c.b16 %v1315, %v1314
    %v1328 = vpack.c.b16 %v1317, %v1316
    %v1329 = vpack.c.b16 %v1319, %v1318
    %v1330 = vpack.c.b16 %v1321, %v1320
    %v1331 = vpack.c.b16 %v1323, %v1322
    %1340 = vmatprep.subr.bf16.mxu0 0
    %1341 = vmatpush1.bf16.msra.mxu0 %v1324
    %1342 = vmatprep.subr.bf16.mxu0 0
    %1343 = vmatpush1.bf16.msra.mxu0 %v1325
    %1344 = vmatprep.subr.bf16.mxu0 0
    %1345 = vmatpush1.bf16.msra.mxu0 %v1326
    %1346 = vmatprep.subr.bf16.mxu0 0
    %1347 = vmatpush1.bf16.msra.mxu0 %v1327
    %1348 = vmatprep.subr.bf16.mxu0 0
    %1349 = vmatpush1.bf16.msra.mxu0 %v1328
    %1350 = vmatprep.subr.bf16.mxu0 0
    %1351 = vmatpush1.bf16.msra.mxu0 %v1329
    %1352 = vmatprep.subr.bf16.mxu0 0
    %1353 = vmatpush1.bf16.msra.mxu0 %v1330
    %1354 = vmatprep.subr.bf16.mxu0 0
    %1355 = vmatpush1.bf16.msra.mxu0 %v1331
    %1356 = vmatprep.subr.bf16.mxu0 0
    %1357 = vmatpush1.bf16.msra.mxu0 0
    %1358 = vmatprep.subr.bf16.mxu0 0
    %1359 = vmatpush1.bf16.msra.mxu0 0
    %1360 = vmatprep.subr.bf16.mxu0 0
    %1361 = vmatpush1.bf16.msra.mxu0 0
    %1362 = vmatprep.subr.bf16.mxu0 0
    %1363 = vmatpush1.bf16.msra.mxu0 0
    %1364 = vmatprep.subr.bf16.mxu0 0
    %1365 = vmatpush1.bf16.msra.mxu0 0
    %1366 = vmatprep.subr.bf16.mxu0 0
    %1367 = vmatpush1.bf16.msra.mxu0 0
    %1368 = vmatprep.subr.bf16.mxu0 0
    %1369 = vmatpush1.bf16.msra.mxu0 0
    %1370 = vmatprep.subr.bf16.mxu0 0
    %1371 = vmatpush1.bf16.msra.mxu0 0
    %1372 = vmatprep.mubr.bf16.mxu0 0
    %1373 = vmatmul.mubr.bf16.gmra.mrb[0].mxu0 %v1268
    %v1374 = vpop.f32.mrb[0].mxu0
    %v1375 = vadd.f32 %v1290, %v1374
    %v1376 = vpop.f32.mrb[0].mxu0
    %v1377 = vpop.f32.mrb[0].mxu0
    %v1378 = vpop.f32.mrb[0].mxu0
    %1379 = vdwg.mxu0
    %1380 = vst [vmem:[#allocation2] sm:$0x3] %v1375
    // Predicated region
    $region30: #{lenet_forward.5} parent=1 // pred_check
      _
    $region31: #{lenet_forward.5} parent=1 // pred_check_branch
      %1382 = sbr.rel (0) target = $region33
    $region32: #{lenet_forward.5} parent=1 // pred_region
      %s1384 = ssub.s32 32, 32
      %1385 = vsyncadd [#allocation3], %s1384
      %s1387 = sshll.u32 [#allocation2], 4
      %s1388 = int_to_ptr.vmem [resolvable:$true] %s1387
      %1390 = dma.vmem_to_hbm [thread:$0]  %s1388, 32, %s7, [#allocation3]
    $region33: #{lenet_forward.5} parent=1 // pred_fallthru
      _
    // Predicated region
    $region34: #{lenet_forward.5} parent=1 // pred_check
      _
    $region35: #{lenet_forward.5} parent=1 // pred_check_branch
      %1392 = sbr.rel (0) target = $region37
    $region36: #{lenet_forward.5} parent=1 // pred_region
      %1393 = dma.done [#allocation3], 32
    $region37: #{lenet_forward.5} parent=1 // pred_fallthru
      _
    %1394 = vsyncpa [#allocation3], 1

</llo_original>
